<compile_context>
chip_gen: v7x
topology: tpu7x:2x2x1
jax: 0.10.0
libtpu: 0.0.40
codegen_flags: <defaults>
</compile_context>

<pallas_src>
import jax
import jax.numpy as jnp
from jax.experimental import pallas as pl
from jax.experimental.pallas import tpu as pltpu

WEIGHT_KEYS = [
    "ln1_w", "ln1_b",
    "wqkv", "bqkv", "wo", "bo",
    "ln2_w", "ln2_b",
    "wfc", "bfc", "wpr", "bpr",
]

_LN_EPS = 1e-5
_NEG_INF = -1e30


# ---------------------------------------------------------------------------
# kernel
# ---------------------------------------------------------------------------
def make_fused_kernel(num_heads, seq_real, mlp_chunk):
    """Kernel for grid (batch_blocks, layers): one residual attention block per
    grid step; the activation stays resident in the output VMEM block across
    the (inner) layer axis."""

    def kernel(x_ref, ln1w_r, ln1b_r, wqkv_r, bqkv_r, wo_r, bo_r,
               ln2w_r, ln2b_r, wfc_r, bfc_r, wpr_r, bpr_r, o_ref):
        layer = pl.program_id(1)
        Bn, Lp, D = x_ref.shape
        H = num_heads
        hd = D // H
        R = Bn * Lp

        # Layer 0: seed the resident activation (output block) from the input.
        @pl.when(layer == 0)
        def _():
            o_ref[...] = x_ref[...]

        xr = o_ref[...].astype(jnp.float32).reshape(R, D)   # resident activation

        def layernorm(v, w, b):
            # LayerNorm always in f32 (fp16-safe subclass behavior).
            mu = jnp.mean(v, axis=-1, keepdims=True)
            var = jnp.mean((v - mu) ** 2, axis=-1, keepdims=True)
            return (v - mu) * jax.lax.rsqrt(var + _LN_EPS) * w + b

        # ---------------- pre-LN multi-head self-attention ----------------
        xn = layernorm(xr, ln1w_r[0, 0], ln1b_r[0, 0]).astype(jnp.bfloat16)
        # Fused QKV: one lane-dense (R, D) x (D, 3D) matmul; q already carries
        # the 1/sqrt(hd) scale (folded into wq/bq on the host).
        qkv = (jnp.dot(xn, wqkv_r[0], preferred_element_type=jnp.float32)
               + bqkv_r[0, 0])                               # (R, 3D) f32
        qkv = qkv.astype(jnp.bfloat16).reshape(Bn, Lp, 3 * D)

        # Additive mask so padded key positions get -inf before the softmax.
        kmask = None
        if seq_real < Lp:
            key_idx = jax.lax.broadcasted_iota(jnp.int32, (1, 1, Lp), 2)
            kmask = jnp.where(key_idx < seq_real, 0.0, _NEG_INF).astype(jnp.float32)
        # TODO(synk): the module's optional attn_mask (None in this config)
        # would be another additive term on `s` below.

        # Per-head attention on contiguous lane slices of the fused qkv
        # tensor -- no (Bn, L, H, hd) transpose / relayout.
        ctx_heads = []
        for h in range(H):
            qh = qkv[:, :, h * hd:(h + 1) * hd]
            kh = qkv[:, :, D + h * hd:D + (h + 1) * hd]
            vh = qkv[:, :, 2 * D + h * hd:2 * D + (h + 1) * hd]
            s = jnp.einsum("bld,bmd->blm", qh, kh,
                           preferred_element_type=jnp.float32)  # (Bn, Lp, Lp)
            if kmask is not None:
                s = s + kmask
            s = s - jnp.max(s, axis=-1, keepdims=True)
            p = jnp.exp(s)
            p = p * pl.reciprocal(jnp.sum(p, axis=-1, keepdims=True), approx=True)
            ctx_heads.append(
                jnp.einsum("blm,bmd->bld", p.astype(jnp.bfloat16), vh,
                           preferred_element_type=jnp.float32))
        ctx = jnp.concatenate(ctx_heads, axis=-1).reshape(R, D)   # f32

        attn_out = (jnp.dot(ctx.astype(jnp.bfloat16), wo_r[0],
                            preferred_element_type=jnp.float32) + bo_r[0, 0])
        x1 = xr + attn_out                                    # f32 residual

        # ---------------- pre-LN MLP: c_fc -> QuickGELU -> c_proj ----------
        xn2 = layernorm(x1, ln2w_r[0, 0], ln2b_r[0, 0]).astype(jnp.bfloat16)
        Dh = wfc_r.shape[-1]                                   # 4 * D
        y = None
        # Hidden dim in column chunks: the (R, 4D) f32 hidden is never fully
        # live, bounding vreg/VMEM pressure; result accumulated in (R, D) f32.
        for c0 in range(0, Dh, mlp_chunk):
            sl = slice(c0, c0 + mlp_chunk)
            hblk = (jnp.dot(xn2, wfc_r[0, :, sl],
                            preferred_element_type=jnp.float32) + bfc_r[0, 0, sl])
            # TODO(synk): on v6e/v7x QuickGELU could run in bf16 (bf16 VPU/EUP);
            # kept f32 here for v5e safety / fp16-safe parity.
            hblk = hblk * jax.nn.sigmoid(1.702 * hblk)
            part = jnp.dot(hblk.astype(jnp.bfloat16), wpr_r[0, sl, :],
                           preferred_element_type=jnp.float32)
            y = part if y is None else y + part
        y = y + bpr_r[0, 0]

        o_ref[...] = (x1 + y).reshape(Bn, Lp, D).astype(o_ref.dtype)

    return kernel


# ---------------------------------------------------------------------------
# wrapper helpers
# ---------------------------------------------------------------------------
def _vmem_capacity_bytes():
    try:
        return int(pltpu.get_tpu_info().vmem_capacity_bytes)
    except Exception:
        return 64 * 1024 * 1024           # conservative: v7x per-TC VMEM


def _largest_divisor_at_most(total, target):
    c = max(1, min(total, target))
    while total % c:
        c -= 1
    return c


def _pick_batch_block(N, Lp, target_rows):
    bn = max(1, min(N, max(1, target_rows // max(Lp, 1))))
    bn = _largest_divisor_at_most(N, bn)
    # Keep >= 2 steps on the parallel batch axis whenever possible so it can
    # shard across v7x's two TensorCores.
    if N >= 2 and N // bn < 2:
        bn = _largest_divisor_at_most(N, max(1, N // 2))
    return bn


def _weight_block_spec(arr, nbuf):
    ndim = arr.ndim                       # stacked: (LAYERS, ...) -> ndim == 3
    block = (1,) + tuple(arr.shape[1:])
    imap = lambda n, l: (l,) + (0,) * (ndim - 1)
    try:
        return pl.BlockSpec(block, imap, pipeline_mode=pl.Buffered(nbuf))
    except Exception:                     # fall back if pipeline_mode missing
        return pl.BlockSpec(block, imap)


# ---------------------------------------------------------------------------
# forward pass
# ---------------------------------------------------------------------------
def transformer_forward(x_lnd, stacked, num_heads):
    """x_lnd: (L, N, D) like the PyTorch module; stacked: layer-stacked params."""
    L, N, D = x_lnd.shape
    layers = int(stacked["wqkv"].shape[0])
    H = num_heads
    hd = D // H

    # Lane-dense sequence length: scores become unmasked (Lp, Lp) tiles.
    Lp = ((L + 127) // 128) * 128
    x = jnp.transpose(x_lnd, (1, 0, 2))                     # (N, L, D)
    if Lp != L:
        x = jnp.pad(x, ((0, 0), (0, Lp - L), (0, 0)))

    vmem_cap = _vmem_capacity_bytes()
    # Bigger row tiles on 128 MiB parts (v5e/v6e); smaller on v7x (64 MiB).
    target_rows = 512 if vmem_cap >= 100 * 1024 * 1024 else 256
    Bn = _pick_batch_block(N, Lp, target_rows)
    R = Bn * Lp
    mlp_chunk = _largest_divisor_at_most(4 * D, 512)

    # VMEM budget: weights double-buffered (next-layer prefetch) only if that
    # fits with headroom for compiler scratch/spills, else single-buffered.
    wbytes = sum(int(v.size) * v.dtype.itemsize for v in stacked.values()) // layers
    act_bytes = 2 * 2 * Bn * Lp * D * 4                     # x + out blocks, 2 bufs
    working = (R * 3 * D * 6                                # qkv f32 + bf16
               + 2 * Bn * Lp * Lp * 4                       # per-head scores/probs
               + 6 * R * D * 4)                             # ctx / residual / LN tmp
    headroom = 12 * 1024 * 1024
    nbuf = 2 if (2 * wbytes + act_bytes + working + headroom) <= vmem_cap else 1
    vmem_limit = int(max(32 * 1024 * 1024,
                         min(vmem_cap - headroom,
                             nbuf * wbytes + act_bytes + working + 4 * 1024 * 1024)))

    weight_args = [stacked[k] for k in WEIGHT_KEYS]
    in_specs = [pl.BlockSpec((Bn, Lp, D), lambda n, l: (n, 0, 0))]
    in_specs += [_weight_block_spec(a, nbuf) for a in weight_args]
    out_spec = pl.BlockSpec((Bn, Lp, D), lambda n, l: (n, 0, 0))

    flops = layers * (N * Lp * 24 * D * D + 4 * N * H * Lp * Lp * hd)
    transcend = layers * (N * Lp * 4 * D + N * H * Lp * Lp)
    bytes_acc = layers * wbytes + 2 * N * Lp * D * 4

    out = pl.pallas_call(
        make_fused_kernel(num_heads, L, mlp_chunk),
        out_shape=jax.ShapeDtypeStruct((N, Lp, D), x.dtype),
        grid_spec=pltpu.PrefetchScalarGridSpec(
            num_scalar_prefetch=0,
            grid=(N // Bn, layers),
            in_specs=in_specs,
            out_specs=out_spec,
        ),
        compiler_params=pltpu.CompilerParams(
            # batch axis shards across TensorCores (v7x); layer axis is a
            # sequential dependency (activation resident in VMEM across it).
            dimension_semantics=("parallel", "arbitrary"),
            vmem_limit_bytes=vmem_limit),
        cost_estimate=pl.CostEstimate(flops=int(flops),
                                      transcendentals=int(transcend),
                                      bytes_accessed=int(bytes_acc)),
        input_output_aliases={0: 0},
    )(x, *weight_args)

    out = out[:, :L, :]
    return jnp.transpose(out, (1, 0, 2))                    # back to (L, N, D)


# ---------------------------------------------------------------------------
# parameter preparation (runs ONCE at model setup, not per forward)
# ---------------------------------------------------------------------------
def prepare_layer_params(p, num_heads):
    """Fuse QKV (q pre-scaled by 1/sqrt(head_dim)); weights bf16, biases/LN f32."""
    D = p["wq"].shape[0]
    hd = D // num_heads
    scale = 1.0 / (hd ** 0.5)
    wqkv = jnp.concatenate([p["wq"] * scale, p["wk"], p["wv"]], axis=1)
    bqkv = jnp.concatenate([p["bq"] * scale, p["bk"], p["bv"]], axis=1)
    wdt = jnp.bfloat16
    # TODO(synk): optional fp8 (v7x) / int8 (v5e,v6e) storage for wfc/wpr with
    # per-channel scales would halve weight DMA again; omitted (accuracy flag).
    return {
        "ln1_w": p["ln1_w"].astype(jnp.float32),
        "ln1_b": p["ln1_b"].astype(jnp.float32),
        "wqkv": wqkv.astype(wdt),
        "bqkv": bqkv.astype(jnp.float32),
        "wo": p["wo"].astype(wdt),
        "bo": p["bo"].astype(jnp.float32),
        "ln2_w": p["ln2_w"].astype(jnp.float32),
        "ln2_b": p["ln2_b"].astype(jnp.float32),
        "wfc": p["wfc"].astype(wdt),
        "bfc": p["bfc"].astype(jnp.float32),
        "wpr": p["wpr"].astype(wdt),
        "bpr": p["bpr"].astype(jnp.float32),
    }


def prepare_transformer_params(layer_params, num_heads):
    per_layer = [prepare_layer_params(p, num_heads) for p in layer_params]
    return {k: jnp.stack([lp[k] for lp in per_layer], axis=0) for k in WEIGHT_KEYS}


# ---------------------------------------------------------------------------
# deterministic parameter init (stands in for the PyTorch module's weights)
# ---------------------------------------------------------------------------
def init_layer_params(key, D):
    ks = jax.random.split(key, 12)
    s = 0.02
    return {
        "ln1_w": jnp.ones((1, D), jnp.float32),
        "ln1_b": jnp.zeros((1, D), jnp.float32),
        "wq": jax.random.normal(ks[0], (D, D), jnp.float32) * s,
        "wk": jax.random.normal(ks[1], (D, D), jnp.float32) * s,
        "wv": jax.random.normal(ks[2], (D, D), jnp.float32) * s,
        "bq": jax.random.normal(ks[3], (1, D), jnp.float32) * s,
        "bk": jax.random.normal(ks[4], (1, D), jnp.float32) * s,
        "bv": jax.random.normal(ks[5], (1, D), jnp.float32) * s,
        "wo": jax.random.normal(ks[6], (D, D), jnp.float32) * s,
        "bo": jax.random.normal(ks[7], (1, D), jnp.float32) * s,
        "ln2_w": jnp.ones((1, D), jnp.float32),
        "ln2_b": jnp.zeros((1, D), jnp.float32),
        "wfc": jax.random.normal(ks[8], (D, 4 * D), jnp.float32) * s,
        "bfc": jax.random.normal(ks[9], (1, 4 * D), jnp.float32) * s,
        "wpr": jax.random.normal(ks[10], (4 * D, D), jnp.float32) * s,
        "bpr": jax.random.normal(ks[11], (1, D), jnp.float32) * s,
    }


# ---------------------------------------------------------------------------
# pure-JAX f32 reference (correctness check)
# ---------------------------------------------------------------------------
def ref_block(x, p, H):
    N, L, D = x.shape
    hd = D // H

    def ln(v, w, b):
        mu = v.mean(-1, keepdims=True)
        var = ((v - mu) ** 2).mean(-1, keepdims=True)
        return (v - mu) / jnp.sqrt(var + _LN_EPS) * w[0] + b[0]

    xn = ln(x, p["ln1_w"], p["ln1_b"])
    q = xn @ p["wq"] + p["bq"][0]
    k = xn @ p["wk"] + p["bk"][0]
    v = xn @ p["wv"] + p["bv"][0]
    qh = q.reshape(N, L, H, hd).transpose(0, 2, 1, 3) / jnp.sqrt(hd)
    kh = k.reshape(N, L, H, hd).transpose(0, 2, 1, 3)
    vh = v.reshape(N, L, H, hd).transpose(0, 2, 1, 3)
    sc = jnp.einsum("nhld,nhmd->nhlm", qh, kh)
    pr = jax.nn.softmax(sc, axis=-1)
    ctx = jnp.einsum("nhlm,nhmd->nhld", pr, vh).transpose(0, 2, 1, 3)
    ctx = ctx.reshape(N, L, D)
    x = x + ctx @ p["wo"] + p["bo"][0]
    xn2 = ln(x, p["ln2_w"], p["ln2_b"])
    h = xn2 @ p["wfc"] + p["bfc"][0]
    h = h * jax.nn.sigmoid(1.702 * h)
    return x + h @ p["wpr"] + p["bpr"][0]


def ref_transformer(x_lnd, layer_params, num_heads):
    x = jnp.transpose(x_lnd, (1, 0, 2)).astype(jnp.float32)
    for p in layer_params:
        x = ref_block(x, p, num_heads)
    return jnp.transpose(x, (1, 0, 2))


if __name__ == "__main__":
    WIDTH, HEADS, LAYERS = 32, 4, 2
    SEQ, BATCH = 8, 2

    key = jax.random.PRNGKey(0)
    kx, *klayers = jax.random.split(key, LAYERS + 1)

    x = jax.random.normal(kx, (SEQ, BATCH, WIDTH), jnp.float32)  # (L, N, D)
    layer_params = [init_layer_params(k, WIDTH) for k in klayers]

    # Kernel-ready (fused-QKV, bf16, layer-stacked) params: prepared ONCE.
    stacked = prepare_transformer_params(layer_params, HEADS)

    fwd = jax.jit(transformer_forward, static_argnums=(2,))
    out = jax.block_until_ready(fwd(x, stacked, HEADS))

    ref = ref_transformer(x, layer_params, HEADS)
    assert out.shape == (SEQ, BATCH, WIDTH)
    # bf16 MXU inputs + approx softmax reciprocal => relaxed tolerance vs f32.
    assert jnp.allclose(out, ref, atol=2e-2, rtol=2e-2), (
        "mismatch vs reference: max abs err "
        f"{float(jnp.max(jnp.abs(out - ref)))}")

    print("KERNEL_OK")
</pallas_src>

<mosaic_0001>
module attributes {stable_mosaic.version = 11 : i64} {
  func.func @kernel(%arg0: i32, %arg1: i32, %arg2: memref<1x128x32xf32, #tpu.memory_space<vmem>>, %arg3: memref<1x1x32xf32, #tpu.memory_space<vmem>>, %arg4: memref<1x1x32xf32, #tpu.memory_space<vmem>>, %arg5: memref<1x32x96xbf16, #tpu.memory_space<vmem>>, %arg6: memref<1x1x96xf32, #tpu.memory_space<vmem>>, %arg7: memref<1x32x32xbf16, #tpu.memory_space<vmem>>, %arg8: memref<1x1x32xf32, #tpu.memory_space<vmem>>, %arg9: memref<1x1x32xf32, #tpu.memory_space<vmem>>, %arg10: memref<1x1x32xf32, #tpu.memory_space<vmem>>, %arg11: memref<1x32x128xbf16, #tpu.memory_space<vmem>>, %arg12: memref<1x1x128xf32, #tpu.memory_space<vmem>>, %arg13: memref<1x128x32xbf16, #tpu.memory_space<vmem>>, %arg14: memref<1x1x32xf32, #tpu.memory_space<vmem>>, %arg15: memref<1x128x32xf32, #tpu.memory_space<vmem>>) attributes {dimension_semantics = [#tpu.dimension_semantics<parallel>, #tpu.dimension_semantics<arbitrary>], iteration_bounds = array<i64: 2, 2>, scalar_prefetch = 0 : i64, scratch_operands = 0 : i64, tpu.core_type = #tpu.core_type<tc>, window_params = [{transform_indices = @transform_0, window_bounds = array<i64: 1, 128, 32>}, {pipeline_mode = #tpu.pipeline_mode<double_buffered>, transform_indices = @transform_1, window_bounds = array<i64: 1, 1, 32>}, {pipeline_mode = #tpu.pipeline_mode<double_buffered>, transform_indices = @transform_2, window_bounds = array<i64: 1, 1, 32>}, {pipeline_mode = #tpu.pipeline_mode<double_buffered>, transform_indices = @transform_3, window_bounds = array<i64: 1, 32, 96>}, {pipeline_mode = #tpu.pipeline_mode<double_buffered>, transform_indices = @transform_4, window_bounds = array<i64: 1, 1, 96>}, {pipeline_mode = #tpu.pipeline_mode<double_buffered>, transform_indices = @transform_5, window_bounds = array<i64: 1, 32, 32>}, {pipeline_mode = #tpu.pipeline_mode<double_buffered>, transform_indices = @transform_6, window_bounds = array<i64: 1, 1, 32>}, {pipeline_mode = #tpu.pipeline_mode<double_buffered>, transform_indices = @transform_7, window_bounds = array<i64: 1, 1, 32>}, {pipeline_mode = #tpu.pipeline_mode<double_buffered>, transform_indices = @transform_8, window_bounds = array<i64: 1, 1, 32>}, {pipeline_mode = #tpu.pipeline_mode<double_buffered>, transform_indices = @transform_9, window_bounds = array<i64: 1, 32, 128>}, {pipeline_mode = #tpu.pipeline_mode<double_buffered>, transform_indices = @transform_10, window_bounds = array<i64: 1, 1, 128>}, {pipeline_mode = #tpu.pipeline_mode<double_buffered>, transform_indices = @transform_11, window_bounds = array<i64: 1, 128, 32>}, {pipeline_mode = #tpu.pipeline_mode<double_buffered>, transform_indices = @transform_12, window_bounds = array<i64: 1, 1, 32>}, {transform_indices = @transform_13, window_bounds = array<i64: 1, 128, 32>}]} {
    %c0_i32 = arith.constant 0 : i32
    %0 = arith.cmpi eq, %arg1, %c0_i32 : i32
    %1 = arith.extui %0 : i1 to i32
    %c0_i32_0 = arith.constant 0 : i32
    %2 = arith.cmpi ne, %1, %c0_i32_0 : i32
    scf.if %2 {
      %c0_75 = arith.constant 0 : index
      %c0_76 = arith.constant 0 : index
      %c0_77 = arith.constant 0 : index
      %191 = vector.load %arg2[%c0_75, %c0_76, %c0_77] : memref<1x128x32xf32, #tpu.memory_space<vmem>>, vector<1x128x32xf32>
      %c0_78 = arith.constant 0 : index
      %c0_79 = arith.constant 0 : index
      %c0_80 = arith.constant 0 : index
      %192 = vector.load %arg15[%c0_78, %c0_79, %c0_80] : memref<1x128x32xf32, #tpu.memory_space<vmem>>, vector<1x128x32xf32>
      tpu.vector_store %arg15[%c0_78, %c0_79, %c0_80], %191 {strides = array<i32>} : memref<1x128x32xf32, #tpu.memory_space<vmem>>, vector<1x128x32xf32>,
    } else {
    }
    %c0 = arith.constant 0 : index
    %c0_1 = arith.constant 0 : index
    %c0_2 = arith.constant 0 : index
    %3 = vector.load %arg15[%c0, %c0_1, %c0_2] : memref<1x128x32xf32, #tpu.memory_space<vmem>>, vector<1x128x32xf32>
    %4 = vector.shape_cast %3 : vector<1x128x32xf32> to vector<128x32xf32>
    %c0_3 = arith.constant 0 : index
    %c0_4 = arith.constant 0 : index
    %c0_5 = arith.constant 0 : index
    %5 = vector.load %arg3[%c0_3, %c0_4, %c0_5] : memref<1x1x32xf32, #tpu.memory_space<vmem>>, vector<1x1x32xf32>
    %6 = vector.shape_cast %5 : vector<1x1x32xf32> to vector<32xf32>
    %c0_6 = arith.constant 0 : index
    %c0_7 = arith.constant 0 : index
    %c0_8 = arith.constant 0 : index
    %7 = vector.load %arg4[%c0_6, %c0_7, %c0_8] : memref<1x1x32xf32, #tpu.memory_space<vmem>>, vector<1x1x32xf32>
    %8 = vector.shape_cast %7 : vector<1x1x32xf32> to vector<32xf32>
    %cst = arith.constant dense<0.000000e+00> : vector<128xf32>
    %9 = vector.multi_reduction <add>, %4, %cst [1] : vector<128x32xf32> to vector<128xf32>
    %10 = vector.shape_cast %9 : vector<128xf32> to vector<128x1xf32>
    %cst_9 = arith.constant 3.200000e+01 : f32
    %11 = vector.broadcast %cst_9 : f32 to vector<128x1xf32>
    %12 = arith.divf %10, %11 : vector<128x1xf32>
    %13 = vector.broadcast %12 : vector<128x1xf32> to vector<128x32xf32>
    %14 = arith.subf %4, %13 : vector<128x32xf32>
    %15 = arith.mulf %14, %14 : vector<128x32xf32>
    %cst_10 = arith.constant dense<0.000000e+00> : vector<128xf32>
    %16 = vector.multi_reduction <add>, %15, %cst_10 [1] : vector<128x32xf32> to vector<128xf32>
    %17 = vector.shape_cast %16 : vector<128xf32> to vector<128x1xf32>
    %cst_11 = arith.constant 3.200000e+01 : f32
    %18 = vector.broadcast %cst_11 : f32 to vector<128x1xf32>
    %19 = arith.divf %17, %18 : vector<128x1xf32>
    %20 = vector.broadcast %12 : vector<128x1xf32> to vector<128x32xf32>
    %21 = arith.subf %4, %20 : vector<128x32xf32>
    %cst_12 = arith.constant 9.99999974E-6 : f32
    %22 = vector.broadcast %cst_12 : f32 to vector<128x1xf32>
    %23 = arith.addf %19, %22 : vector<128x1xf32>
    %24 = math.rsqrt %23 : vector<128x1xf32>
    %25 = vector.broadcast %24 : vector<128x1xf32> to vector<128x32xf32>
    %26 = arith.mulf %21, %25 : vector<128x32xf32>
    %27 = vector.shape_cast %6 : vector<32xf32> to vector<1x32xf32>
    %28 = vector.broadcast %27 : vector<1x32xf32> to vector<128x32xf32>
    %29 = arith.mulf %26, %28 : vector<128x32xf32>
    %30 = vector.shape_cast %8 : vector<32xf32> to vector<1x32xf32>
    %31 = vector.broadcast %30 : vector<1x32xf32> to vector<128x32xf32>
    %32 = arith.addf %29, %31 : vector<128x32xf32>
    %33 = arith.truncf %32 : vector<128x32xf32> to vector<128x32xbf16>
    %c0_13 = arith.constant 0 : index
    %c0_14 = arith.constant 0 : index
    %c0_15 = arith.constant 0 : index
    %34 = vector.load %arg5[%c0_13, %c0_14, %c0_15] : memref<1x32x96xbf16, #tpu.memory_space<vmem>>, vector<1x32x96xbf16>
    %35 = vector.shape_cast %34 : vector<1x32x96xbf16> to vector<32x96xbf16>
    %cst_16 = arith.constant dense<0.000000e+00> : vector<128x96xf32>
    %36 = tpu.matmul %33, %35, %cst_16 {dimension_numbers = #tpu.dot_dimension_numbers<[1], [0], [0], [1], [0, 0, 1, 1], [], []>} : vector<128x32xbf16>, vector<32x96xbf16>, vector<128x96xf32> -> vector<128x96xf32>
    %c0_17 = arith.constant 0 : index
    %c0_18 = arith.constant 0 : index
    %c0_19 = arith.constant 0 : index
    %37 = vector.load %arg6[%c0_17, %c0_18, %c0_19] : memref<1x1x96xf32, #tpu.memory_space<vmem>>, vector<1x1x96xf32>
    %38 = vector.shape_cast %37 : vector<1x1x96xf32> to vector<96xf32>
    %39 = vector.shape_cast %38 : vector<96xf32> to vector<1x96xf32>
    %40 = vector.broadcast %39 : vector<1x96xf32> to vector<128x96xf32>
    %41 = arith.addf %36, %40 : vector<128x96xf32>
    %42 = arith.truncf %41 : vector<128x96xf32> to vector<128x96xbf16>
    %43 = vector.shape_cast %42 : vector<128x96xbf16> to vector<1x128x96xbf16>
    %44 = tpu.iota {dimensions = array<i32: 2>} : vector<1x1x128xi32>
    %c8_i32 = arith.constant 8 : i32
    %45 = vector.broadcast %c8_i32 : i32 to vector<1x1x128xi32>
    %46 = arith.cmpi slt, %44, %45 : vector<1x1x128xi32>
    %cst_20 = arith.constant 0.000000e+00 : f32
    %cst_21 = arith.constant -1.000000e+30 : f32
    %47 = vector.broadcast %cst_20 : f32 to vector<1x1x128xf32>
    %48 = vector.broadcast %cst_21 : f32 to vector<1x1x128xf32>
    %49 = arith.select %46, %47, %48 : vector<1x1x128xi1>, vector<1x1x128xf32>
    %50 = vector.extract_strided_slice %43 {offsets = [0, 0, 0], sizes = [1, 128, 8], strides = [1, 1, 1]} : vector<1x128x96xbf16> to vector<1x128x8xbf16>
    %51 = vector.extract_strided_slice %43 {offsets = [0, 0, 32], sizes = [1, 128, 8], strides = [1, 1, 1]} : vector<1x128x96xbf16> to vector<1x128x8xbf16>
    %52 = vector.extract_strided_slice %43 {offsets = [0, 0, 64], sizes = [1, 128, 8], strides = [1, 1, 1]} : vector<1x128x96xbf16> to vector<1x128x8xbf16>
    "tpu.trace_start"() <{level = 10 : i32, message = "bld,bmd->blm"}> : () -> ()
    %cst_22 = arith.constant dense<0.000000e+00> : vector<1x128x128xf32>
    %53 = tpu.matmul %50, %51, %cst_22 {dimension_numbers = #tpu.dot_dimension_numbers<[2], [2], [1], [1], [0, 0, 0, 1, 1, 1], [0], [0]>} : vector<1x128x8xbf16>, vector<1x128x8xbf16>, vector<1x128x128xf32> -> vector<1x128x128xf32>
    "tpu.trace_stop"() : () -> ()
    %54 = vector.broadcast %49 : vector<1x1x128xf32> to vector<1x128x128xf32>
    %55 = arith.addf %53, %54 : vector<1x128x128xf32>
    %cst_23 = arith.constant dense<0xFF800000> : vector<1x128xf32>
    %56 = vector.multi_reduction <maximumf>, %55, %cst_23 [2] : vector<1x128x128xf32> to vector<1x128xf32>
    %57 = vector.shape_cast %56 : vector<1x128xf32> to vector<1x128x1xf32>
    %58 = vector.broadcast %57 : vector<1x128x1xf32> to vector<1x128x128xf32>
    %59 = arith.subf %55, %58 : vector<1x128x128xf32>
    %60 = math.exp %59 : vector<1x128x128xf32>
    %cst_24 = arith.constant dense<0.000000e+00> : vector<1x128xf32>
    %61 = vector.multi_reduction <add>, %60, %cst_24 [2] : vector<1x128x128xf32> to vector<1x128xf32>
    %62 = vector.shape_cast %61 : vector<1x128xf32> to vector<1x128x1xf32>
    %63 = tpu.reciprocal %62 {approx = true} : vector<1x128x1xf32> -> vector<1x128x1xf32>
    %64 = vector.broadcast %63 : vector<1x128x1xf32> to vector<1x128x128xf32>
    %65 = arith.mulf %60, %64 : vector<1x128x128xf32>
    %66 = arith.truncf %65 : vector<1x128x128xf32> to vector<1x128x128xbf16>
    "tpu.trace_start"() <{level = 10 : i32, message = "blm,bmd->bld"}> : () -> ()
    %cst_25 = arith.constant dense<0.000000e+00> : vector<1x128x8xf32>
    %67 = tpu.matmul %66, %52, %cst_25 {dimension_numbers = #tpu.dot_dimension_numbers<[2], [1], [1], [2], [0, 0, 0, 1, 1, 2], [0], [0]>} : vector<1x128x128xbf16>, vector<1x128x8xbf16>, vector<1x128x8xf32> -> vector<1x128x8xf32>
    "tpu.trace_stop"() : () -> ()
    %68 = vector.extract_strided_slice %43 {offsets = [0, 0, 8], sizes = [1, 128, 8], strides = [1, 1, 1]} : vector<1x128x96xbf16> to vector<1x128x8xbf16>
    %69 = vector.extract_strided_slice %43 {offsets = [0, 0, 40], sizes = [1, 128, 8], strides = [1, 1, 1]} : vector<1x128x96xbf16> to vector<1x128x8xbf16>
    %70 = vector.extract_strided_slice %43 {offsets = [0, 0, 72], sizes = [1, 128, 8], strides = [1, 1, 1]} : vector<1x128x96xbf16> to vector<1x128x8xbf16>
    "tpu.trace_start"() <{level = 10 : i32, message = "bld,bmd->blm"}> : () -> ()
    %cst_26 = arith.constant dense<0.000000e+00> : vector<1x128x128xf32>
    %71 = tpu.matmul %68, %69, %cst_26 {dimension_numbers = #tpu.dot_dimension_numbers<[2], [2], [1], [1], [0, 0, 0, 1, 1, 1], [0], [0]>} : vector<1x128x8xbf16>, vector<1x128x8xbf16>, vector<1x128x128xf32> -> vector<1x128x128xf32>
    "tpu.trace_stop"() : () -> ()
    %72 = vector.broadcast %49 : vector<1x1x128xf32> to vector<1x128x128xf32>
    %73 = arith.addf %71, %72 : vector<1x128x128xf32>
    %cst_27 = arith.constant dense<0xFF800000> : vector<1x128xf32>
    %74 = vector.multi_reduction <maximumf>, %73, %cst_27 [2] : vector<1x128x128xf32> to vector<1x128xf32>
    %75 = vector.shape_cast %74 : vector<1x128xf32> to vector<1x128x1xf32>
    %76 = vector.broadcast %75 : vector<1x128x1xf32> to vector<1x128x128xf32>
    %77 = arith.subf %73, %76 : vector<1x128x128xf32>
    %78 = math.exp %77 : vector<1x128x128xf32>
    %cst_28 = arith.constant dense<0.000000e+00> : vector<1x128xf32>
    %79 = vector.multi_reduction <add>, %78, %cst_28 [2] : vector<1x128x128xf32> to vector<1x128xf32>
    %80 = vector.shape_cast %79 : vector<1x128xf32> to vector<1x128x1xf32>
    %81 = tpu.reciprocal %80 {approx = true} : vector<1x128x1xf32> -> vector<1x128x1xf32>
    %82 = vector.broadcast %81 : vector<1x128x1xf32> to vector<1x128x128xf32>
    %83 = arith.mulf %78, %82 : vector<1x128x128xf32>
    %84 = arith.truncf %83 : vector<1x128x128xf32> to vector<1x128x128xbf16>
    "tpu.trace_start"() <{level = 10 : i32, message = "blm,bmd->bld"}> : () -> ()
    %cst_29 = arith.constant dense<0.000000e+00> : vector<1x128x8xf32>
    %85 = tpu.matmul %84, %70, %cst_29 {dimension_numbers = #tpu.dot_dimension_numbers<[2], [1], [1], [2], [0, 0, 0, 1, 1, 2], [0], [0]>} : vector<1x128x128xbf16>, vector<1x128x8xbf16>, vector<1x128x8xf32> -> vector<1x128x8xf32>
    "tpu.trace_stop"() : () -> ()
    %86 = vector.extract_strided_slice %43 {offsets = [0, 0, 16], sizes = [1, 128, 8], strides = [1, 1, 1]} : vector<1x128x96xbf16> to vector<1x128x8xbf16>
    %87 = vector.extract_strided_slice %43 {offsets = [0, 0, 48], sizes = [1, 128, 8], strides = [1, 1, 1]} : vector<1x128x96xbf16> to vector<1x128x8xbf16>
    %88 = vector.extract_strided_slice %43 {offsets = [0, 0, 80], sizes = [1, 128, 8], strides = [1, 1, 1]} : vector<1x128x96xbf16> to vector<1x128x8xbf16>
    "tpu.trace_start"() <{level = 10 : i32, message = "bld,bmd->blm"}> : () -> ()
    %cst_30 = arith.constant dense<0.000000e+00> : vector<1x128x128xf32>
    %89 = tpu.matmul %86, %87, %cst_30 {dimension_numbers = #tpu.dot_dimension_numbers<[2], [2], [1], [1], [0, 0, 0, 1, 1, 1], [0], [0]>} : vector<1x128x8xbf16>, vector<1x128x8xbf16>, vector<1x128x128xf32> -> vector<1x128x128xf32>
    "tpu.trace_stop"() : () -> ()
    %90 = vector.broadcast %49 : vector<1x1x128xf32> to vector<1x128x128xf32>
    %91 = arith.addf %89, %90 : vector<1x128x128xf32>
    %cst_31 = arith.constant dense<0xFF800000> : vector<1x128xf32>
    %92 = vector.multi_reduction <maximumf>, %91, %cst_31 [2] : vector<1x128x128xf32> to vector<1x128xf32>
    %93 = vector.shape_cast %92 : vector<1x128xf32> to vector<1x128x1xf32>
    %94 = vector.broadcast %93 : vector<1x128x1xf32> to vector<1x128x128xf32>
    %95 = arith.subf %91, %94 : vector<1x128x128xf32>
    %96 = math.exp %95 : vector<1x128x128xf32>
    %cst_32 = arith.constant dense<0.000000e+00> : vector<1x128xf32>
    %97 = vector.multi_reduction <add>, %96, %cst_32 [2] : vector<1x128x128xf32> to vector<1x128xf32>
    %98 = vector.shape_cast %97 : vector<1x128xf32> to vector<1x128x1xf32>
    %99 = tpu.reciprocal %98 {approx = true} : vector<1x128x1xf32> -> vector<1x128x1xf32>
    %100 = vector.broadcast %99 : vector<1x128x1xf32> to vector<1x128x128xf32>
    %101 = arith.mulf %96, %100 : vector<1x128x128xf32>
    %102 = arith.truncf %101 : vector<1x128x128xf32> to vector<1x128x128xbf16>
    "tpu.trace_start"() <{level = 10 : i32, message = "blm,bmd->bld"}> : () -> ()
    %cst_33 = arith.constant dense<0.000000e+00> : vector<1x128x8xf32>
    %103 = tpu.matmul %102, %88, %cst_33 {dimension_numbers = #tpu.dot_dimension_numbers<[2], [1], [1], [2], [0, 0, 0, 1, 1, 2], [0], [0]>} : vector<1x128x128xbf16>, vector<1x128x8xbf16>, vector<1x128x8xf32> -> vector<1x128x8xf32>
    "tpu.trace_stop"() : () -> ()
    %104 = vector.extract_strided_slice %43 {offsets = [0, 0, 24], sizes = [1, 128, 8], strides = [1, 1, 1]} : vector<1x128x96xbf16> to vector<1x128x8xbf16>
    %105 = vector.extract_strided_slice %43 {offsets = [0, 0, 56], sizes = [1, 128, 8], strides = [1, 1, 1]} : vector<1x128x96xbf16> to vector<1x128x8xbf16>
    %106 = vector.extract_strided_slice %43 {offsets = [0, 0, 88], sizes = [1, 128, 8], strides = [1, 1, 1]} : vector<1x128x96xbf16> to vector<1x128x8xbf16>
    "tpu.trace_start"() <{level = 10 : i32, message = "bld,bmd->blm"}> : () -> ()
    %cst_34 = arith.constant dense<0.000000e+00> : vector<1x128x128xf32>
    %107 = tpu.matmul %104, %105, %cst_34 {dimension_numbers = #tpu.dot_dimension_numbers<[2], [2], [1], [1], [0, 0, 0, 1, 1, 1], [0], [0]>} : vector<1x128x8xbf16>, vector<1x128x8xbf16>, vector<1x128x128xf32> -> vector<1x128x128xf32>
    "tpu.trace_stop"() : () -> ()
    %108 = vector.broadcast %49 : vector<1x1x128xf32> to vector<1x128x128xf32>
    %109 = arith.addf %107, %108 : vector<1x128x128xf32>
    %cst_35 = arith.constant dense<0xFF800000> : vector<1x128xf32>
    %110 = vector.multi_reduction <maximumf>, %109, %cst_35 [2] : vector<1x128x128xf32> to vector<1x128xf32>
    %111 = vector.shape_cast %110 : vector<1x128xf32> to vector<1x128x1xf32>
    %112 = vector.broadcast %111 : vector<1x128x1xf32> to vector<1x128x128xf32>
    %113 = arith.subf %109, %112 : vector<1x128x128xf32>
    %114 = math.exp %113 : vector<1x128x128xf32>
    %cst_36 = arith.constant dense<0.000000e+00> : vector<1x128xf32>
    %115 = vector.multi_reduction <add>, %114, %cst_36 [2] : vector<1x128x128xf32> to vector<1x128xf32>
    %116 = vector.shape_cast %115 : vector<1x128xf32> to vector<1x128x1xf32>
    %117 = tpu.reciprocal %116 {approx = true} : vector<1x128x1xf32> -> vector<1x128x1xf32>
    %118 = vector.broadcast %117 : vector<1x128x1xf32> to vector<1x128x128xf32>
    %119 = arith.mulf %114, %118 : vector<1x128x128xf32>
    %120 = arith.truncf %119 : vector<1x128x128xf32> to vector<1x128x128xbf16>
    "tpu.trace_start"() <{level = 10 : i32, message = "blm,bmd->bld"}> : () -> ()
    %cst_37 = arith.constant dense<0.000000e+00> : vector<1x128x8xf32>
    %121 = tpu.matmul %120, %106, %cst_37 {dimension_numbers = #tpu.dot_dimension_numbers<[2], [1], [1], [2], [0, 0, 0, 1, 1, 2], [0], [0]>} : vector<1x128x128xbf16>, vector<1x128x8xbf16>, vector<1x128x8xf32> -> vector<1x128x8xf32>
    "tpu.trace_stop"() : () -> ()
    %122 = tpu.concatenate %67, %85, %103, %121 in 2 : vector<1x128x8xf32>, vector<1x128x8xf32>, vector<1x128x8xf32>, vector<1x128x8xf32> -> vector<1x128x32xf32>
    %123 = vector.shape_cast %122 : vector<1x128x32xf32> to vector<128x32xf32>
    %124 = arith.truncf %123 : vector<128x32xf32> to vector<128x32xbf16>
    %c0_38 = arith.constant 0 : index
    %c0_39 = arith.constant 0 : index
    %c0_40 = arith.constant 0 : index
    %125 = vector.load %arg7[%c0_38, %c0_39, %c0_40] : memref<1x32x32xbf16, #tpu.memory_space<vmem>>, vector<1x32x32xbf16>
    %126 = vector.shape_cast %125 : vector<1x32x32xbf16> to vector<32x32xbf16>
    %cst_41 = arith.constant dense<0.000000e+00> : vector<128x32xf32>
    %127 = tpu.matmul %124, %126, %cst_41 {dimension_numbers = #tpu.dot_dimension_numbers<[1], [0], [0], [1], [0, 0, 1, 1], [], []>} : vector<128x32xbf16>, vector<32x32xbf16>, vector<128x32xf32> -> vector<128x32xf32>
    %c0_42 = arith.constant 0 : index
    %c0_43 = arith.constant 0 : index
    %c0_44 = arith.constant 0 : index
    %128 = vector.load %arg8[%c0_42, %c0_43, %c0_44] : memref<1x1x32xf32, #tpu.memory_space<vmem>>, vector<1x1x32xf32>
    %129 = vector.shape_cast %128 : vector<1x1x32xf32> to vector<32xf32>
    %130 = vector.shape_cast %129 : vector<32xf32> to vector<1x32xf32>
    %131 = vector.broadcast %130 : vector<1x32xf32> to vector<128x32xf32>
    %132 = arith.addf %127, %131 : vector<128x32xf32>
    %133 = arith.addf %4, %132 : vector<128x32xf32>
    %c0_45 = arith.constant 0 : index
    %c0_46 = arith.constant 0 : index
    %c0_47 = arith.constant 0 : index
    %134 = vector.load %arg9[%c0_45, %c0_46, %c0_47] : memref<1x1x32xf32, #tpu.memory_space<vmem>>, vector<1x1x32xf32>
    %135 = vector.shape_cast %134 : vector<1x1x32xf32> to vector<32xf32>
    %c0_48 = arith.constant 0 : index
    %c0_49 = arith.constant 0 : index
    %c0_50 = arith.constant 0 : index
    %136 = vector.load %arg10[%c0_48, %c0_49, %c0_50] : memref<1x1x32xf32, #tpu.memory_space<vmem>>, vector<1x1x32xf32>
    %137 = vector.shape_cast %136 : vector<1x1x32xf32> to vector<32xf32>
    %cst_51 = arith.constant dense<0.000000e+00> : vector<128xf32>
    %138 = vector.multi_reduction <add>, %133, %cst_51 [1] : vector<128x32xf32> to vector<128xf32>
    %139 = vector.shape_cast %138 : vector<128xf32> to vector<128x1xf32>
    %cst_52 = arith.constant 3.200000e+01 : f32
    %140 = vector.broadcast %cst_52 : f32 to vector<128x1xf32>
    %141 = arith.divf %139, %140 : vector<128x1xf32>
    %142 = vector.broadcast %141 : vector<128x1xf32> to vector<128x32xf32>
    %143 = arith.subf %133, %142 : vector<128x32xf32>
    %144 = arith.mulf %143, %143 : vector<128x32xf32>
    %cst_53 = arith.constant dense<0.000000e+00> : vector<128xf32>
    %145 = vector.multi_reduction <add>, %144, %cst_53 [1] : vector<128x32xf32> to vector<128xf32>
    %146 = vector.shape_cast %145 : vector<128xf32> to vector<128x1xf32>
    %cst_54 = arith.constant 3.200000e+01 : f32
    %147 = vector.broadcast %cst_54 : f32 to vector<128x1xf32>
    %148 = arith.divf %146, %147 : vector<128x1xf32>
    %149 = vector.broadcast %141 : vector<128x1xf32> to vector<128x32xf32>
    %150 = arith.subf %133, %149 : vector<128x32xf32>
    %cst_55 = arith.constant 9.99999974E-6 : f32
    %151 = vector.broadcast %cst_55 : f32 to vector<128x1xf32>
    %152 = arith.addf %148, %151 : vector<128x1xf32>
    %153 = math.rsqrt %152 : vector<128x1xf32>
    %154 = vector.broadcast %153 : vector<128x1xf32> to vector<128x32xf32>
    %155 = arith.mulf %150, %154 : vector<128x32xf32>
    %156 = vector.shape_cast %135 : vector<32xf32> to vector<1x32xf32>
    %157 = vector.broadcast %156 : vector<1x32xf32> to vector<128x32xf32>
    %158 = arith.mulf %155, %157 : vector<128x32xf32>
    %159 = vector.shape_cast %137 : vector<32xf32> to vector<1x32xf32>
    %160 = vector.broadcast %159 : vector<1x32xf32> to vector<128x32xf32>
    %161 = arith.addf %158, %160 : vector<128x32xf32>
    %162 = arith.truncf %161 : vector<128x32xf32> to vector<128x32xbf16>
    %c0_56 = arith.constant 0 : index
    %c0_57 = arith.constant 0 : index
    %c0_58 = arith.constant 0 : index
    %163 = vector.load %arg11[%c0_56, %c0_57, %c0_58] : memref<1x32x128xbf16, #tpu.memory_space<vmem>>, vector<1x32x128xbf16>
    %164 = vector.shape_cast %163 : vector<1x32x128xbf16> to vector<32x128xbf16>
    %cst_59 = arith.constant dense<0.000000e+00> : vector<128x128xf32>
    %165 = tpu.matmul %162, %164, %cst_59 {dimension_numbers = #tpu.dot_dimension_numbers<[1], [0], [0], [1], [0, 0, 1, 1], [], []>} : vector<128x32xbf16>, vector<32x128xbf16>, vector<128x128xf32> -> vector<128x128xf32>
    %c0_60 = arith.constant 0 : index
    %c0_61 = arith.constant 0 : index
    %c0_62 = arith.constant 0 : index
    %166 = vector.load %arg12[%c0_60, %c0_61, %c0_62] : memref<1x1x128xf32, #tpu.memory_space<vmem>>, vector<1x1x128xf32>
    %167 = vector.shape_cast %166 : vector<1x1x128xf32> to vector<128xf32>
    %168 = vector.shape_cast %167 : vector<128xf32> to vector<1x128xf32>
    %169 = vector.broadcast %168 : vector<1x128xf32> to vector<128x128xf32>
    %170 = arith.addf %165, %169 : vector<128x128xf32>
    %cst_63 = arith.constant 1.702000e+00 : f32
    %171 = vector.broadcast %cst_63 : f32 to vector<128x128xf32>
    %172 = arith.mulf %171, %170 : vector<128x128xf32>
    %173 = arith.negf %172 : vector<128x128xf32>
    %174 = math.exp %173 : vector<128x128xf32>
    %cst_64 = arith.constant 1.000000e+00 : f32
    %175 = vector.broadcast %cst_64 : f32 to vector<128x128xf32>
    %176 = arith.addf %175, %174 : vector<128x128xf32>
    %177 = arith.divf %175, %176 : vector<128x128xf32>
    %178 = arith.mulf %170, %177 : vector<128x128xf32>
    %179 = arith.truncf %178 : vector<128x128xf32> to vector<128x128xbf16>
    %c0_65 = arith.constant 0 : index
    %c0_66 = arith.constant 0 : index
    %c0_67 = arith.constant 0 : index
    %180 = vector.load %arg13[%c0_65, %c0_66, %c0_67] : memref<1x128x32xbf16, #tpu.memory_space<vmem>>, vector<1x128x32xbf16>
    %181 = vector.shape_cast %180 : vector<1x128x32xbf16> to vector<128x32xbf16>
    %cst_68 = arith.constant dense<0.000000e+00> : vector<128x32xf32>
    %182 = tpu.matmul %179, %181, %cst_68 {dimension_numbers = #tpu.dot_dimension_numbers<[1], [0], [0], [1], [0, 0, 1, 1], [], []>} : vector<128x128xbf16>, vector<128x32xbf16>, vector<128x32xf32> -> vector<128x32xf32>
    %c0_69 = arith.constant 0 : index
    %c0_70 = arith.constant 0 : index
    %c0_71 = arith.constant 0 : index
    %183 = vector.load %arg14[%c0_69, %c0_70, %c0_71] : memref<1x1x32xf32, #tpu.memory_space<vmem>>, vector<1x1x32xf32>
    %184 = vector.shape_cast %183 : vector<1x1x32xf32> to vector<32xf32>
    %185 = vector.shape_cast %184 : vector<32xf32> to vector<1x32xf32>
    %186 = vector.broadcast %185 : vector<1x32xf32> to vector<128x32xf32>
    %187 = arith.addf %182, %186 : vector<128x32xf32>
    %188 = arith.addf %133, %187 : vector<128x32xf32>
    %189 = vector.shape_cast %188 : vector<128x32xf32> to vector<1x128x32xf32>
    %c0_72 = arith.constant 0 : index
    %c0_73 = arith.constant 0 : index
    %c0_74 = arith.constant 0 : index
    %190 = vector.load %arg15[%c0_72, %c0_73, %c0_74] : memref<1x128x32xf32, #tpu.memory_space<vmem>>, vector<1x128x32xf32>
    tpu.vector_store %arg15[%c0_72, %c0_73, %c0_74], %189 {strides = array<i32>} : memref<1x128x32xf32, #tpu.memory_space<vmem>>, vector<1x128x32xf32>,
    return
  }
  func.func @transform_0(%arg0: i32, %arg1: i32) -> (i32, i32, i32) {
    %c0_i32 = arith.constant 0 : i32
    %c0_i32_0 = arith.constant 0 : i32
    %c0_i32_1 = arith.constant 0 : i32
    return %arg0, %c0_i32, %c0_i32_0 : i32, i32, i32
  }
  func.func @transform_1(%arg0: i32, %arg1: i32) -> (i32, i32, i32) {
    %c0_i32 = arith.constant 0 : i32
    %c0_i32_0 = arith.constant 0 : i32
    %c0_i32_1 = arith.constant 0 : i32
    return %arg1, %c0_i32, %c0_i32_0 : i32, i32, i32
  }
  func.func @transform_2(%arg0: i32, %arg1: i32) -> (i32, i32, i32) {
    %c0_i32 = arith.constant 0 : i32
    %c0_i32_0 = arith.constant 0 : i32
    %c0_i32_1 = arith.constant 0 : i32
    return %arg1, %c0_i32, %c0_i32_0 : i32, i32, i32
  }
  func.func @transform_3(%arg0: i32, %arg1: i32) -> (i32, i32, i32) {
    %c0_i32 = arith.constant 0 : i32
    %c0_i32_0 = arith.constant 0 : i32
    %c0_i32_1 = arith.constant 0 : i32
    return %arg1, %c0_i32, %c0_i32_0 : i32, i32, i32
  }
  func.func @transform_4(%arg0: i32, %arg1: i32) -> (i32, i32, i32) {
    %c0_i32 = arith.constant 0 : i32
    %c0_i32_0 = arith.constant 0 : i32
    %c0_i32_1 = arith.constant 0 : i32
    return %arg1, %c0_i32, %c0_i32_0 : i32, i32, i32
  }
  func.func @transform_5(%arg0: i32, %arg1: i32) -> (i32, i32, i32) {
    %c0_i32 = arith.constant 0 : i32
    %c0_i32_0 = arith.constant 0 : i32
    %c0_i32_1 = arith.constant 0 : i32
    return %arg1, %c0_i32, %c0_i32_0 : i32, i32, i32
  }
  func.func @transform_6(%arg0: i32, %arg1: i32) -> (i32, i32, i32) {
    %c0_i32 = arith.constant 0 : i32
    %c0_i32_0 = arith.constant 0 : i32
    %c0_i32_1 = arith.constant 0 : i32
    return %arg1, %c0_i32, %c0_i32_0 : i32, i32, i32
  }
  func.func @transform_7(%arg0: i32, %arg1: i32) -> (i32, i32, i32) {
    %c0_i32 = arith.constant 0 : i32
    %c0_i32_0 = arith.constant 0 : i32
    %c0_i32_1 = arith.constant 0 : i32
    return %arg1, %c0_i32, %c0_i32_0 : i32, i32, i32
  }
  func.func @transform_8(%arg0: i32, %arg1: i32) -> (i32, i32, i32) {
    %c0_i32 = arith.constant 0 : i32
    %c0_i32_0 = arith.constant 0 : i32
    %c0_i32_1 = arith.constant 0 : i32
    return %arg1, %c0_i32, %c0_i32_0 : i32, i32, i32
  }
  func.func @transform_9(%arg0: i32, %arg1: i32) -> (i32, i32, i32) {
    %c0_i32 = arith.constant 0 : i32
    %c0_i32_0 = arith.constant 0 : i32
    %c0_i32_1 = arith.constant 0 : i32
    return %arg1, %c0_i32, %c0_i32_0 : i32, i32, i32
  }
  func.func @transform_10(%arg0: i32, %arg1: i32) -> (i32, i32, i32) {
    %c0_i32 = arith.constant 0 : i32
    %c0_i32_0 = arith.constant 0 : i32
    %c0_i32_1 = arith.constant 0 : i32
    return %arg1, %c0_i32, %c0_i32_0 : i32, i32, i32
  }
  func.func @transform_11(%arg0: i32, %arg1: i32) -> (i32, i32, i32) {
    %c0_i32 = arith.constant 0 : i32
    %c0_i32_0 = arith.constant 0 : i32
    %c0_i32_1 = arith.constant 0 : i32
    return %arg1, %c0_i32, %c0_i32_0 : i32, i32, i32
  }
  func.func @transform_12(%arg0: i32, %arg1: i32) -> (i32, i32, i32) {
    %c0_i32 = arith.constant 0 : i32
    %c0_i32_0 = arith.constant 0 : i32
    %c0_i32_1 = arith.constant 0 : i32
    return %arg1, %c0_i32, %c0_i32_0 : i32, i32, i32
  }
  func.func @transform_13(%arg0: i32, %arg1: i32) -> (i32, i32, i32) {
    %c0_i32 = arith.constant 0 : i32
    %c0_i32_0 = arith.constant 0 : i32
    %c0_i32_1 = arith.constant 0 : i32
    return %arg0, %c0_i32, %c0_i32_0 : i32, i32, i32
  }
}

</mosaic_0001>

<llo_original>
// kernel: transformer_forward.1
$region0: #{transformer_forward.1}
  #allocation0 [shape = 'u32[]', space=smem, size = 0x4, offset = 0x4, fixed_abs, tag = 'smem constant byte address 0x4 - core index']
  #allocation1 [shape = 'u32[144,128]{1,0:T(1,128)}', space=vmem, size = 0x12000, scoped, tag = 'internal scratch']
  %s0 = inlined_call_operand.vmem [shape: f32[2,128,32], index: 0, kind: input, shape index: {}, may-alias: {0,13}]
  %s1 = inlined_call_operand.vmem [shape: f32[2,1,32], index: 1, kind: input, shape index: {}]
  %s2 = inlined_call_operand.vmem [shape: f32[2,1,32], index: 2, kind: input, shape index: {}]
  %s3 = inlined_call_operand.vmem [shape: bf16[2,32,96], index: 3, kind: input, shape index: {}]
  %s4 = inlined_call_operand.vmem [shape: f32[2,1,96], index: 4, kind: input, shape index: {}]
  %s5 = inlined_call_operand.vmem [shape: bf16[2,32,32], index: 5, kind: input, shape index: {}]
  %s6 = inlined_call_operand.vmem [shape: f32[2,1,32], index: 6, kind: input, shape index: {}]
  %s7 = inlined_call_operand.vmem [shape: f32[2,1,32], index: 7, kind: input, shape index: {}]
  %s8 = inlined_call_operand.vmem [shape: f32[2,1,32], index: 8, kind: input, shape index: {}]
  %s9 = inlined_call_operand.vmem [shape: bf16[2,32,128], index: 9, kind: input, shape index: {}]
  %s10 = inlined_call_operand.vmem [shape: f32[2,1,128], index: 10, kind: input, shape index: {}]
  %s11 = inlined_call_operand.vmem [shape: bf16[2,128,32], index: 11, kind: input, shape index: {}]
  %s12 = inlined_call_operand.vmem [shape: f32[2,1,32], index: 12, kind: input, shape index: {}]
  %s13 = inlined_call_operand.vmem [shape: f32[2,128,32], index: 13, kind: output, shape index: {}, may-alias: {0,13}]
  %s14 = sld [smem:[#allocation0]]
  $region89: #{transformer_forward.1} parent=0
    _
  %s16 = ssub.s32 1, %s14
  %s17 = scalar_select 0, %s16, %s14
  loop: start=0, step=1, limit=6
  $region2: #{transformer_forward.1} parent=0 // loop_pre_header
    _
  $region3: #{transformer_forward.1} parent=0 // loop_header
    %s19 = sphi 0, %s23
    %p20 = scmp.ge.s32.totalorder %s19, 6
    %s26 = sphi 0, %s38
    %s27 = sphi 0, %s34
    %s28 = sphi 0, %s26
    %s29 = sphi 0, %s27
    %s30 = sphi 0, %s28
    %s31 = sphi 0, %s29
    %s41 = sphi 0, %s43
    %s44 = sphi 0, %s41
    %s45 = sphi 0, %s44
    %s61 = sphi 0, %s45
    %s67 = sphi 0, %s69
    %s70 = sphi 0, %s67
    %s71 = sphi 0, %s70
    %s87 = sphi 0, %s71
    %s93 = sphi 0, %s95
    %s96 = sphi 0, %s93
    %s97 = sphi 0, %s96
    %s113 = sphi 0, %s97
    %s119 = sphi 0, %s121
    %s122 = sphi 0, %s119
    %s123 = sphi 0, %s122
    %s139 = sphi 0, %s123
    %s145 = sphi 0, %s147
    %s148 = sphi 0, %s145
    %s149 = sphi 0, %s148
    %s165 = sphi 0, %s149
    %s171 = sphi 0, %s173
    %s174 = sphi 0, %s171
    %s175 = sphi 0, %s174
    %s191 = sphi 0, %s175
    %s197 = sphi 0, %s199
    %s200 = sphi 0, %s197
    %s201 = sphi 0, %s200
    %s217 = sphi 0, %s201
    %s223 = sphi 0, %s225
    %s226 = sphi 0, %s223
    %s227 = sphi 0, %s226
    %s243 = sphi 0, %s227
    %s249 = sphi 0, %s251
    %s252 = sphi 0, %s249
    %s253 = sphi 0, %s252
    %s269 = sphi 0, %s253
    %s275 = sphi 0, %s277
    %s278 = sphi 0, %s275
    %s279 = sphi 0, %s278
    %s295 = sphi 0, %s279
    %s301 = sphi 0, %s303
    %s304 = sphi 0, %s301
    %s305 = sphi 0, %s304
    %s321 = sphi 0, %s305
    %s327 = sphi 0, %s329
    %s330 = sphi 0, %s327
    %s331 = sphi 0, %s330
    %s347 = sphi 0, %s331
    %s353 = sphi 0, %s355
    %s356 = sphi 0, %s353
    %s357 = sphi 0, %s356
    %s373 = sphi 0, %s357
    %s379 = sphi 0, %s381
    %s382 = sphi 0, %s379
    %s383 = sphi 0, %s382
    %s399 = sphi 0, %s383
  $region4: #{transformer_forward.1} parent=0 // loop_header_branch
    %22 = sbr.rel (%p20) target = $region8
  $region5: #{transformer_forward.1} parent=0 // loop_body
    %s24 = ssub.s32 %s19, 1
    %s25 = ssub.s32 %s19, 2
    %s32 = sadd.s32 1, %s27
    %p33 = scmp.ge.s32.totalorder %s32, 2
    %s34 = scalar_select %p33, 0, %s32
    %s35 = sadd.s32 1, %s26
    %s36 = scalar_select %p33, %s35, %s26
    %p37 = scmp.ge.s32.totalorder %s36, 2
    %s38 = scalar_select %p37, 0, %s36
    %s39 = ssub.s32 %s26, %s38
    %p40 = scmp.eq.s32.totalorder %s39, 0
    %s42 = sadd.s32 %s41, 1
    %s43 = scalar_select %p40, %s41, %s42
    %p46 = pneg %p40
    %p47 = scmp.eq.s32.totalorder %s19, 3
    %p48 = por %p46, %p47
    %p49 = scmp.ne.s32.totalorder %s41, %s44
    %p50 = scmp.eq.s32.totalorder %s19, 0
    %p51 = por %p49, %p50
    %p52 = scmp.ne.s32.totalorder %s41, %s44
    %p53 = scmp.eq.s32.totalorder %s24, 3
    %p54 = por %p52, %p53
    %p55 = scmp.ne.s32.totalorder %s44, %s45
    %p56 = scmp.eq.s32.totalorder %s24, 0
    %p57 = por %p55, %p56
    %p58 = scmp.ne.s32.totalorder %s44, %s45
    %p59 = scmp.eq.s32.totalorder %s25, 3
    %p60 = por %p58, %p59
    %p62 = scmp.ne.s32.totalorder %s45, %s61
    %p63 = scmp.eq.s32.totalorder %s25, 0
    %p64 = por %p62, %p63
    %s65 = ssub.s32 %s27, %s34
    %p66 = scmp.eq.s32.totalorder %s65, 0
    %s68 = sadd.s32 %s67, 1
    %s69 = scalar_select %p66, %s67, %s68
    %p72 = pneg %p66
    %p73 = scmp.eq.s32.totalorder %s19, 3
    %p74 = por %p72, %p73
    %p75 = scmp.ne.s32.totalorder %s67, %s70
    %p76 = scmp.eq.s32.totalorder %s19, 0
    %p77 = por %p75, %p76
    %p78 = scmp.ne.s32.totalorder %s67, %s70
    %p79 = scmp.eq.s32.totalorder %s24, 3
    %p80 = por %p78, %p79
    %p81 = scmp.ne.s32.totalorder %s70, %s71
    %p82 = scmp.eq.s32.totalorder %s24, 0
    %p83 = por %p81, %p82
    %p84 = scmp.ne.s32.totalorder %s70, %s71
    %p85 = scmp.eq.s32.totalorder %s25, 3
    %p86 = por %p84, %p85
    %p88 = scmp.ne.s32.totalorder %s71, %s87
    %p89 = scmp.eq.s32.totalorder %s25, 0
    %p90 = por %p88, %p89
    %s91 = ssub.s32 %s27, %s34
    %p92 = scmp.eq.s32.totalorder %s91, 0
    %s94 = sadd.s32 %s93, 1
    %s95 = scalar_select %p92, %s93, %s94
    %p98 = pneg %p92
    %p99 = scmp.eq.s32.totalorder %s19, 3
    %p100 = por %p98, %p99
    %p101 = scmp.ne.s32.totalorder %s93, %s96
    %p102 = scmp.eq.s32.totalorder %s19, 0
    %p103 = por %p101, %p102
    %p104 = scmp.ne.s32.totalorder %s93, %s96
    %p105 = scmp.eq.s32.totalorder %s24, 3
    %p106 = por %p104, %p105
    %p107 = scmp.ne.s32.totalorder %s96, %s97
    %p108 = scmp.eq.s32.totalorder %s24, 0
    %p109 = por %p107, %p108
    %p110 = scmp.ne.s32.totalorder %s96, %s97
    %p111 = scmp.eq.s32.totalorder %s25, 3
    %p112 = por %p110, %p111
    %p114 = scmp.ne.s32.totalorder %s97, %s113
    %p115 = scmp.eq.s32.totalorder %s25, 0
    %p116 = por %p114, %p115
    %s117 = ssub.s32 %s27, %s34
    %p118 = scmp.eq.s32.totalorder %s117, 0
    %s120 = sadd.s32 %s119, 1
    %s121 = scalar_select %p118, %s119, %s120
    %p124 = pneg %p118
    %p125 = scmp.eq.s32.totalorder %s19, 3
    %p126 = por %p124, %p125
    %p127 = scmp.ne.s32.totalorder %s119, %s122
    %p128 = scmp.eq.s32.totalorder %s19, 0
    %p129 = por %p127, %p128
    %p130 = scmp.ne.s32.totalorder %s119, %s122
    %p131 = scmp.eq.s32.totalorder %s24, 3
    %p132 = por %p130, %p131
    %p133 = scmp.ne.s32.totalorder %s122, %s123
    %p134 = scmp.eq.s32.totalorder %s24, 0
    %p135 = por %p133, %p134
    %p136 = scmp.ne.s32.totalorder %s122, %s123
    %p137 = scmp.eq.s32.totalorder %s25, 3
    %p138 = por %p136, %p137
    %p140 = scmp.ne.s32.totalorder %s123, %s139
    %p141 = scmp.eq.s32.totalorder %s25, 0
    %p142 = por %p140, %p141
    %s143 = ssub.s32 %s27, %s34
    %p144 = scmp.eq.s32.totalorder %s143, 0
    %s146 = sadd.s32 %s145, 1
    %s147 = scalar_select %p144, %s145, %s146
    %p150 = pneg %p144
    %p151 = scmp.eq.s32.totalorder %s19, 3
    %p152 = por %p150, %p151
    %p153 = scmp.ne.s32.totalorder %s145, %s148
    %p154 = scmp.eq.s32.totalorder %s19, 0
    %p155 = por %p153, %p154
    %p156 = scmp.ne.s32.totalorder %s145, %s148
    %p157 = scmp.eq.s32.totalorder %s24, 3
    %p158 = por %p156, %p157
    %p159 = scmp.ne.s32.totalorder %s148, %s149
    %p160 = scmp.eq.s32.totalorder %s24, 0
    %p161 = por %p159, %p160
    %p162 = scmp.ne.s32.totalorder %s148, %s149
    %p163 = scmp.eq.s32.totalorder %s25, 3
    %p164 = por %p162, %p163
    %p166 = scmp.ne.s32.totalorder %s149, %s165
    %p167 = scmp.eq.s32.totalorder %s25, 0
    %p168 = por %p166, %p167
    %s169 = ssub.s32 %s27, %s34
    %p170 = scmp.eq.s32.totalorder %s169, 0
    %s172 = sadd.s32 %s171, 1
    %s173 = scalar_select %p170, %s171, %s172
    %p176 = pneg %p170
    %p177 = scmp.eq.s32.totalorder %s19, 3
    %p178 = por %p176, %p177
    %p179 = scmp.ne.s32.totalorder %s171, %s174
    %p180 = scmp.eq.s32.totalorder %s19, 0
    %p181 = por %p179, %p180
    %p182 = scmp.ne.s32.totalorder %s171, %s174
    %p183 = scmp.eq.s32.totalorder %s24, 3
    %p184 = por %p182, %p183
    %p185 = scmp.ne.s32.totalorder %s174, %s175
    %p186 = scmp.eq.s32.totalorder %s24, 0
    %p187 = por %p185, %p186
    %p188 = scmp.ne.s32.totalorder %s174, %s175
    %p189 = scmp.eq.s32.totalorder %s25, 3
    %p190 = por %p188, %p189
    %p192 = scmp.ne.s32.totalorder %s175, %s191
    %p193 = scmp.eq.s32.totalorder %s25, 0
    %p194 = por %p192, %p193
    %s195 = ssub.s32 %s27, %s34
    %p196 = scmp.eq.s32.totalorder %s195, 0
    %s198 = sadd.s32 %s197, 1
    %s199 = scalar_select %p196, %s197, %s198
    %p202 = pneg %p196
    %p203 = scmp.eq.s32.totalorder %s19, 3
    %p204 = por %p202, %p203
    %p205 = scmp.ne.s32.totalorder %s197, %s200
    %p206 = scmp.eq.s32.totalorder %s19, 0
    %p207 = por %p205, %p206
    %p208 = scmp.ne.s32.totalorder %s197, %s200
    %p209 = scmp.eq.s32.totalorder %s24, 3
    %p210 = por %p208, %p209
    %p211 = scmp.ne.s32.totalorder %s200, %s201
    %p212 = scmp.eq.s32.totalorder %s24, 0
    %p213 = por %p211, %p212
    %p214 = scmp.ne.s32.totalorder %s200, %s201
    %p215 = scmp.eq.s32.totalorder %s25, 3
    %p216 = por %p214, %p215
    %p218 = scmp.ne.s32.totalorder %s201, %s217
    %p219 = scmp.eq.s32.totalorder %s25, 0
    %p220 = por %p218, %p219
    %s221 = ssub.s32 %s27, %s34
    %p222 = scmp.eq.s32.totalorder %s221, 0
    %s224 = sadd.s32 %s223, 1
    %s225 = scalar_select %p222, %s223, %s224
    %p228 = pneg %p222
    %p229 = scmp.eq.s32.totalorder %s19, 3
    %p230 = por %p228, %p229
    %p231 = scmp.ne.s32.totalorder %s223, %s226
    %p232 = scmp.eq.s32.totalorder %s19, 0
    %p233 = por %p231, %p232
    %p234 = scmp.ne.s32.totalorder %s223, %s226
    %p235 = scmp.eq.s32.totalorder %s24, 3
    %p236 = por %p234, %p235
    %p237 = scmp.ne.s32.totalorder %s226, %s227
    %p238 = scmp.eq.s32.totalorder %s24, 0
    %p239 = por %p237, %p238
    %p240 = scmp.ne.s32.totalorder %s226, %s227
    %p241 = scmp.eq.s32.totalorder %s25, 3
    %p242 = por %p240, %p241
    %p244 = scmp.ne.s32.totalorder %s227, %s243
    %p245 = scmp.eq.s32.totalorder %s25, 0
    %p246 = por %p244, %p245
    %s247 = ssub.s32 %s27, %s34
    %p248 = scmp.eq.s32.totalorder %s247, 0
    %s250 = sadd.s32 %s249, 1
    %s251 = scalar_select %p248, %s249, %s250
    %p254 = pneg %p248
    %p255 = scmp.eq.s32.totalorder %s19, 3
    %p256 = por %p254, %p255
    %p257 = scmp.ne.s32.totalorder %s249, %s252
    %p258 = scmp.eq.s32.totalorder %s19, 0
    %p259 = por %p257, %p258
    %p260 = scmp.ne.s32.totalorder %s249, %s252
    %p261 = scmp.eq.s32.totalorder %s24, 3
    %p262 = por %p260, %p261
    %p263 = scmp.ne.s32.totalorder %s252, %s253
    %p264 = scmp.eq.s32.totalorder %s24, 0
    %p265 = por %p263, %p264
    %p266 = scmp.ne.s32.totalorder %s252, %s253
    %p267 = scmp.eq.s32.totalorder %s25, 3
    %p268 = por %p266, %p267
    %p270 = scmp.ne.s32.totalorder %s253, %s269
    %p271 = scmp.eq.s32.totalorder %s25, 0
    %p272 = por %p270, %p271
    %s273 = ssub.s32 %s27, %s34
    %p274 = scmp.eq.s32.totalorder %s273, 0
    %s276 = sadd.s32 %s275, 1
    %s277 = scalar_select %p274, %s275, %s276
    %p280 = pneg %p274
    %p281 = scmp.eq.s32.totalorder %s19, 3
    %p282 = por %p280, %p281
    %p283 = scmp.ne.s32.totalorder %s275, %s278
    %p284 = scmp.eq.s32.totalorder %s19, 0
    %p285 = por %p283, %p284
    %p286 = scmp.ne.s32.totalorder %s275, %s278
    %p287 = scmp.eq.s32.totalorder %s24, 3
    %p288 = por %p286, %p287
    %p289 = scmp.ne.s32.totalorder %s278, %s279
    %p290 = scmp.eq.s32.totalorder %s24, 0
    %p291 = por %p289, %p290
    %p292 = scmp.ne.s32.totalorder %s278, %s279
    %p293 = scmp.eq.s32.totalorder %s25, 3
    %p294 = por %p292, %p293
    %p296 = scmp.ne.s32.totalorder %s279, %s295
    %p297 = scmp.eq.s32.totalorder %s25, 0
    %p298 = por %p296, %p297
    %s299 = ssub.s32 %s27, %s34
    %p300 = scmp.eq.s32.totalorder %s299, 0
    %s302 = sadd.s32 %s301, 1
    %s303 = scalar_select %p300, %s301, %s302
    %p306 = pneg %p300
    %p307 = scmp.eq.s32.totalorder %s19, 3
    %p308 = por %p306, %p307
    %p309 = scmp.ne.s32.totalorder %s301, %s304
    %p310 = scmp.eq.s32.totalorder %s19, 0
    %p311 = por %p309, %p310
    %p312 = scmp.ne.s32.totalorder %s301, %s304
    %p313 = scmp.eq.s32.totalorder %s24, 3
    %p314 = por %p312, %p313
    %p315 = scmp.ne.s32.totalorder %s304, %s305
    %p316 = scmp.eq.s32.totalorder %s24, 0
    %p317 = por %p315, %p316
    %p318 = scmp.ne.s32.totalorder %s304, %s305
    %p319 = scmp.eq.s32.totalorder %s25, 3
    %p320 = por %p318, %p319
    %p322 = scmp.ne.s32.totalorder %s305, %s321
    %p323 = scmp.eq.s32.totalorder %s25, 0
    %p324 = por %p322, %p323
    %s325 = ssub.s32 %s27, %s34
    %p326 = scmp.eq.s32.totalorder %s325, 0
    %s328 = sadd.s32 %s327, 1
    %s329 = scalar_select %p326, %s327, %s328
    %p332 = pneg %p326
    %p333 = scmp.eq.s32.totalorder %s19, 3
    %p334 = por %p332, %p333
    %p335 = scmp.ne.s32.totalorder %s327, %s330
    %p336 = scmp.eq.s32.totalorder %s19, 0
    %p337 = por %p335, %p336
    %p338 = scmp.ne.s32.totalorder %s327, %s330
    %p339 = scmp.eq.s32.totalorder %s24, 3
    %p340 = por %p338, %p339
    %p341 = scmp.ne.s32.totalorder %s330, %s331
    %p342 = scmp.eq.s32.totalorder %s24, 0
    %p343 = por %p341, %p342
    %p344 = scmp.ne.s32.totalorder %s330, %s331
    %p345 = scmp.eq.s32.totalorder %s25, 3
    %p346 = por %p344, %p345
    %p348 = scmp.ne.s32.totalorder %s331, %s347
    %p349 = scmp.eq.s32.totalorder %s25, 0
    %p350 = por %p348, %p349
    %s351 = ssub.s32 %s27, %s34
    %p352 = scmp.eq.s32.totalorder %s351, 0
    %s354 = sadd.s32 %s353, 1
    %s355 = scalar_select %p352, %s353, %s354
    %p358 = pneg %p352
    %p359 = scmp.eq.s32.totalorder %s19, 3
    %p360 = por %p358, %p359
    %p361 = scmp.ne.s32.totalorder %s353, %s356
    %p362 = scmp.eq.s32.totalorder %s19, 0
    %p363 = por %p361, %p362
    %p364 = scmp.ne.s32.totalorder %s353, %s356
    %p365 = scmp.eq.s32.totalorder %s24, 3
    %p366 = por %p364, %p365
    %p367 = scmp.ne.s32.totalorder %s356, %s357
    %p368 = scmp.eq.s32.totalorder %s24, 0
    %p369 = por %p367, %p368
    %p370 = scmp.ne.s32.totalorder %s356, %s357
    %p371 = scmp.eq.s32.totalorder %s25, 3
    %p372 = por %p370, %p371
    %p374 = scmp.ne.s32.totalorder %s357, %s373
    %p375 = scmp.eq.s32.totalorder %s25, 0
    %p376 = por %p374, %p375
    %s377 = ssub.s32 %s26, %s38
    %p378 = scmp.eq.s32.totalorder %s377, 0
    %s380 = sadd.s32 %s379, 1
    %s381 = scalar_select %p378, %s379, %s380
    %p384 = pneg %p378
    %p385 = scmp.eq.s32.totalorder %s19, 3
    %p386 = por %p384, %p385
    %p387 = scmp.ne.s32.totalorder %s379, %s382
    %p388 = scmp.eq.s32.totalorder %s19, 0
    %p389 = por %p387, %p388
    %p390 = scmp.ne.s32.totalorder %s379, %s382
    %p391 = scmp.eq.s32.totalorder %s24, 3
    %p392 = por %p390, %p391
    %p393 = scmp.ne.s32.totalorder %s382, %s383
    %p394 = scmp.eq.s32.totalorder %s24, 0
    %p395 = por %p393, %p394
    %p396 = scmp.ne.s32.totalorder %s382, %s383
    %p397 = scmp.eq.s32.totalorder %s25, 3
    %p398 = por %p396, %p397
    %p400 = scmp.ne.s32.totalorder %s383, %s399
    %p401 = scmp.eq.s32.totalorder %s25, 0
    %p402 = por %p400, %p401
    %p403 = scmp.le.s32.totalorder 1, %s19
    %p404 = scmp.lt.s32.totalorder %s19, 5
    %p405 = pnand %p403, %p404
    %p406 = pneg %p405
    // Predicated region
    $region9: #{transformer_forward.1} parent=5 // pred_check
      _
    $region10: #{transformer_forward.1} parent=5 // pred_check_branch
      %408 = sbr.rel (%p405) target = $region12
    $region11: #{transformer_forward.1} parent=5 // pred_region
      %s409 = ssub.s32 %s19, 1
    $region12: #{transformer_forward.1} parent=5 // pred_fallthru
      _
    %p410 = scmp.lt.s32.totalorder %s19, 4
    // Predicated region
    $region13: #{transformer_forward.1} parent=5 // pred_check
      %p411 = pneg %p410
    $region14: #{transformer_forward.1} parent=5 // pred_check_branch
      %413 = sbr.rel (%p411) target = $region16
    $region15: #{transformer_forward.1} parent=5 // pred_region
      // Predicated region
      $region17: #{transformer_forward.1} parent=15 // pred_check
        %p414 = pneg %p51
      $region18: #{transformer_forward.1} parent=15 // pred_check_branch
        %416 = sbr.rel (%p414) target = $region20
      $region19: #{transformer_forward.1} parent=15 // pred_region
        %p417 = scmp.lt.s32.totalorder %s26, 1
        %s418 = scalar_select %p417, %s26, 1
        %s419 = smul.addr %s418, 16
        %s420 = smul.addr %s419, 8
        %s421 = scalar_lea.vmem %s0, %s420
      $region20: #{transformer_forward.1} parent=15 // pred_fallthru
        _
      // Predicated region
      $region21: #{transformer_forward.1} parent=15 // pred_check
        %p422 = pneg %p77
      $region22: #{transformer_forward.1} parent=15 // pred_check_branch
        %424 = sbr.rel (%p422) target = $region24
      $region23: #{transformer_forward.1} parent=15 // pred_region
        %p425 = scmp.lt.s32.totalorder %s27, 1
        %s426 = scalar_select %p425, %s27, 1
        %s427 = scalar_lea.vmem %s1, %s426
      $region24: #{transformer_forward.1} parent=15 // pred_fallthru
        _
      // Predicated region
      $region25: #{transformer_forward.1} parent=15 // pred_check
        %p428 = pneg %p103
      $region26: #{transformer_forward.1} parent=15 // pred_check_branch
        %430 = sbr.rel (%p428) target = $region28
      $region27: #{transformer_forward.1} parent=15 // pred_region
        %p431 = scmp.lt.s32.totalorder %s27, 1
        %s432 = scalar_select %p431, %s27, 1
        %s433 = scalar_lea.vmem %s2, %s432
      $region28: #{transformer_forward.1} parent=15 // pred_fallthru
        _
      // Predicated region
      $region29: #{transformer_forward.1} parent=15 // pred_check
        %p434 = pneg %p129
      $region30: #{transformer_forward.1} parent=15 // pred_check_branch
        %436 = sbr.rel (%p434) target = $region32
      $region31: #{transformer_forward.1} parent=15 // pred_region
        %p437 = scmp.lt.s32.totalorder %s27, 1
        %s438 = scalar_select %p437, %s27, 1
        %s439 = smul.addr %s438, 4
        %s440 = smul.addr %s439, 4
        %s441 = scalar_lea.vmem %s3, %s440
      $region32: #{transformer_forward.1} parent=15 // pred_fallthru
        _
      // Predicated region
      $region33: #{transformer_forward.1} parent=15 // pred_check
        %p442 = pneg %p155
      $region34: #{transformer_forward.1} parent=15 // pred_check_branch
        %444 = sbr.rel (%p442) target = $region36
      $region35: #{transformer_forward.1} parent=15 // pred_region
        %p445 = scmp.lt.s32.totalorder %s27, 1
        %s446 = scalar_select %p445, %s27, 1
        %s447 = scalar_lea.vmem %s4, %s446
      $region36: #{transformer_forward.1} parent=15 // pred_fallthru
        _
      // Predicated region
      $region37: #{transformer_forward.1} parent=15 // pred_check
        %p448 = pneg %p181
      $region38: #{transformer_forward.1} parent=15 // pred_check_branch
        %450 = sbr.rel (%p448) target = $region40
      $region39: #{transformer_forward.1} parent=15 // pred_region
        %p451 = scmp.lt.s32.totalorder %s27, 1
        %s452 = scalar_select %p451, %s27, 1
        %s453 = smul.addr %s452, 4
        %s454 = smul.addr %s453, 4
        %s455 = scalar_lea.vmem %s5, %s454
      $region40: #{transformer_forward.1} parent=15 // pred_fallthru
        _
      // Predicated region
      $region41: #{transformer_forward.1} parent=15 // pred_check
        %p456 = pneg %p207
      $region42: #{transformer_forward.1} parent=15 // pred_check_branch
        %458 = sbr.rel (%p456) target = $region44
      $region43: #{transformer_forward.1} parent=15 // pred_region
        %p459 = scmp.lt.s32.totalorder %s27, 1
        %s460 = scalar_select %p459, %s27, 1
        %s461 = scalar_lea.vmem %s6, %s460
      $region44: #{transformer_forward.1} parent=15 // pred_fallthru
        _
      // Predicated region
      $region45: #{transformer_forward.1} parent=15 // pred_check
        %p462 = pneg %p233
      $region46: #{transformer_forward.1} parent=15 // pred_check_branch
        %464 = sbr.rel (%p462) target = $region48
      $region47: #{transformer_forward.1} parent=15 // pred_region
        %p465 = scmp.lt.s32.totalorder %s27, 1
        %s466 = scalar_select %p465, %s27, 1
        %s467 = scalar_lea.vmem %s7, %s466
      $region48: #{transformer_forward.1} parent=15 // pred_fallthru
        _
      // Predicated region
      $region49: #{transformer_forward.1} parent=15 // pred_check
        %p468 = pneg %p259
      $region50: #{transformer_forward.1} parent=15 // pred_check_branch
        %470 = sbr.rel (%p468) target = $region52
      $region51: #{transformer_forward.1} parent=15 // pred_region
        %p471 = scmp.lt.s32.totalorder %s27, 1
        %s472 = scalar_select %p471, %s27, 1
        %s473 = scalar_lea.vmem %s8, %s472
      $region52: #{transformer_forward.1} parent=15 // pred_fallthru
        _
      // Predicated region
      $region53: #{transformer_forward.1} parent=15 // pred_check
        %p474 = pneg %p285
      $region54: #{transformer_forward.1} parent=15 // pred_check_branch
        %476 = sbr.rel (%p474) target = $region56
      $region55: #{transformer_forward.1} parent=15 // pred_region
        %p477 = scmp.lt.s32.totalorder %s27, 1
        %s478 = scalar_select %p477, %s27, 1
        %s479 = smul.addr %s478, 4
        %s480 = smul.addr %s479, 4
        %s481 = scalar_lea.vmem %s9, %s480
      $region56: #{transformer_forward.1} parent=15 // pred_fallthru
        _
      // Predicated region
      $region57: #{transformer_forward.1} parent=15 // pred_check
        %p482 = pneg %p311
      $region58: #{transformer_forward.1} parent=15 // pred_check_branch
        %484 = sbr.rel (%p482) target = $region60
      $region59: #{transformer_forward.1} parent=15 // pred_region
        %p485 = scmp.lt.s32.totalorder %s27, 1
        %s486 = scalar_select %p485, %s27, 1
        %s487 = scalar_lea.vmem %s10, %s486
      $region60: #{transformer_forward.1} parent=15 // pred_fallthru
        _
      // Predicated region
      $region61: #{transformer_forward.1} parent=15 // pred_check
        %p488 = pneg %p337
      $region62: #{transformer_forward.1} parent=15 // pred_check_branch
        %490 = sbr.rel (%p488) target = $region64
      $region63: #{transformer_forward.1} parent=15 // pred_region
        %p491 = scmp.lt.s32.totalorder %s27, 1
        %s492 = scalar_select %p491, %s27, 1
        %s493 = smul.addr %s492, 16
        %s494 = smul.addr %s493, 4
        %s495 = scalar_lea.vmem %s11, %s494
      $region64: #{transformer_forward.1} parent=15 // pred_fallthru
        _
      // Predicated region
      $region65: #{transformer_forward.1} parent=15 // pred_check
        %p496 = pneg %p363
      $region66: #{transformer_forward.1} parent=15 // pred_check_branch
        %498 = sbr.rel (%p496) target = $region68
      $region67: #{transformer_forward.1} parent=15 // pred_region
        %p499 = scmp.lt.s32.totalorder %s27, 1
        %s500 = scalar_select %p499, %s27, 1
        %s501 = scalar_lea.vmem %s12, %s500
      $region68: #{transformer_forward.1} parent=15 // pred_fallthru
        _
    $region16: #{transformer_forward.1} parent=5 // pred_fallthru
      _
    %p502 = scmp.le.s32.totalorder 1, %s19
    %p503 = scmp.lt.s32.totalorder %s19, 5
    %p504 = pnand %p502, %p503
    %p505 = pneg %p504
    // Predicated region
    $region69: #{transformer_forward.1} parent=5 // pred_check
      _
    $region70: #{transformer_forward.1} parent=5 // pred_check_branch
      %507 = sbr.rel (%p504) target = $region72
    $region71: #{transformer_forward.1} parent=5 // pred_region
      %s508 = ssub.s32 %s19, 1
      %p509 = scmp.lt.s32.totalorder %s28, 1
      %s510 = scalar_select %p509, %s28, 1
      %s511 = smul.addr %s510, 16
      %s512 = smul.addr %s511, 8
      %s513 = scalar_lea.vmem %s0, %s512
      %p514 = pneg %p57
      %p515 = pneg %p54
      %p516 = scmp.lt.s32.totalorder %s29, 1
      %s517 = scalar_select %p516, %s29, 1
      %s518 = scalar_lea.vmem %s1, %s517
      %p519 = pneg %p83
      %p520 = pneg %p80
      %p521 = scmp.lt.s32.totalorder %s29, 1
      %s522 = scalar_select %p521, %s29, 1
      %s523 = scalar_lea.vmem %s2, %s522
      %p524 = pneg %p109
      %p525 = pneg %p106
      %p526 = scmp.lt.s32.totalorder %s29, 1
      %s527 = scalar_select %p526, %s29, 1
      %s528 = smul.addr %s527, 4
      %s529 = smul.addr %s528, 4
      %s530 = scalar_lea.vmem %s3, %s529
      %p531 = pneg %p135
      %p532 = pneg %p132
      %p533 = scmp.lt.s32.totalorder %s29, 1
      %s534 = scalar_select %p533, %s29, 1
      %s535 = scalar_lea.vmem %s4, %s534
      %p536 = pneg %p161
      %p537 = pneg %p158
      %p538 = scmp.lt.s32.totalorder %s29, 1
      %s539 = scalar_select %p538, %s29, 1
      %s540 = smul.addr %s539, 4
      %s541 = smul.addr %s540, 4
      %s542 = scalar_lea.vmem %s5, %s541
      %p543 = pneg %p187
      %p544 = pneg %p184
      %p545 = scmp.lt.s32.totalorder %s29, 1
      %s546 = scalar_select %p545, %s29, 1
      %s547 = scalar_lea.vmem %s6, %s546
      %p548 = pneg %p213
      %p549 = pneg %p210
      %p550 = scmp.lt.s32.totalorder %s29, 1
      %s551 = scalar_select %p550, %s29, 1
      %s552 = scalar_lea.vmem %s7, %s551
      %p553 = pneg %p239
      %p554 = pneg %p236
      %p555 = scmp.lt.s32.totalorder %s29, 1
      %s556 = scalar_select %p555, %s29, 1
      %s557 = scalar_lea.vmem %s8, %s556
      %p558 = pneg %p265
      %p559 = pneg %p262
      %p560 = scmp.lt.s32.totalorder %s29, 1
      %s561 = scalar_select %p560, %s29, 1
      %s562 = smul.addr %s561, 4
      %s563 = smul.addr %s562, 4
      %s564 = scalar_lea.vmem %s9, %s563
      %p565 = pneg %p291
      %p566 = pneg %p288
      %p567 = scmp.lt.s32.totalorder %s29, 1
      %s568 = scalar_select %p567, %s29, 1
      %s569 = scalar_lea.vmem %s10, %s568
      %p570 = pneg %p317
      %p571 = pneg %p314
      %p572 = scmp.lt.s32.totalorder %s29, 1
      %s573 = scalar_select %p572, %s29, 1
      %s574 = smul.addr %s573, 16
      %s575 = smul.addr %s574, 4
      %s576 = scalar_lea.vmem %s11, %s575
      %p577 = pneg %p343
      %p578 = pneg %p340
      %p579 = scmp.lt.s32.totalorder %s29, 1
      %s580 = scalar_select %p579, %s29, 1
      %s581 = scalar_lea.vmem %s12, %s580
      %p582 = pneg %p369
      %p583 = pneg %p366
      %p584 = pneg %p395
      %p585 = pneg %p392
      %p586 = scmp.lt.s32.totalorder %s28, 1
      %s587 = scalar_select %p586, %s28, 1
      %s588 = smul.addr %s587, 16
      %s589 = smul.addr %s588, 8
      %s590 = scalar_lea.vmem %s13, %s589
      %p591 = scmp.lt.s32.totalorder %s28, 1
      %s592 = scalar_select %p591, %s28, 1
      %s593 = smul.addr %s592, 16
      %s594 = smul.addr %s593, 8
      %s595 = scalar_lea.vmem %s0, %s594
      %p596 = scmp.lt.s32.totalorder %s29, 1
      %s597 = scalar_select %p596, %s29, 1
      %s598 = scalar_lea.vmem %s1, %s597
      %p599 = scmp.lt.s32.totalorder %s29, 1
      %s600 = scalar_select %p599, %s29, 1
      %s601 = scalar_lea.vmem %s2, %s600
      %p602 = scmp.lt.s32.totalorder %s29, 1
      %s603 = scalar_select %p602, %s29, 1
      %s604 = smul.addr %s603, 4
      %s605 = smul.addr %s604, 4
      %s606 = scalar_lea.vmem %s3, %s605
      %p607 = scmp.lt.s32.totalorder %s29, 1
      %s608 = scalar_select %p607, %s29, 1
      %s609 = scalar_lea.vmem %s4, %s608
      %p610 = scmp.lt.s32.totalorder %s29, 1
      %s611 = scalar_select %p610, %s29, 1
      %s612 = smul.addr %s611, 4
      %s613 = smul.addr %s612, 4
      %s614 = scalar_lea.vmem %s5, %s613
      %p615 = scmp.lt.s32.totalorder %s29, 1
      %s616 = scalar_select %p615, %s29, 1
      %s617 = scalar_lea.vmem %s6, %s616
      %p618 = scmp.lt.s32.totalorder %s29, 1
      %s619 = scalar_select %p618, %s29, 1
      %s620 = scalar_lea.vmem %s7, %s619
      %p621 = scmp.lt.s32.totalorder %s29, 1
      %s622 = scalar_select %p621, %s29, 1
      %s623 = scalar_lea.vmem %s8, %s622
      %p624 = scmp.lt.s32.totalorder %s29, 1
      %s625 = scalar_select %p624, %s29, 1
      %s626 = smul.addr %s625, 4
      %s627 = smul.addr %s626, 4
      %s628 = scalar_lea.vmem %s9, %s627
      %p629 = scmp.lt.s32.totalorder %s29, 1
      %s630 = scalar_select %p629, %s29, 1
      %s631 = scalar_lea.vmem %s10, %s630
      %p632 = scmp.lt.s32.totalorder %s29, 1
      %s633 = scalar_select %p632, %s29, 1
      %s634 = smul.addr %s633, 16
      %s635 = smul.addr %s634, 4
      %s636 = scalar_lea.vmem %s11, %s635
      %p637 = scmp.lt.s32.totalorder %s29, 1
      %s638 = scalar_select %p637, %s29, 1
      %s639 = scalar_lea.vmem %s12, %s638
      %p640 = scmp.lt.s32.totalorder %s28, 1
      %s641 = scalar_select %p640, %s28, 1
      %s642 = smul.addr %s641, 16
      %s643 = smul.addr %s642, 8
      %s644 = scalar_lea.vmem %s13, %s643
      %p646 = scmp.eq.s32.totalorder %s29, 0
      // Predicated region
      $region73: #{transformer_forward.1} parent=71 // pred_check
        %p647 = pneg %p646
      $region74: #{transformer_forward.1} parent=71 // pred_check_branch
        %649 = sbr.rel (%p647) target = $region76
      $region75: #{transformer_forward.1} parent=71 // pred_region
        %v650 = vld [vmem:[%s595] sm:$0xff]
        %v651 = vld [vmem:[%s595 + $0x8] sm:$0xff]
        %v652 = vld [vmem:[%s595 + $0x10] sm:$0xff]
        %v653 = vld [vmem:[%s595 + $0x18] sm:$0xff]
        %v654 = vld [vmem:[%s595 + $0x20] sm:$0xff]
        %v655 = vld [vmem:[%s595 + $0x28] sm:$0xff]
        %v656 = vld [vmem:[%s595 + $0x30] sm:$0xff]
        %v657 = vld [vmem:[%s595 + $0x38] sm:$0xff]
        %v658 = vld [vmem:[%s595 + $0x40] sm:$0xff]
        %v659 = vld [vmem:[%s595 + $0x48] sm:$0xff]
        %v660 = vld [vmem:[%s595 + $0x50] sm:$0xff]
        %v661 = vld [vmem:[%s595 + $0x58] sm:$0xff]
        %v662 = vld [vmem:[%s595 + $0x60] sm:$0xff]
        %v663 = vld [vmem:[%s595 + $0x68] sm:$0xff]
        %v664 = vld [vmem:[%s595 + $0x70] sm:$0xff]
        %v665 = vld [vmem:[%s595 + $0x78] sm:$0xff]
        %vm666 = vcmask 261120
        %667 = vst.msk [vmem:[%s644] sm:$0xff] %vm666, %v650
        %668 = vst.msk [vmem:[%s644 + $0x8] sm:$0xff] %vm666, %v651
        %669 = vst.msk [vmem:[%s644 + $0x10] sm:$0xff] %vm666, %v652
        %670 = vst.msk [vmem:[%s644 + $0x18] sm:$0xff] %vm666, %v653
        %671 = vst.msk [vmem:[%s644 + $0x20] sm:$0xff] %vm666, %v654
        %672 = vst.msk [vmem:[%s644 + $0x28] sm:$0xff] %vm666, %v655
        %673 = vst.msk [vmem:[%s644 + $0x30] sm:$0xff] %vm666, %v656
        %674 = vst.msk [vmem:[%s644 + $0x38] sm:$0xff] %vm666, %v657
        %675 = vst.msk [vmem:[%s644 + $0x40] sm:$0xff] %vm666, %v658
        %676 = vst.msk [vmem:[%s644 + $0x48] sm:$0xff] %vm666, %v659
        %677 = vst.msk [vmem:[%s644 + $0x50] sm:$0xff] %vm666, %v660
        %678 = vst.msk [vmem:[%s644 + $0x58] sm:$0xff] %vm666, %v661
        %679 = vst.msk [vmem:[%s644 + $0x60] sm:$0xff] %vm666, %v662
        %680 = vst.msk [vmem:[%s644 + $0x68] sm:$0xff] %vm666, %v663
        %681 = vst.msk [vmem:[%s644 + $0x70] sm:$0xff] %vm666, %v664
        %682 = vst.msk [vmem:[%s644 + $0x78] sm:$0xff] %vm666, %v665
      $region76: #{transformer_forward.1} parent=71 // pred_fallthru
        _
      %v683 = vld [vmem:[%s644] sm:$0xff]
      %v684 = vld [vmem:[%s644 + $0x8] sm:$0xff]
      %v685 = vld [vmem:[%s644 + $0x10] sm:$0xff]
      %v686 = vld [vmem:[%s644 + $0x18] sm:$0xff]
      %v687 = vld [vmem:[%s644 + $0x20] sm:$0xff]
      %v688 = vld [vmem:[%s644 + $0x28] sm:$0xff]
      %v689 = vld [vmem:[%s644 + $0x30] sm:$0xff]
      %v690 = vld [vmem:[%s644 + $0x38] sm:$0xff]
      %v691 = vld [vmem:[%s644 + $0x40] sm:$0xff]
      %v692 = vld [vmem:[%s644 + $0x48] sm:$0xff]
      %v693 = vld [vmem:[%s644 + $0x50] sm:$0xff]
      %v694 = vld [vmem:[%s644 + $0x58] sm:$0xff]
      %v695 = vld [vmem:[%s644 + $0x60] sm:$0xff]
      %v696 = vld [vmem:[%s644 + $0x68] sm:$0xff]
      %v697 = vld [vmem:[%s644 + $0x70] sm:$0xff]
      %v698 = vld [vmem:[%s644 + $0x78] sm:$0xff]
      %v699 = vld [vmem:[%s598] sm:$0x1]
      %v700 = vld [vmem:[%s601] sm:$0x1]
      %vm701 = vcmask 261120
      %v702 = vsel %vm701, %v683, 0.0
      %703 = vadd.xlane.f32.xlu0 %v702
      %v704 = vpop.xlane.xlu0 %703
      %v705 = vsel %vm701, %v684, 0.0
      %706 = vadd.xlane.f32.xlu0 %v705
      %v707 = vpop.xlane.xlu0 %706
      %v708 = vsel %vm701, %v685, 0.0
      %709 = vadd.xlane.f32.xlu0 %v708
      %v710 = vpop.xlane.xlu0 %709
      %v711 = vsel %vm701, %v686, 0.0
      %712 = vadd.xlane.f32.xlu0 %v711
      %v713 = vpop.xlane.xlu0 %712
      %v714 = vsel %vm701, %v687, 0.0
      %715 = vadd.xlane.f32.xlu0 %v714
      %v716 = vpop.xlane.xlu0 %715
      %v717 = vsel %vm701, %v688, 0.0
      %718 = vadd.xlane.f32.xlu0 %v717
      %v719 = vpop.xlane.xlu0 %718
      %v720 = vsel %vm701, %v689, 0.0
      %721 = vadd.xlane.f32.xlu0 %v720
      %v722 = vpop.xlane.xlu0 %721
      %v723 = vsel %vm701, %v690, 0.0
      %724 = vadd.xlane.f32.xlu0 %v723
      %v725 = vpop.xlane.xlu0 %724
      %v726 = vsel %vm701, %v691, 0.0
      %727 = vadd.xlane.f32.xlu0 %v726
      %v728 = vpop.xlane.xlu0 %727
      %v729 = vsel %vm701, %v692, 0.0
      %730 = vadd.xlane.f32.xlu0 %v729
      %v731 = vpop.xlane.xlu0 %730
      %v732 = vsel %vm701, %v693, 0.0
      %733 = vadd.xlane.f32.xlu0 %v732
      %v734 = vpop.xlane.xlu0 %733
      %v735 = vsel %vm701, %v694, 0.0
      %736 = vadd.xlane.f32.xlu0 %v735
      %v737 = vpop.xlane.xlu0 %736
      %v738 = vsel %vm701, %v695, 0.0
      %739 = vadd.xlane.f32.xlu0 %v738
      %v740 = vpop.xlane.xlu0 %739
      %v741 = vsel %vm701, %v696, 0.0
      %742 = vadd.xlane.f32.xlu0 %v741
      %v743 = vpop.xlane.xlu0 %742
      %v744 = vsel %vm701, %v697, 0.0
      %745 = vadd.xlane.f32.xlu0 %v744
      %v746 = vpop.xlane.xlu0 %745
      %v747 = vsel %vm701, %v698, 0.0
      %748 = vadd.xlane.f32.xlu0 %v747
      %v749 = vpop.xlane.xlu0 %748
      %v750 = vrcp.pop 32.0
      %v751 = vmul.f32 %v704, %v750
      %v752 = vmul.f32 %v707, %v750
      %v753 = vmul.f32 %v710, %v750
      %v754 = vmul.f32 %v713, %v750
      %v755 = vmul.f32 %v716, %v750
      %v756 = vmul.f32 %v719, %v750
      %v757 = vmul.f32 %v722, %v750
      %v758 = vmul.f32 %v725, %v750
      %v759 = vmul.f32 %v728, %v750
      %v760 = vmul.f32 %v731, %v750
      %v761 = vmul.f32 %v734, %v750
      %v762 = vmul.f32 %v737, %v750
      %v763 = vmul.f32 %v740, %v750
      %v764 = vmul.f32 %v743, %v750
      %v765 = vmul.f32 %v746, %v750
      %v766 = vmul.f32 %v749, %v750
      %v767 = vsub.f32 %v683, %v751
      %v768 = vsub.f32 %v684, %v752
      %v769 = vsub.f32 %v685, %v753
      %v770 = vsub.f32 %v686, %v754
      %v771 = vsub.f32 %v687, %v755
      %v772 = vsub.f32 %v688, %v756
      %v773 = vsub.f32 %v689, %v757
      %v774 = vsub.f32 %v690, %v758
      %v775 = vsub.f32 %v691, %v759
      %v776 = vsub.f32 %v692, %v760
      %v777 = vsub.f32 %v693, %v761
      %v778 = vsub.f32 %v694, %v762
      %v779 = vsub.f32 %v695, %v763
      %v780 = vsub.f32 %v696, %v764
      %v781 = vsub.f32 %v697, %v765
      %v782 = vsub.f32 %v698, %v766
      %v783 = vmul.f32 %v767, %v767
      %v784 = vmul.f32 %v768, %v768
      %v785 = vmul.f32 %v769, %v769
      %v786 = vmul.f32 %v770, %v770
      %v787 = vmul.f32 %v771, %v771
      %v788 = vmul.f32 %v772, %v772
      %v789 = vmul.f32 %v773, %v773
      %v790 = vmul.f32 %v774, %v774
      %v791 = vmul.f32 %v775, %v775
      %v792 = vmul.f32 %v776, %v776
      %v793 = vmul.f32 %v777, %v777
      %v794 = vmul.f32 %v778, %v778
      %v795 = vmul.f32 %v779, %v779
      %v796 = vmul.f32 %v780, %v780
      %v797 = vmul.f32 %v781, %v781
      %v798 = vmul.f32 %v782, %v782
      %v799 = vsel %vm701, %v783, 0.0
      %800 = vadd.xlane.f32.xlu0 %v799
      %v801 = vpop.xlane.xlu0 %800
      %v802 = vsel %vm701, %v784, 0.0
      %803 = vadd.xlane.f32.xlu0 %v802
      %v804 = vpop.xlane.xlu0 %803
      %v805 = vsel %vm701, %v785, 0.0
      %806 = vadd.xlane.f32.xlu0 %v805
      %v807 = vpop.xlane.xlu0 %806
      %v808 = vsel %vm701, %v786, 0.0
      %809 = vadd.xlane.f32.xlu0 %v808
      %v810 = vpop.xlane.xlu0 %809
      %v811 = vsel %vm701, %v787, 0.0
      %812 = vadd.xlane.f32.xlu0 %v811
      %v813 = vpop.xlane.xlu0 %812
      %v814 = vsel %vm701, %v788, 0.0
      %815 = vadd.xlane.f32.xlu0 %v814
      %v816 = vpop.xlane.xlu0 %815
      %v817 = vsel %vm701, %v789, 0.0
      %818 = vadd.xlane.f32.xlu0 %v817
      %v819 = vpop.xlane.xlu0 %818
      %v820 = vsel %vm701, %v790, 0.0
      %821 = vadd.xlane.f32.xlu0 %v820
      %v822 = vpop.xlane.xlu0 %821
      %v823 = vsel %vm701, %v791, 0.0
      %824 = vadd.xlane.f32.xlu0 %v823
      %v825 = vpop.xlane.xlu0 %824
      %v826 = vsel %vm701, %v792, 0.0
      %827 = vadd.xlane.f32.xlu0 %v826
      %v828 = vpop.xlane.xlu0 %827
      %v829 = vsel %vm701, %v793, 0.0
      %830 = vadd.xlane.f32.xlu0 %v829
      %v831 = vpop.xlane.xlu0 %830
      %v832 = vsel %vm701, %v794, 0.0
      %833 = vadd.xlane.f32.xlu0 %v832
      %v834 = vpop.xlane.xlu0 %833
      %v835 = vsel %vm701, %v795, 0.0
      %836 = vadd.xlane.f32.xlu0 %v835
      %v837 = vpop.xlane.xlu0 %836
      %v838 = vsel %vm701, %v796, 0.0
      %839 = vadd.xlane.f32.xlu0 %v838
      %v840 = vpop.xlane.xlu0 %839
      %v841 = vsel %vm701, %v797, 0.0
      %842 = vadd.xlane.f32.xlu0 %v841
      %v843 = vpop.xlane.xlu0 %842
      %v844 = vsel %vm701, %v798, 0.0
      %845 = vadd.xlane.f32.xlu0 %v844
      %v846 = vpop.xlane.xlu0 %845
      %v847 = vmul.f32 %v801, %v750
      %v848 = vmul.f32 %v804, %v750
      %v849 = vmul.f32 %v807, %v750
      %v850 = vmul.f32 %v810, %v750
      %v851 = vmul.f32 %v813, %v750
      %v852 = vmul.f32 %v816, %v750
      %v853 = vmul.f32 %v819, %v750
      %v854 = vmul.f32 %v822, %v750
      %v855 = vmul.f32 %v825, %v750
      %v856 = vmul.f32 %v828, %v750
      %v857 = vmul.f32 %v831, %v750
      %v858 = vmul.f32 %v834, %v750
      %v859 = vmul.f32 %v837, %v750
      %v860 = vmul.f32 %v840, %v750
      %v861 = vmul.f32 %v843, %v750
      %v862 = vmul.f32 %v846, %v750
      %v863 = vadd.f32 %v847, 1e-05
      %v864 = vadd.f32 %v848, 1e-05
      %v865 = vadd.f32 %v849, 1e-05
      %v866 = vadd.f32 %v850, 1e-05
      %v867 = vadd.f32 %v851, 1e-05
      %v868 = vadd.f32 %v852, 1e-05
      %v869 = vadd.f32 %v853, 1e-05
      %v870 = vadd.f32 %v854, 1e-05
      %v871 = vadd.f32 %v855, 1e-05
      %v872 = vadd.f32 %v856, 1e-05
      %v873 = vadd.f32 %v857, 1e-05
      %v874 = vadd.f32 %v858, 1e-05
      %v875 = vadd.f32 %v859, 1e-05
      %v876 = vadd.f32 %v860, 1e-05
      %v877 = vadd.f32 %v861, 1e-05
      %v878 = vadd.f32 %v862, 1e-05
      %v879 = vrsqrt.pop %v863
      %v880 = vrsqrt.pop %v864
      %v881 = vrsqrt.pop %v865
      %v882 = vrsqrt.pop %v866
      %v883 = vrsqrt.pop %v867
      %v884 = vrsqrt.pop %v868
      %v885 = vrsqrt.pop %v869
      %v886 = vrsqrt.pop %v870
      %v887 = vrsqrt.pop %v871
      %v888 = vrsqrt.pop %v872
      %v889 = vrsqrt.pop %v873
      %v890 = vrsqrt.pop %v874
      %v891 = vrsqrt.pop %v875
      %v892 = vrsqrt.pop %v876
      %v893 = vrsqrt.pop %v877
      %v894 = vrsqrt.pop %v878
      %v895 = vmul.f32 %v767, %v879
      %v896 = vmul.f32 %v768, %v880
      %v897 = vmul.f32 %v769, %v881
      %v898 = vmul.f32 %v770, %v882
      %v899 = vmul.f32 %v771, %v883
      %v900 = vmul.f32 %v772, %v884
      %v901 = vmul.f32 %v773, %v885
      %v902 = vmul.f32 %v774, %v886
      %v903 = vmul.f32 %v775, %v887
      %v904 = vmul.f32 %v776, %v888
      %v905 = vmul.f32 %v777, %v889
      %v906 = vmul.f32 %v778, %v890
      %v907 = vmul.f32 %v779, %v891
      %v908 = vmul.f32 %v780, %v892
      %v909 = vmul.f32 %v781, %v893
      %v910 = vmul.f32 %v782, %v894
      %v912 = vlaneseq
      %v913 = vshrl.u32 %v912, 7
      %v914 = vsub.s32 0, %v913
      %v915 = vrot.slane %v699, %v914
      %v917 = vmul.f32 %v895, %v915
      %v918 = vmul.f32 %v896, %v915
      %v919 = vmul.f32 %v897, %v915
      %v920 = vmul.f32 %v898, %v915
      %v921 = vmul.f32 %v899, %v915
      %v922 = vmul.f32 %v900, %v915
      %v923 = vmul.f32 %v901, %v915
      %v924 = vmul.f32 %v902, %v915
      %v925 = vmul.f32 %v903, %v915
      %v926 = vmul.f32 %v904, %v915
      %v927 = vmul.f32 %v905, %v915
      %v928 = vmul.f32 %v906, %v915
      %v929 = vmul.f32 %v907, %v915
      %v930 = vmul.f32 %v908, %v915
      %v931 = vmul.f32 %v909, %v915
      %v932 = vmul.f32 %v910, %v915
      %v934 = vlaneseq
      %v935 = vshrl.u32 %v934, 7
      %v936 = vsub.s32 0, %v935
      %v937 = vrot.slane %v700, %v936
      %v939 = vadd.f32 %v917, %v937
      %v940 = vadd.f32 %v918, %v937
      %v941 = vadd.f32 %v919, %v937
      %v942 = vadd.f32 %v920, %v937
      %v943 = vadd.f32 %v921, %v937
      %v944 = vadd.f32 %v922, %v937
      %v945 = vadd.f32 %v923, %v937
      %v946 = vadd.f32 %v924, %v937
      %v947 = vadd.f32 %v925, %v937
      %v948 = vadd.f32 %v926, %v937
      %v949 = vadd.f32 %v927, %v937
      %v950 = vadd.f32 %v928, %v937
      %v951 = vadd.f32 %v929, %v937
      %v952 = vadd.f32 %v930, %v937
      %v953 = vadd.f32 %v931, %v937
      %v954 = vadd.f32 %v932, %v937
      %v955 = vpack.c.bf16 %v940, %v939
      %v956 = vpack.c.bf16 %v942, %v941
      %v957 = vpack.c.bf16 %v944, %v943
      %v958 = vpack.c.bf16 %v946, %v945
      %v959 = vpack.c.bf16 %v948, %v947
      %v960 = vpack.c.bf16 %v950, %v949
      %v961 = vpack.c.bf16 %v952, %v951
      %v962 = vpack.c.bf16 %v954, %v953
      %v963 = vld [vmem:[%s606] sm:$0xf]
      %v964 = vld [vmem:[%s606 + $0x4] sm:$0xf]
      %v965 = vld [vmem:[%s606 + $0x8] sm:$0xf]
      %v966 = vld [vmem:[%s606 + $0xc] sm:$0xf]
      %v967 = vld [vmem:[%s609] sm:$0x1]
      %v969 = vlaneseq
      %v970 = vshrl.u32 %v969, 7
      %v971 = vsub.s32 0, %v970
      %v972 = vrot.slane %v967, %v971
      %v978 = vunpack.c.l.b16 %v963
      %v979 = vunpack.c.l.b16 %v964
      %v980 = vunpack.c.l.b16 %v965
      %v981 = vunpack.c.l.b16 %v966
      %v982 = vpack.c.b16 %v979, %v978
      %v983 = vpack.c.b16 %v981, %v980
      %v987 = vsel %vm701, %v955, 0
      %v990 = vsel %vm701, %v956, 0
      %v993 = vsel %vm701, %v957, 0
      %v996 = vsel %vm701, %v958, 0
      %v999 = vsel %vm701, %v959, 0
      %v1002 = vsel %vm701, %v960, 0
      %v1005 = vsel %vm701, %v961, 0
      %v1008 = vsel %vm701, %v962, 0
      %1010 = vmatprep.subr.bf16.mxu0 0
      %1011 = vmatpush1.bf16.msra.mxu0 %v982
      %1012 = vmatprep.subr.bf16.mxu0 0
      %1013 = vmatpush1.bf16.msra.mxu0 %v983
      %1014 = vmatprep.subr.bf16.mxu0 0
      %1015 = vmatpush1.bf16.msra.mxu0 0
      %1016 = vmatprep.subr.bf16.mxu0 0
      %1017 = vmatpush1.bf16.msra.mxu0 0
      %1018 = vmatprep.subr.bf16.mxu0 0
      %1019 = vmatpush1.bf16.msra.mxu0 0
      %1020 = vmatprep.subr.bf16.mxu0 0
      %1021 = vmatpush1.bf16.msra.mxu0 0
      %1022 = vmatprep.subr.bf16.mxu0 0
      %1023 = vmatpush1.bf16.msra.mxu0 0
      %1024 = vmatprep.subr.bf16.mxu0 0
      %1025 = vmatpush1.bf16.msra.mxu0 0
      %1026 = vmatprep.subr.bf16.mxu0 0
      %1027 = vmatpush1.bf16.msra.mxu0 0
      %1028 = vmatprep.subr.bf16.mxu0 0
      %1029 = vmatpush1.bf16.msra.mxu0 0
      %1030 = vmatprep.subr.bf16.mxu0 0
      %1031 = vmatpush1.bf16.msra.mxu0 0
      %1032 = vmatprep.subr.bf16.mxu0 0
      %1033 = vmatpush1.bf16.msra.mxu0 0
      %1034 = vmatprep.subr.bf16.mxu0 0
      %1035 = vmatpush1.bf16.msra.mxu0 0
      %1036 = vmatprep.subr.bf16.mxu0 0
      %1037 = vmatpush1.bf16.msra.mxu0 0
      %1038 = vmatprep.subr.bf16.mxu0 0
      %1039 = vmatpush1.bf16.msra.mxu0 0
      %1040 = vmatprep.subr.bf16.mxu0 0
      %1041 = vmatpush1.bf16.msra.mxu0 0
      %1042 = vmatprep.mubr.bf16.mxu0 0
      %1043 = vmatmul.mubr.bf16.gmra.mrb[0].mxu0 %v987
      %v1044 = vpop.f32.mrb[0].mxu0
      %v1045 = vadd.f32 %v972, %v1044
      %v1046 = vpop.f32.mrb[0].mxu0
      %v1047 = vpop.f32.mrb[0].mxu0
      %v1048 = vadd.f32 %v972, %v1047
      %v1049 = vpop.f32.mrb[0].mxu0
      %1050 = vmatprep.mubr.bf16.mxu0 0
      %1051 = vmatmul.mubr.bf16.gmra.mrb[0].mxu0 %v990
      %v1052 = vpop.f32.mrb[0].mxu0
      %v1053 = vadd.f32 %v972, %v1052
      %v1054 = vpop.f32.mrb[0].mxu0
      %v1055 = vpop.f32.mrb[0].mxu0
      %v1056 = vadd.f32 %v972, %v1055
      %v1057 = vpop.f32.mrb[0].mxu0
      %1058 = vmatprep.mubr.bf16.mxu0 0
      %1059 = vmatmul.mubr.bf16.gmra.mrb[0].mxu0 %v993
      %v1060 = vpop.f32.mrb[0].mxu0
      %v1061 = vadd.f32 %v972, %v1060
      %v1062 = vpop.f32.mrb[0].mxu0
      %v1063 = vpop.f32.mrb[0].mxu0
      %v1064 = vadd.f32 %v972, %v1063
      %v1065 = vpop.f32.mrb[0].mxu0
      %1066 = vmatprep.mubr.bf16.mxu0 0
      %1067 = vmatmul.mubr.bf16.gmra.mrb[0].mxu0 %v996
      %v1068 = vpop.f32.mrb[0].mxu0
      %v1069 = vadd.f32 %v972, %v1068
      %v1070 = vpop.f32.mrb[0].mxu0
      %v1071 = vpop.f32.mrb[0].mxu0
      %v1072 = vadd.f32 %v972, %v1071
      %v1073 = vpop.f32.mrb[0].mxu0
      %1074 = vmatprep.mubr.bf16.mxu0 0
      %1075 = vmatmul.mubr.bf16.gmra.mrb[0].mxu0 %v999
      %v1076 = vpop.f32.mrb[0].mxu0
      %v1077 = vadd.f32 %v972, %v1076
      %v1078 = vpop.f32.mrb[0].mxu0
      %v1079 = vpop.f32.mrb[0].mxu0
      %v1080 = vadd.f32 %v972, %v1079
      %v1081 = vpop.f32.mrb[0].mxu0
      %1082 = vmatprep.mubr.bf16.mxu0 0
      %1083 = vmatmul.mubr.bf16.gmra.mrb[0].mxu0 %v1002
      %v1084 = vpop.f32.mrb[0].mxu0
      %v1085 = vadd.f32 %v972, %v1084
      %v1086 = vpop.f32.mrb[0].mxu0
      %v1087 = vpop.f32.mrb[0].mxu0
      %v1088 = vadd.f32 %v972, %v1087
      %v1089 = vpop.f32.mrb[0].mxu0
      %1090 = vmatprep.mubr.bf16.mxu0 0
      %1091 = vmatmul.mubr.bf16.gmra.mrb[0].mxu0 %v1005
      %v1092 = vpop.f32.mrb[0].mxu0
      %v1093 = vadd.f32 %v972, %v1092
      %v1094 = vpop.f32.mrb[0].mxu0
      %v1095 = vpop.f32.mrb[0].mxu0
      %v1096 = vadd.f32 %v972, %v1095
      %v1097 = vpop.f32.mrb[0].mxu0
      %1098 = vmatprep.mubr.bf16.mxu0 0
      %1099 = vmatmul.mubr.bf16.gmra.mrb[0].mxu0 %v1008
      %v1100 = vpop.f32.mrb[0].mxu0
      %v1101 = vadd.f32 %v972, %v1100
      %v1102 = vpop.f32.mrb[0].mxu0
      %v1103 = vpop.f32.mrb[0].mxu0
      %v1104 = vadd.f32 %v972, %v1103
      %v1105 = vpop.f32.mrb[0].mxu0
      %1106 = vdwg.mxu0
      %v1107 = vpack.c.bf16 %v1048, %v1045
      %v1108 = vpack.c.bf16 %v1056, %v1053
      %v1109 = vpack.c.bf16 %v1064, %v1061
      %v1110 = vpack.c.bf16 %v1072, %v1069
      %v1111 = vpack.c.bf16 %v1080, %v1077
      %v1112 = vpack.c.bf16 %v1088, %v1085
      %v1113 = vpack.c.bf16 %v1096, %v1093
      %v1114 = vpack.c.bf16 %v1104, %v1101
      %v1115 = vlaneseq
      %v1116 = vand.u32 %v1115, 127
      %vm1117 = vcmp.lt.s32.totalorder %v1116, 8
      %v1118 = vsel %vm1117, 0.0, -1e+30
      %1127 = vrot.lane.b32.xlu0 %v1107, 96
      %v1128 = vpop.permute.xlu0 %1127
      %1129 = vrot.lane.b32.xlu0 %v1108, 96
      %v1130 = vpop.permute.xlu0 %1129
      %1131 = vrot.lane.b32.xlu0 %v1109, 96
      %v1132 = vpop.permute.xlu0 %1131
      %1133 = vrot.lane.b32.xlu0 %v1110, 96
      %v1134 = vpop.permute.xlu0 %1133
      %1135 = vrot.lane.b32.xlu0 %v1111, 96
      %v1136 = vpop.permute.xlu0 %1135
      %1137 = vrot.lane.b32.xlu0 %v1112, 96
      %v1138 = vpop.permute.xlu0 %1137
      %1139 = vrot.lane.b32.xlu0 %v1113, 96
      %v1140 = vpop.permute.xlu0 %1139
      %1141 = vrot.lane.b32.xlu0 %v1114, 96
      %v1142 = vpop.permute.xlu0 %1141
      %vm1143 = vcmask 64512
      %v1145 = vsel %vm1143, %v1107, 0
      %v1148 = vsel %vm1143, %v1108, 0
      %v1151 = vsel %vm1143, %v1109, 0
      %v1154 = vsel %vm1143, %v1110, 0
      %v1157 = vsel %vm1143, %v1111, 0
      %v1160 = vsel %vm1143, %v1112, 0
      %v1163 = vsel %vm1143, %v1113, 0
      %v1166 = vsel %vm1143, %v1114, 0
      %v1169 = vsel %vm1143, %v1128, 0
      %v1172 = vsel %vm1143, %v1130, 0
      %v1175 = vsel %vm1143, %v1132, 0
      %v1178 = vsel %vm1143, %v1134, 0
      %v1181 = vsel %vm1143, %v1136, 0
      %v1184 = vsel %vm1143, %v1138, 0
      %v1187 = vsel %vm1143, %v1140, 0
      %v1190 = vsel %vm1143, %v1142, 0
      %1192 = vmatprep.subr.bf16.mxu0 0
      %1193 = vmatpush1.bf16.xpose.msra.mxu0 %v1169
      %1194 = vmatprep.subr.bf16.mxu0 0
      %1195 = vmatpush1.bf16.xpose.msra.mxu0 %v1172
      %1196 = vmatprep.subr.bf16.mxu0 0
      %1197 = vmatpush1.bf16.xpose.msra.mxu0 %v1175
      %1198 = vmatprep.subr.bf16.mxu0 0
      %1199 = vmatpush1.bf16.xpose.msra.mxu0 %v1178
      %1200 = vmatprep.subr.bf16.mxu0 0
      %1201 = vmatpush1.bf16.xpose.msra.mxu0 %v1181
      %1202 = vmatprep.subr.bf16.mxu0 0
      %1203 = vmatpush1.bf16.xpose.msra.mxu0 %v1184
      %1204 = vmatprep.subr.bf16.mxu0 0
      %1205 = vmatpush1.bf16.xpose.msra.mxu0 %v1187
      %1206 = vmatprep.subr.bf16.mxu0 0
      %1207 = vmatpush1.bf16.xpose.msra.mxu0 %v1190
      %1208 = vmatprep.subr.bf16.mxu0 0
      %1209 = vmatpush1.bf16.xpose.msra.mxu0 0
      %1210 = vmatprep.subr.bf16.mxu0 0
      %1211 = vmatpush1.bf16.xpose.msra.mxu0 0
      %1212 = vmatprep.subr.bf16.mxu0 0
      %1213 = vmatpush1.bf16.xpose.msra.mxu0 0
      %1214 = vmatprep.subr.bf16.mxu0 0
      %1215 = vmatpush1.bf16.xpose.msra.mxu0 0
      %1216 = vmatprep.subr.bf16.mxu0 0
      %1217 = vmatpush1.bf16.xpose.msra.mxu0 0
      %1218 = vmatprep.subr.bf16.mxu0 0
      %1219 = vmatpush1.bf16.xpose.msra.mxu0 0
      %1220 = vmatprep.subr.bf16.mxu0 0
      %1221 = vmatpush1.bf16.xpose.msra.mxu0 0
      %1222 = vmatprep.subr.bf16.mxu0 0
      %1223 = vmatpush1.bf16.xpose.msra.mxu0 0
      %1224 = vmatprep.mubr.bf16.mxu0 0
      %1225 = vmatmul.mubr.bf16.gmra.mrb[0].mxu0 %v1145
      %v1226 = vpop.f32.mrb[0].mxu0
      %v1227 = vadd.f32 %v1118, %v1226
      %v1228 = vpop.f32.mrb[0].mxu0
      %v1229 = vpop.f32.mrb[0].mxu0
      %v1230 = vadd.f32 %v1118, %v1229
      %v1231 = vpop.f32.mrb[0].mxu0
      %1232 = vmatprep.mubr.bf16.mxu0 0
      %1233 = vmatmul.mubr.bf16.gmra.mrb[0].mxu0 %v1148
      %v1234 = vpop.f32.mrb[0].mxu0
      %v1235 = vadd.f32 %v1118, %v1234
      %v1236 = vpop.f32.mrb[0].mxu0
      %v1237 = vpop.f32.mrb[0].mxu0
      %v1238 = vadd.f32 %v1118, %v1237
      %v1239 = vpop.f32.mrb[0].mxu0
      %1240 = vmatprep.mubr.bf16.mxu0 0
      %1241 = vmatmul.mubr.bf16.gmra.mrb[0].mxu0 %v1151
      %v1242 = vpop.f32.mrb[0].mxu0
      %v1243 = vadd.f32 %v1118, %v1242
      %v1244 = vpop.f32.mrb[0].mxu0
      %v1245 = vpop.f32.mrb[0].mxu0
      %v1246 = vadd.f32 %v1118, %v1245
      %v1247 = vpop.f32.mrb[0].mxu0
      %1248 = vmatprep.mubr.bf16.mxu0 0
      %1249 = vmatmul.mubr.bf16.gmra.mrb[0].mxu0 %v1154
      %v1250 = vpop.f32.mrb[0].mxu0
      %v1251 = vadd.f32 %v1118, %v1250
      %v1252 = vpop.f32.mrb[0].mxu0
      %v1253 = vpop.f32.mrb[0].mxu0
      %v1254 = vadd.f32 %v1118, %v1253
      %v1255 = vpop.f32.mrb[0].mxu0
      %1256 = vmatprep.mubr.bf16.mxu0 0
      %1257 = vmatmul.mubr.bf16.gmra.mrb[0].mxu0 %v1157
      %v1258 = vpop.f32.mrb[0].mxu0
      %v1259 = vadd.f32 %v1118, %v1258
      %v1260 = vpop.f32.mrb[0].mxu0
      %v1261 = vpop.f32.mrb[0].mxu0
      %v1262 = vadd.f32 %v1118, %v1261
      %v1263 = vpop.f32.mrb[0].mxu0
      %1264 = vmatprep.mubr.bf16.mxu0 0
      %1265 = vmatmul.mubr.bf16.gmra.mrb[0].mxu0 %v1160
      %v1266 = vpop.f32.mrb[0].mxu0
      %v1267 = vadd.f32 %v1118, %v1266
      %v1268 = vpop.f32.mrb[0].mxu0
      %v1269 = vpop.f32.mrb[0].mxu0
      %v1270 = vadd.f32 %v1118, %v1269
      %v1271 = vpop.f32.mrb[0].mxu0
      %1272 = vmatprep.mubr.bf16.mxu0 0
      %1273 = vmatmul.mubr.bf16.gmra.mrb[0].mxu0 %v1163
      %v1274 = vpop.f32.mrb[0].mxu0
      %v1275 = vadd.f32 %v1118, %v1274
      %v1276 = vpop.f32.mrb[0].mxu0
      %v1277 = vpop.f32.mrb[0].mxu0
      %v1278 = vadd.f32 %v1118, %v1277
      %v1279 = vpop.f32.mrb[0].mxu0
      %1280 = vmatprep.mubr.bf16.mxu0 0
      %1281 = vmatmul.mubr.bf16.gmra.mrb[0].mxu0 %v1166
      %v1282 = vpop.f32.mrb[0].mxu0
      %v1283 = vadd.f32 %v1118, %v1282
      %v1284 = vpop.f32.mrb[0].mxu0
      %v1285 = vpop.f32.mrb[0].mxu0
      %v1286 = vadd.f32 %v1118, %v1285
      %v1287 = vpop.f32.mrb[0].mxu0
      %1288 = vdwg.mxu0
      %1289 = vmax.xlane.f32.xlu0 %v1227
      %v1290 = vpop.xlane.xlu0 %1289
      %1291 = vmax.xlane.f32.xlu0 %v1230
      %v1292 = vpop.xlane.xlu0 %1291
      %1293 = vmax.xlane.f32.xlu0 %v1235
      %v1294 = vpop.xlane.xlu0 %1293
      %1295 = vmax.xlane.f32.xlu0 %v1238
      %v1296 = vpop.xlane.xlu0 %1295
      %1297 = vmax.xlane.f32.xlu0 %v1243
      %v1298 = vpop.xlane.xlu0 %1297
      %1299 = vmax.xlane.f32.xlu0 %v1246
      %v1300 = vpop.xlane.xlu0 %1299
      %1301 = vmax.xlane.f32.xlu0 %v1251
      %v1302 = vpop.xlane.xlu0 %1301
      %1303 = vmax.xlane.f32.xlu0 %v1254
      %v1304 = vpop.xlane.xlu0 %1303
      %1305 = vmax.xlane.f32.xlu0 %v1259
      %v1306 = vpop.xlane.xlu0 %1305
      %1307 = vmax.xlane.f32.xlu0 %v1262
      %v1308 = vpop.xlane.xlu0 %1307
      %1309 = vmax.xlane.f32.xlu0 %v1267
      %v1310 = vpop.xlane.xlu0 %1309
      %1311 = vmax.xlane.f32.xlu0 %v1270
      %v1312 = vpop.xlane.xlu0 %1311
      %1313 = vmax.xlane.f32.xlu0 %v1275
      %v1314 = vpop.xlane.xlu0 %1313
      %1315 = vmax.xlane.f32.xlu0 %v1278
      %v1316 = vpop.xlane.xlu0 %1315
      %1317 = vmax.xlane.f32.xlu0 %v1283
      %v1318 = vpop.xlane.xlu0 %1317
      %1319 = vmax.xlane.f32.xlu0 %v1286
      %v1320 = vpop.xlane.xlu0 %1319
      %v1321 = vsub.f32 %v1227, %v1290
      %v1322 = vsub.f32 %v1230, %v1292
      %v1323 = vsub.f32 %v1235, %v1294
      %v1324 = vsub.f32 %v1238, %v1296
      %v1325 = vsub.f32 %v1243, %v1298
      %v1326 = vsub.f32 %v1246, %v1300
      %v1327 = vsub.f32 %v1251, %v1302
      %v1328 = vsub.f32 %v1254, %v1304
      %v1329 = vsub.f32 %v1259, %v1306
      %v1330 = vsub.f32 %v1262, %v1308
      %v1331 = vsub.f32 %v1267, %v1310
      %v1332 = vsub.f32 %v1270, %v1312
      %v1333 = vsub.f32 %v1275, %v1314
      %v1334 = vsub.f32 %v1278, %v1316
      %v1335 = vsub.f32 %v1283, %v1318
      %v1336 = vsub.f32 %v1286, %v1320
      %v1337 = vmul.f32 %v1321, 1.442695
      %v1338 = vpow.pop %v1337
      %v1339 = vmul.f32 %v1322, 1.442695
      %v1340 = vpow.pop %v1339
      %v1341 = vmul.f32 %v1323, 1.442695
      %v1342 = vpow.pop %v1341
      %v1343 = vmul.f32 %v1324, 1.442695
      %v1344 = vpow.pop %v1343
      %v1345 = vmul.f32 %v1325, 1.442695
      %v1346 = vpow.pop %v1345
      %v1347 = vmul.f32 %v1326, 1.442695
      %v1348 = vpow.pop %v1347
      %v1349 = vmul.f32 %v1327, 1.442695
      %v1350 = vpow.pop %v1349
      %v1351 = vmul.f32 %v1328, 1.442695
      %v1352 = vpow.pop %v1351
      %v1353 = vmul.f32 %v1329, 1.442695
      %v1354 = vpow.pop %v1353
      %v1355 = vmul.f32 %v1330, 1.442695
      %v1356 = vpow.pop %v1355
      %v1357 = vmul.f32 %v1331, 1.442695
      %v1358 = vpow.pop %v1357
      %v1359 = vmul.f32 %v1332, 1.442695
      %v1360 = vpow.pop %v1359
      %v1361 = vmul.f32 %v1333, 1.442695
      %v1362 = vpow.pop %v1361
      %v1363 = vmul.f32 %v1334, 1.442695
      %v1364 = vpow.pop %v1363
      %v1365 = vmul.f32 %v1335, 1.442695
      %v1366 = vpow.pop %v1365
      %v1367 = vmul.f32 %v1336, 1.442695
      %v1368 = vpow.pop %v1367
      %1369 = vadd.xlane.f32.xlu0 %v1338
      %v1370 = vpop.xlane.xlu0 %1369
      %1371 = vadd.xlane.f32.xlu0 %v1340
      %v1372 = vpop.xlane.xlu0 %1371
      %1373 = vadd.xlane.f32.xlu0 %v1342
      %v1374 = vpop.xlane.xlu0 %1373
      %1375 = vadd.xlane.f32.xlu0 %v1344
      %v1376 = vpop.xlane.xlu0 %1375
      %1377 = vadd.xlane.f32.xlu0 %v1346
      %v1378 = vpop.xlane.xlu0 %1377
      %1379 = vadd.xlane.f32.xlu0 %v1348
      %v1380 = vpop.xlane.xlu0 %1379
      %1381 = vadd.xlane.f32.xlu0 %v1350
      %v1382 = vpop.xlane.xlu0 %1381
      %1383 = vadd.xlane.f32.xlu0 %v1352
      %v1384 = vpop.xlane.xlu0 %1383
      %1385 = vadd.xlane.f32.xlu0 %v1354
      %v1386 = vpop.xlane.xlu0 %1385
      %1387 = vadd.xlane.f32.xlu0 %v1356
      %v1388 = vpop.xlane.xlu0 %1387
      %1389 = vadd.xlane.f32.xlu0 %v1358
      %v1390 = vpop.xlane.xlu0 %1389
      %1391 = vadd.xlane.f32.xlu0 %v1360
      %v1392 = vpop.xlane.xlu0 %1391
      %1393 = vadd.xlane.f32.xlu0 %v1362
      %v1394 = vpop.xlane.xlu0 %1393
      %1395 = vadd.xlane.f32.xlu0 %v1364
      %v1396 = vpop.xlane.xlu0 %1395
      %1397 = vadd.xlane.f32.xlu0 %v1366
      %v1398 = vpop.xlane.xlu0 %1397
      %1399 = vadd.xlane.f32.xlu0 %v1368
      %v1400 = vpop.xlane.xlu0 %1399
      %v1401 = vrcp.pop %v1370
      %v1402 = vrcp.pop %v1372
      %v1403 = vrcp.pop %v1374
      %v1404 = vrcp.pop %v1376
      %v1405 = vrcp.pop %v1378
      %v1406 = vrcp.pop %v1380
      %v1407 = vrcp.pop %v1382
      %v1408 = vrcp.pop %v1384
      %v1409 = vrcp.pop %v1386
      %v1410 = vrcp.pop %v1388
      %v1411 = vrcp.pop %v1390
      %v1412 = vrcp.pop %v1392
      %v1413 = vrcp.pop %v1394
      %v1414 = vrcp.pop %v1396
      %v1415 = vrcp.pop %v1398
      %v1416 = vrcp.pop %v1400
      %v1417 = vmul.f32 %v1338, %v1401
      %v1418 = vmul.f32 %v1340, %v1402
      %v1419 = vmul.f32 %v1342, %v1403
      %v1420 = vmul.f32 %v1344, %v1404
      %v1421 = vmul.f32 %v1346, %v1405
      %v1422 = vmul.f32 %v1348, %v1406
      %v1423 = vmul.f32 %v1350, %v1407
      %v1424 = vmul.f32 %v1352, %v1408
      %v1425 = vmul.f32 %v1354, %v1409
      %v1426 = vmul.f32 %v1356, %v1410
      %v1427 = vmul.f32 %v1358, %v1411
      %v1428 = vmul.f32 %v1360, %v1412
      %v1429 = vmul.f32 %v1362, %v1413
      %v1430 = vmul.f32 %v1364, %v1414
      %v1431 = vmul.f32 %v1366, %v1415
      %v1432 = vmul.f32 %v1368, %v1416
      %v1433 = vpack.c.bf16 %v1418, %v1417
      %v1434 = vpack.c.bf16 %v1420, %v1419
      %v1435 = vpack.c.bf16 %v1422, %v1421
      %v1436 = vpack.c.bf16 %v1424, %v1423
      %v1437 = vpack.c.bf16 %v1426, %v1425
      %v1438 = vpack.c.bf16 %v1428, %v1427
      %v1439 = vpack.c.bf16 %v1430, %v1429
      %v1440 = vpack.c.bf16 %v1432, %v1431
      %1441 = vrot.lane.b32.xlu0 %v1107, 64
      %v1442 = vpop.permute.xlu0 %1441
      %1443 = vrot.lane.b32.xlu0 %v1108, 64
      %v1444 = vpop.permute.xlu0 %1443
      %1445 = vrot.lane.b32.xlu0 %v1109, 64
      %v1446 = vpop.permute.xlu0 %1445
      %1447 = vrot.lane.b32.xlu0 %v1110, 64
      %v1448 = vpop.permute.xlu0 %1447
      %1449 = vrot.lane.b32.xlu0 %v1111, 64
      %v1450 = vpop.permute.xlu0 %1449
      %1451 = vrot.lane.b32.xlu0 %v1112, 64
      %v1452 = vpop.permute.xlu0 %1451
      %1453 = vrot.lane.b32.xlu0 %v1113, 64
      %v1454 = vpop.permute.xlu0 %1453
      %1455 = vrot.lane.b32.xlu0 %v1114, 64
      %v1456 = vpop.permute.xlu0 %1455
      %1465 = vmatprep.subr.bf16.mxu0 0
      %1466 = vmatpush1.bf16.msra.mxu0 %v1442
      %1467 = vmatprep.subr.bf16.mxu0 0
      %1468 = vmatpush1.bf16.msra.mxu0 %v1444
      %1469 = vmatprep.subr.bf16.mxu0 0
      %1470 = vmatpush1.bf16.msra.mxu0 %v1446
      %1471 = vmatprep.subr.bf16.mxu0 0
      %1472 = vmatpush1.bf16.msra.mxu0 %v1448
      %1473 = vmatprep.subr.bf16.mxu0 0
      %1474 = vmatpush1.bf16.msra.mxu0 %v1450
      %1475 = vmatprep.subr.bf16.mxu0 0
      %1476 = vmatpush1.bf16.msra.mxu0 %v1452
      %1477 = vmatprep.subr.bf16.mxu0 0
      %1478 = vmatpush1.bf16.msra.mxu0 %v1454
      %1479 = vmatprep.subr.bf16.mxu0 0
      %1480 = vmatpush1.bf16.msra.mxu0 %v1456
      %1481 = vmatprep.subr.bf16.mxu0 0
      %1482 = vmatpush1.bf16.msra.mxu0 0
      %1483 = vmatprep.subr.bf16.mxu0 0
      %1484 = vmatpush1.bf16.msra.mxu0 0
      %1485 = vmatprep.subr.bf16.mxu0 0
      %1486 = vmatpush1.bf16.msra.mxu0 0
      %1487 = vmatprep.subr.bf16.mxu0 0
      %1488 = vmatpush1.bf16.msra.mxu0 0
      %1489 = vmatprep.subr.bf16.mxu0 0
      %1490 = vmatpush1.bf16.msra.mxu0 0
      %1491 = vmatprep.subr.bf16.mxu0 0
      %1492 = vmatpush1.bf16.msra.mxu0 0
      %1493 = vmatprep.subr.bf16.mxu0 0
      %1494 = vmatpush1.bf16.msra.mxu0 0
      %1495 = vmatprep.subr.bf16.mxu0 0
      %1496 = vmatpush1.bf16.msra.mxu0 0
      %1497 = vmatprep.mubr.bf16.mxu0 0
      %1498 = vmatmul.mubr.bf16.gmra.mrb[0].mxu0 %v1433
      %v1499 = vpop.f32.mrb[0].mxu0
      %v1500 = vadd.f32 0.0, %v1499
      %v1501 = vpop.f32.mrb[0].mxu0
      %v1502 = vpop.f32.mrb[0].mxu0
      %v1503 = vadd.f32 0.0, %v1502
      %v1504 = vpop.f32.mrb[0].mxu0
      %1505 = vmatprep.mubr.bf16.mxu0 0
      %1506 = vmatmul.mubr.bf16.gmra.mrb[0].mxu0 %v1434
      %v1507 = vpop.f32.mrb[0].mxu0
      %v1508 = vadd.f32 0.0, %v1507
      %v1509 = vpop.f32.mrb[0].mxu0
      %v1510 = vpop.f32.mrb[0].mxu0
      %v1511 = vadd.f32 0.0, %v1510
      %v1512 = vpop.f32.mrb[0].mxu0
      %1513 = vmatprep.mubr.bf16.mxu0 0
      %1514 = vmatmul.mubr.bf16.gmra.mrb[0].mxu0 %v1435
      %v1515 = vpop.f32.mrb[0].mxu0
      %v1516 = vadd.f32 0.0, %v1515
      %v1517 = vpop.f32.mrb[0].mxu0
      %v1518 = vpop.f32.mrb[0].mxu0
      %v1519 = vadd.f32 0.0, %v1518
      %v1520 = vpop.f32.mrb[0].mxu0
      %1521 = vmatprep.mubr.bf16.mxu0 0
      %1522 = vmatmul.mubr.bf16.gmra.mrb[0].mxu0 %v1436
      %v1523 = vpop.f32.mrb[0].mxu0
      %v1524 = vadd.f32 0.0, %v1523
      %v1525 = vpop.f32.mrb[0].mxu0
      %v1526 = vpop.f32.mrb[0].mxu0
      %v1527 = vadd.f32 0.0, %v1526
      %v1528 = vpop.f32.mrb[0].mxu0
      %1529 = vmatprep.mubr.bf16.mxu0 0
      %1530 = vmatmul.mubr.bf16.gmra.mrb[0].mxu0 %v1437
      %v1531 = vpop.f32.mrb[0].mxu0
      %v1532 = vadd.f32 0.0, %v1531
      %v1533 = vpop.f32.mrb[0].mxu0
      %v1534 = vpop.f32.mrb[0].mxu0
      %v1535 = vadd.f32 0.0, %v1534
      %v1536 = vpop.f32.mrb[0].mxu0
      %1537 = vmatprep.mubr.bf16.mxu0 0
      %1538 = vmatmul.mubr.bf16.gmra.mrb[0].mxu0 %v1438
      %v1539 = vpop.f32.mrb[0].mxu0
      %v1540 = vadd.f32 0.0, %v1539
      %v1541 = vpop.f32.mrb[0].mxu0
      %v1542 = vpop.f32.mrb[0].mxu0
      %v1543 = vadd.f32 0.0, %v1542
      %v1544 = vpop.f32.mrb[0].mxu0
      %1545 = vmatprep.mubr.bf16.mxu0 0
      %1546 = vmatmul.mubr.bf16.gmra.mrb[0].mxu0 %v1439
      %v1547 = vpop.f32.mrb[0].mxu0
      %v1548 = vadd.f32 0.0, %v1547
      %v1549 = vpop.f32.mrb[0].mxu0
      %v1550 = vpop.f32.mrb[0].mxu0
      %v1551 = vadd.f32 0.0, %v1550
      %v1552 = vpop.f32.mrb[0].mxu0
      %1553 = vmatprep.mubr.bf16.mxu0 0
      %1554 = vmatmul.mubr.bf16.gmra.mrb[0].mxu0 %v1440
      %v1555 = vpop.f32.mrb[0].mxu0
      %v1556 = vadd.f32 0.0, %v1555
      %v1557 = vpop.f32.mrb[0].mxu0
      %v1558 = vpop.f32.mrb[0].mxu0
      %v1559 = vadd.f32 0.0, %v1558
      %v1560 = vpop.f32.mrb[0].mxu0
      %1561 = vdwg.mxu0
      %1562 = vrot.lane.b32.xlu0 %v1107, 120
      %v1563 = vpop.permute.xlu0 %1562
      %1564 = vrot.lane.b32.xlu0 %v1108, 120
      %v1565 = vpop.permute.xlu0 %1564
      %1566 = vrot.lane.b32.xlu0 %v1109, 120
      %v1567 = vpop.permute.xlu0 %1566
      %1568 = vrot.lane.b32.xlu0 %v1110, 120
      %v1569 = vpop.permute.xlu0 %1568
      %1570 = vrot.lane.b32.xlu0 %v1111, 120
      %v1571 = vpop.permute.xlu0 %1570
      %1572 = vrot.lane.b32.xlu0 %v1112, 120
      %v1573 = vpop.permute.xlu0 %1572
      %1574 = vrot.lane.b32.xlu0 %v1113, 120
      %v1575 = vpop.permute.xlu0 %1574
      %1576 = vrot.lane.b32.xlu0 %v1114, 120
      %v1577 = vpop.permute.xlu0 %1576
      %1578 = vrot.lane.b32.xlu0 %v1107, 88
      %v1579 = vpop.permute.xlu0 %1578
      %1580 = vrot.lane.b32.xlu0 %v1108, 88
      %v1581 = vpop.permute.xlu0 %1580
      %1582 = vrot.lane.b32.xlu0 %v1109, 88
      %v1583 = vpop.permute.xlu0 %1582
      %1584 = vrot.lane.b32.xlu0 %v1110, 88
      %v1585 = vpop.permute.xlu0 %1584
      %1586 = vrot.lane.b32.xlu0 %v1111, 88
      %v1587 = vpop.permute.xlu0 %1586
      %1588 = vrot.lane.b32.xlu0 %v1112, 88
      %v1589 = vpop.permute.xlu0 %1588
      %1590 = vrot.lane.b32.xlu0 %v1113, 88
      %v1591 = vpop.permute.xlu0 %1590
      %1592 = vrot.lane.b32.xlu0 %v1114, 88
      %v1593 = vpop.permute.xlu0 %1592
      %v1595 = vsel %vm1143, %v1563, 0
      %v1598 = vsel %vm1143, %v1565, 0
      %v1601 = vsel %vm1143, %v1567, 0
      %v1604 = vsel %vm1143, %v1569, 0
      %v1607 = vsel %vm1143, %v1571, 0
      %v1610 = vsel %vm1143, %v1573, 0
      %v1613 = vsel %vm1143, %v1575, 0
      %v1616 = vsel %vm1143, %v1577, 0
      %v1619 = vsel %vm1143, %v1579, 0
      %v1622 = vsel %vm1143, %v1581, 0
      %v1625 = vsel %vm1143, %v1583, 0
      %v1628 = vsel %vm1143, %v1585, 0
      %v1631 = vsel %vm1143, %v1587, 0
      %v1634 = vsel %vm1143, %v1589, 0
      %v1637 = vsel %vm1143, %v1591, 0
      %v1640 = vsel %vm1143, %v1593, 0
      %1642 = vmatprep.subr.bf16.mxu0 0
      %1643 = vmatpush1.bf16.xpose.msra.mxu0 %v1619
      %1644 = vmatprep.subr.bf16.mxu0 0
      %1645 = vmatpush1.bf16.xpose.msra.mxu0 %v1622
      %1646 = vmatprep.subr.bf16.mxu0 0
      %1647 = vmatpush1.bf16.xpose.msra.mxu0 %v1625
      %1648 = vmatprep.subr.bf16.mxu0 0
      %1649 = vmatpush1.bf16.xpose.msra.mxu0 %v1628
      %1650 = vmatprep.subr.bf16.mxu0 0
      %1651 = vmatpush1.bf16.xpose.msra.mxu0 %v1631
      %1652 = vmatprep.subr.bf16.mxu0 0
      %1653 = vmatpush1.bf16.xpose.msra.mxu0 %v1634
      %1654 = vmatprep.subr.bf16.mxu0 0
      %1655 = vmatpush1.bf16.xpose.msra.mxu0 %v1637
      %1656 = vmatprep.subr.bf16.mxu0 0
      %1657 = vmatpush1.bf16.xpose.msra.mxu0 %v1640
      %1658 = vmatprep.subr.bf16.mxu0 0
      %1659 = vmatpush1.bf16.xpose.msra.mxu0 0
      %1660 = vmatprep.subr.bf16.mxu0 0
      %1661 = vmatpush1.bf16.xpose.msra.mxu0 0
      %1662 = vmatprep.subr.bf16.mxu0 0
      %1663 = vmatpush1.bf16.xpose.msra.mxu0 0
      %1664 = vmatprep.subr.bf16.mxu0 0
      %1665 = vmatpush1.bf16.xpose.msra.mxu0 0
      %1666 = vmatprep.subr.bf16.mxu0 0
      %1667 = vmatpush1.bf16.xpose.msra.mxu0 0
      %1668 = vmatprep.subr.bf16.mxu0 0
      %1669 = vmatpush1.bf16.xpose.msra.mxu0 0
      %1670 = vmatprep.subr.bf16.mxu0 0
      %1671 = vmatpush1.bf16.xpose.msra.mxu0 0
      %1672 = vmatprep.subr.bf16.mxu0 0
      %1673 = vmatpush1.bf16.xpose.msra.mxu0 0
      %1674 = vmatprep.mubr.bf16.mxu0 0
      %1675 = vmatmul.mubr.bf16.gmra.mrb[0].mxu0 %v1595
      %v1676 = vpop.f32.mrb[0].mxu0
      %v1677 = vadd.f32 %v1118, %v1676
      %v1678 = vpop.f32.mrb[0].mxu0
      %v1679 = vpop.f32.mrb[0].mxu0
      %v1680 = vadd.f32 %v1118, %v1679
      %v1681 = vpop.f32.mrb[0].mxu0
      %1682 = vmatprep.mubr.bf16.mxu0 0
      %1683 = vmatmul.mubr.bf16.gmra.mrb[0].mxu0 %v1598
      %v1684 = vpop.f32.mrb[0].mxu0
      %v1685 = vadd.f32 %v1118, %v1684
      %v1686 = vpop.f32.mrb[0].mxu0
      %v1687 = vpop.f32.mrb[0].mxu0
      %v1688 = vadd.f32 %v1118, %v1687
      %v1689 = vpop.f32.mrb[0].mxu0
      %1690 = vmatprep.mubr.bf16.mxu0 0
      %1691 = vmatmul.mubr.bf16.gmra.mrb[0].mxu0 %v1601
      %v1692 = vpop.f32.mrb[0].mxu0
      %v1693 = vadd.f32 %v1118, %v1692
      %v1694 = vpop.f32.mrb[0].mxu0
      %v1695 = vpop.f32.mrb[0].mxu0
      %v1696 = vadd.f32 %v1118, %v1695
      %v1697 = vpop.f32.mrb[0].mxu0
      %1698 = vmatprep.mubr.bf16.mxu0 0
      %1699 = vmatmul.mubr.bf16.gmra.mrb[0].mxu0 %v1604
      %v1700 = vpop.f32.mrb[0].mxu0
      %v1701 = vadd.f32 %v1118, %v1700
      %v1702 = vpop.f32.mrb[0].mxu0
      %v1703 = vpop.f32.mrb[0].mxu0
      %v1704 = vadd.f32 %v1118, %v1703
      %v1705 = vpop.f32.mrb[0].mxu0
      %1706 = vmatprep.mubr.bf16.mxu0 0
      %1707 = vmatmul.mubr.bf16.gmra.mrb[0].mxu0 %v1607
      %v1708 = vpop.f32.mrb[0].mxu0
      %v1709 = vadd.f32 %v1118, %v1708
      %v1710 = vpop.f32.mrb[0].mxu0
      %v1711 = vpop.f32.mrb[0].mxu0
      %v1712 = vadd.f32 %v1118, %v1711
      %v1713 = vpop.f32.mrb[0].mxu0
      %1714 = vmatprep.mubr.bf16.mxu0 0
      %1715 = vmatmul.mubr.bf16.gmra.mrb[0].mxu0 %v1610
      %v1716 = vpop.f32.mrb[0].mxu0
      %v1717 = vadd.f32 %v1118, %v1716
      %v1718 = vpop.f32.mrb[0].mxu0
      %v1719 = vpop.f32.mrb[0].mxu0
      %v1720 = vadd.f32 %v1118, %v1719
      %v1721 = vpop.f32.mrb[0].mxu0
      %1722 = vmatprep.mubr.bf16.mxu0 0
      %1723 = vmatmul.mubr.bf16.gmra.mrb[0].mxu0 %v1613
      %v1724 = vpop.f32.mrb[0].mxu0
      %v1725 = vadd.f32 %v1118, %v1724
      %v1726 = vpop.f32.mrb[0].mxu0
      %v1727 = vpop.f32.mrb[0].mxu0
      %v1728 = vadd.f32 %v1118, %v1727
      %v1729 = vpop.f32.mrb[0].mxu0
      %1730 = vmatprep.mubr.bf16.mxu0 0
      %1731 = vmatmul.mubr.bf16.gmra.mrb[0].mxu0 %v1616
      %v1732 = vpop.f32.mrb[0].mxu0
      %v1733 = vadd.f32 %v1118, %v1732
      %v1734 = vpop.f32.mrb[0].mxu0
      %v1735 = vpop.f32.mrb[0].mxu0
      %v1736 = vadd.f32 %v1118, %v1735
      %v1737 = vpop.f32.mrb[0].mxu0
      %1738 = vdwg.mxu0
      %1739 = vmax.xlane.f32.xlu0 %v1677
      %v1740 = vpop.xlane.xlu0 %1739
      %1741 = vmax.xlane.f32.xlu0 %v1680
      %v1742 = vpop.xlane.xlu0 %1741
      %1743 = vmax.xlane.f32.xlu0 %v1685
      %v1744 = vpop.xlane.xlu0 %1743
      %1745 = vmax.xlane.f32.xlu0 %v1688
      %v1746 = vpop.xlane.xlu0 %1745
      %1747 = vmax.xlane.f32.xlu0 %v1693
      %v1748 = vpop.xlane.xlu0 %1747
      %1749 = vmax.xlane.f32.xlu0 %v1696
      %v1750 = vpop.xlane.xlu0 %1749
      %1751 = vmax.xlane.f32.xlu0 %v1701
      %v1752 = vpop.xlane.xlu0 %1751
      %1753 = vmax.xlane.f32.xlu0 %v1704
      %v1754 = vpop.xlane.xlu0 %1753
      %1755 = vmax.xlane.f32.xlu0 %v1709
      %v1756 = vpop.xlane.xlu0 %1755
      %1757 = vmax.xlane.f32.xlu0 %v1712
      %v1758 = vpop.xlane.xlu0 %1757
      %1759 = vmax.xlane.f32.xlu0 %v1717
      %v1760 = vpop.xlane.xlu0 %1759
      %1761 = vmax.xlane.f32.xlu0 %v1720
      %v1762 = vpop.xlane.xlu0 %1761
      %1763 = vmax.xlane.f32.xlu0 %v1725
      %v1764 = vpop.xlane.xlu0 %1763
      %1765 = vmax.xlane.f32.xlu0 %v1728
      %v1766 = vpop.xlane.xlu0 %1765
      %1767 = vmax.xlane.f32.xlu0 %v1733
      %v1768 = vpop.xlane.xlu0 %1767
      %1769 = vmax.xlane.f32.xlu0 %v1736
      %v1770 = vpop.xlane.xlu0 %1769
      %v1771 = vsub.f32 %v1677, %v1740
      %v1772 = vsub.f32 %v1680, %v1742
      %v1773 = vsub.f32 %v1685, %v1744
      %v1774 = vsub.f32 %v1688, %v1746
      %v1775 = vsub.f32 %v1693, %v1748
      %v1776 = vsub.f32 %v1696, %v1750
      %v1777 = vsub.f32 %v1701, %v1752
      %v1778 = vsub.f32 %v1704, %v1754
      %v1779 = vsub.f32 %v1709, %v1756
      %v1780 = vsub.f32 %v1712, %v1758
      %v1781 = vsub.f32 %v1717, %v1760
      %v1782 = vsub.f32 %v1720, %v1762
      %v1783 = vsub.f32 %v1725, %v1764
      %v1784 = vsub.f32 %v1728, %v1766
      %v1785 = vsub.f32 %v1733, %v1768
      %v1786 = vsub.f32 %v1736, %v1770
      %v1787 = vmul.f32 %v1771, 1.442695
      %v1788 = vpow.pop %v1787
      %v1789 = vmul.f32 %v1772, 1.442695
      %v1790 = vpow.pop %v1789
      %v1791 = vmul.f32 %v1773, 1.442695
      %v1792 = vpow.pop %v1791
      %v1793 = vmul.f32 %v1774, 1.442695
      %v1794 = vpow.pop %v1793
      %v1795 = vmul.f32 %v1775, 1.442695
      %v1796 = vpow.pop %v1795
      %v1797 = vmul.f32 %v1776, 1.442695
      %v1798 = vpow.pop %v1797
      %v1799 = vmul.f32 %v1777, 1.442695
      %v1800 = vpow.pop %v1799
      %v1801 = vmul.f32 %v1778, 1.442695
      %v1802 = vpow.pop %v1801
      %v1803 = vmul.f32 %v1779, 1.442695
      %v1804 = vpow.pop %v1803
      %v1805 = vmul.f32 %v1780, 1.442695
      %v1806 = vpow.pop %v1805
      %v1807 = vmul.f32 %v1781, 1.442695
      %v1808 = vpow.pop %v1807
      %v1809 = vmul.f32 %v1782, 1.442695
      %v1810 = vpow.pop %v1809
      %v1811 = vmul.f32 %v1783, 1.442695
      %v1812 = vpow.pop %v1811
      %v1813 = vmul.f32 %v1784, 1.442695
      %v1814 = vpow.pop %v1813
      %v1815 = vmul.f32 %v1785, 1.442695
      %v1816 = vpow.pop %v1815
      %v1817 = vmul.f32 %v1786, 1.442695
      %v1818 = vpow.pop %v1817
      %1819 = vadd.xlane.f32.xlu0 %v1788
      %v1820 = vpop.xlane.xlu0 %1819
      %1821 = vadd.xlane.f32.xlu0 %v1790
      %v1822 = vpop.xlane.xlu0 %1821
      %1823 = vadd.xlane.f32.xlu0 %v1792
      %v1824 = vpop.xlane.xlu0 %1823
      %1825 = vadd.xlane.f32.xlu0 %v1794
      %v1826 = vpop.xlane.xlu0 %1825
      %1827 = vadd.xlane.f32.xlu0 %v1796
      %v1828 = vpop.xlane.xlu0 %1827
      %1829 = vadd.xlane.f32.xlu0 %v1798
      %v1830 = vpop.xlane.xlu0 %1829
      %1831 = vadd.xlane.f32.xlu0 %v1800
      %v1832 = vpop.xlane.xlu0 %1831
      %1833 = vadd.xlane.f32.xlu0 %v1802
      %v1834 = vpop.xlane.xlu0 %1833
      %1835 = vadd.xlane.f32.xlu0 %v1804
      %v1836 = vpop.xlane.xlu0 %1835
      %1837 = vadd.xlane.f32.xlu0 %v1806
      %v1838 = vpop.xlane.xlu0 %1837
      %1839 = vadd.xlane.f32.xlu0 %v1808
      %v1840 = vpop.xlane.xlu0 %1839
      %1841 = vadd.xlane.f32.xlu0 %v1810
      %v1842 = vpop.xlane.xlu0 %1841
      %1843 = vadd.xlane.f32.xlu0 %v1812
      %v1844 = vpop.xlane.xlu0 %1843
      %1845 = vadd.xlane.f32.xlu0 %v1814
      %v1846 = vpop.xlane.xlu0 %1845
      %1847 = vadd.xlane.f32.xlu0 %v1816
      %v1848 = vpop.xlane.xlu0 %1847
      %1849 = vadd.xlane.f32.xlu0 %v1818
      %v1850 = vpop.xlane.xlu0 %1849
      %v1851 = vrcp.pop %v1820
      %v1852 = vrcp.pop %v1822
      %v1853 = vrcp.pop %v1824
      %v1854 = vrcp.pop %v1826
      %v1855 = vrcp.pop %v1828
      %v1856 = vrcp.pop %v1830
      %v1857 = vrcp.pop %v1832
      %v1858 = vrcp.pop %v1834
      %v1859 = vrcp.pop %v1836
      %v1860 = vrcp.pop %v1838
      %v1861 = vrcp.pop %v1840
      %v1862 = vrcp.pop %v1842
      %v1863 = vrcp.pop %v1844
      %v1864 = vrcp.pop %v1846
      %v1865 = vrcp.pop %v1848
      %v1866 = vrcp.pop %v1850
      %v1867 = vmul.f32 %v1788, %v1851
      %v1868 = vmul.f32 %v1790, %v1852
      %v1869 = vmul.f32 %v1792, %v1853
      %v1870 = vmul.f32 %v1794, %v1854
      %v1871 = vmul.f32 %v1796, %v1855
      %v1872 = vmul.f32 %v1798, %v1856
      %v1873 = vmul.f32 %v1800, %v1857
      %v1874 = vmul.f32 %v1802, %v1858
      %v1875 = vmul.f32 %v1804, %v1859
      %v1876 = vmul.f32 %v1806, %v1860
      %v1877 = vmul.f32 %v1808, %v1861
      %v1878 = vmul.f32 %v1810, %v1862
      %v1879 = vmul.f32 %v1812, %v1863
      %v1880 = vmul.f32 %v1814, %v1864
      %v1881 = vmul.f32 %v1816, %v1865
      %v1882 = vmul.f32 %v1818, %v1866
      %v1883 = vpack.c.bf16 %v1868, %v1867
      %v1884 = vpack.c.bf16 %v1870, %v1869
      %v1885 = vpack.c.bf16 %v1872, %v1871
      %v1886 = vpack.c.bf16 %v1874, %v1873
      %v1887 = vpack.c.bf16 %v1876, %v1875
      %v1888 = vpack.c.bf16 %v1878, %v1877
      %v1889 = vpack.c.bf16 %v1880, %v1879
      %v1890 = vpack.c.bf16 %v1882, %v1881
      %1891 = vrot.lane.b32.xlu0 %v1107, 56
      %v1892 = vpop.permute.xlu0 %1891
      %1893 = vrot.lane.b32.xlu0 %v1108, 56
      %v1894 = vpop.permute.xlu0 %1893
      %1895 = vrot.lane.b32.xlu0 %v1109, 56
      %v1896 = vpop.permute.xlu0 %1895
      %1897 = vrot.lane.b32.xlu0 %v1110, 56
      %v1898 = vpop.permute.xlu0 %1897
      %1899 = vrot.lane.b32.xlu0 %v1111, 56
      %v1900 = vpop.permute.xlu0 %1899
      %1901 = vrot.lane.b32.xlu0 %v1112, 56
      %v1902 = vpop.permute.xlu0 %1901
      %1903 = vrot.lane.b32.xlu0 %v1113, 56
      %v1904 = vpop.permute.xlu0 %1903
      %1905 = vrot.lane.b32.xlu0 %v1114, 56
      %v1906 = vpop.permute.xlu0 %1905
      %1915 = vmatprep.subr.bf16.mxu0 0
      %1916 = vmatpush1.bf16.msra.mxu0 %v1892
      %1917 = vmatprep.subr.bf16.mxu0 0
      %1918 = vmatpush1.bf16.msra.mxu0 %v1894
      %1919 = vmatprep.subr.bf16.mxu0 0
      %1920 = vmatpush1.bf16.msra.mxu0 %v1896
      %1921 = vmatprep.subr.bf16.mxu0 0
      %1922 = vmatpush1.bf16.msra.mxu0 %v1898
      %1923 = vmatprep.subr.bf16.mxu0 0
      %1924 = vmatpush1.bf16.msra.mxu0 %v1900
      %1925 = vmatprep.subr.bf16.mxu0 0
      %1926 = vmatpush1.bf16.msra.mxu0 %v1902
      %1927 = vmatprep.subr.bf16.mxu0 0
      %1928 = vmatpush1.bf16.msra.mxu0 %v1904
      %1929 = vmatprep.subr.bf16.mxu0 0
      %1930 = vmatpush1.bf16.msra.mxu0 %v1906
      %1931 = vmatprep.subr.bf16.mxu0 0
      %1932 = vmatpush1.bf16.msra.mxu0 0
      %1933 = vmatprep.subr.bf16.mxu0 0
      %1934 = vmatpush1.bf16.msra.mxu0 0
      %1935 = vmatprep.subr.bf16.mxu0 0
      %1936 = vmatpush1.bf16.msra.mxu0 0
      %1937 = vmatprep.subr.bf16.mxu0 0
      %1938 = vmatpush1.bf16.msra.mxu0 0
      %1939 = vmatprep.subr.bf16.mxu0 0
      %1940 = vmatpush1.bf16.msra.mxu0 0
      %1941 = vmatprep.subr.bf16.mxu0 0
      %1942 = vmatpush1.bf16.msra.mxu0 0
      %1943 = vmatprep.subr.bf16.mxu0 0
      %1944 = vmatpush1.bf16.msra.mxu0 0
      %1945 = vmatprep.subr.bf16.mxu0 0
      %1946 = vmatpush1.bf16.msra.mxu0 0
      %1947 = vmatprep.mubr.bf16.mxu0 0
      %1948 = vmatmul.mubr.bf16.gmra.mrb[0].mxu0 %v1883
      %v1949 = vpop.f32.mrb[0].mxu0
      %v1950 = vadd.f32 0.0, %v1949
      %v1951 = vpop.f32.mrb[0].mxu0
      %v1952 = vpop.f32.mrb[0].mxu0
      %v1953 = vadd.f32 0.0, %v1952
      %v1954 = vpop.f32.mrb[0].mxu0
      %1955 = vmatprep.mubr.bf16.mxu0 0
      %1956 = vmatmul.mubr.bf16.gmra.mrb[0].mxu0 %v1884
      %v1957 = vpop.f32.mrb[0].mxu0
      %v1958 = vadd.f32 0.0, %v1957
      %v1959 = vpop.f32.mrb[0].mxu0
      %v1960 = vpop.f32.mrb[0].mxu0
      %v1961 = vadd.f32 0.0, %v1960
      %v1962 = vpop.f32.mrb[0].mxu0
      %1963 = vmatprep.mubr.bf16.mxu0 0
      %1964 = vmatmul.mubr.bf16.gmra.mrb[0].mxu0 %v1885
      %v1965 = vpop.f32.mrb[0].mxu0
      %v1966 = vadd.f32 0.0, %v1965
      %v1967 = vpop.f32.mrb[0].mxu0
      %v1968 = vpop.f32.mrb[0].mxu0
      %v1969 = vadd.f32 0.0, %v1968
      %v1970 = vpop.f32.mrb[0].mxu0
      %1971 = vmatprep.mubr.bf16.mxu0 0
      %1972 = vmatmul.mubr.bf16.gmra.mrb[0].mxu0 %v1886
      %v1973 = vpop.f32.mrb[0].mxu0
      %v1974 = vadd.f32 0.0, %v1973
      %v1975 = vpop.f32.mrb[0].mxu0
      %v1976 = vpop.f32.mrb[0].mxu0
      %v1977 = vadd.f32 0.0, %v1976
      %v1978 = vpop.f32.mrb[0].mxu0
      %1979 = vmatprep.mubr.bf16.mxu0 0
      %1980 = vmatmul.mubr.bf16.gmra.mrb[0].mxu0 %v1887
      %v1981 = vpop.f32.mrb[0].mxu0
      %v1982 = vadd.f32 0.0, %v1981
      %v1983 = vpop.f32.mrb[0].mxu0
      %v1984 = vpop.f32.mrb[0].mxu0
      %v1985 = vadd.f32 0.0, %v1984
      %v1986 = vpop.f32.mrb[0].mxu0
      %1987 = vmatprep.mubr.bf16.mxu0 0
      %1988 = vmatmul.mubr.bf16.gmra.mrb[0].mxu0 %v1888
      %v1989 = vpop.f32.mrb[0].mxu0
      %v1990 = vadd.f32 0.0, %v1989
      %v1991 = vpop.f32.mrb[0].mxu0
      %v1992 = vpop.f32.mrb[0].mxu0
      %v1993 = vadd.f32 0.0, %v1992
      %v1994 = vpop.f32.mrb[0].mxu0
      %1995 = vmatprep.mubr.bf16.mxu0 0
      %1996 = vmatmul.mubr.bf16.gmra.mrb[0].mxu0 %v1889
      %v1997 = vpop.f32.mrb[0].mxu0
      %v1998 = vadd.f32 0.0, %v1997
      %v1999 = vpop.f32.mrb[0].mxu0
      %v2000 = vpop.f32.mrb[0].mxu0
      %v2001 = vadd.f32 0.0, %v2000
      %v2002 = vpop.f32.mrb[0].mxu0
      %2003 = vmatprep.mubr.bf16.mxu0 0
      %2004 = vmatmul.mubr.bf16.gmra.mrb[0].mxu0 %v1890
      %v2005 = vpop.f32.mrb[0].mxu0
      %v2006 = vadd.f32 0.0, %v2005
      %v2007 = vpop.f32.mrb[0].mxu0
      %v2008 = vpop.f32.mrb[0].mxu0
      %v2009 = vadd.f32 0.0, %v2008
      %v2010 = vpop.f32.mrb[0].mxu0
      %2011 = vdwg.mxu0
      %2012 = vrot.lane.b32.xlu0 %v1107, 112
      %v2013 = vpop.permute.xlu0 %2012
      %2014 = vrot.lane.b32.xlu0 %v1108, 112
      %v2015 = vpop.permute.xlu0 %2014
      %2016 = vrot.lane.b32.xlu0 %v1109, 112
      %v2017 = vpop.permute.xlu0 %2016
      %2018 = vrot.lane.b32.xlu0 %v1110, 112
      %v2019 = vpop.permute.xlu0 %2018
      %2020 = vrot.lane.b32.xlu0 %v1111, 112
      %v2021 = vpop.permute.xlu0 %2020
      %2022 = vrot.lane.b32.xlu0 %v1112, 112
      %v2023 = vpop.permute.xlu0 %2022
      %2024 = vrot.lane.b32.xlu0 %v1113, 112
      %v2025 = vpop.permute.xlu0 %2024
      %2026 = vrot.lane.b32.xlu0 %v1114, 112
      %v2027 = vpop.permute.xlu0 %2026
      %2028 = vrot.lane.b32.xlu0 %v1107, 80
      %v2029 = vpop.permute.xlu0 %2028
      %2030 = vrot.lane.b32.xlu0 %v1108, 80
      %v2031 = vpop.permute.xlu0 %2030
      %2032 = vrot.lane.b32.xlu0 %v1109, 80
      %v2033 = vpop.permute.xlu0 %2032
      %2034 = vrot.lane.b32.xlu0 %v1110, 80
      %v2035 = vpop.permute.xlu0 %2034
      %2036 = vrot.lane.b32.xlu0 %v1111, 80
      %v2037 = vpop.permute.xlu0 %2036
      %2038 = vrot.lane.b32.xlu0 %v1112, 80
      %v2039 = vpop.permute.xlu0 %2038
      %2040 = vrot.lane.b32.xlu0 %v1113, 80
      %v2041 = vpop.permute.xlu0 %2040
      %2042 = vrot.lane.b32.xlu0 %v1114, 80
      %v2043 = vpop.permute.xlu0 %2042
      %v2045 = vsel %vm1143, %v2013, 0
      %v2048 = vsel %vm1143, %v2015, 0
      %v2051 = vsel %vm1143, %v2017, 0
      %v2054 = vsel %vm1143, %v2019, 0
      %v2057 = vsel %vm1143, %v2021, 0
      %v2060 = vsel %vm1143, %v2023, 0
      %v2063 = vsel %vm1143, %v2025, 0
      %v2066 = vsel %vm1143, %v2027, 0
      %v2069 = vsel %vm1143, %v2029, 0
      %v2072 = vsel %vm1143, %v2031, 0
      %v2075 = vsel %vm1143, %v2033, 0
      %v2078 = vsel %vm1143, %v2035, 0
      %v2081 = vsel %vm1143, %v2037, 0
      %v2084 = vsel %vm1143, %v2039, 0
      %v2087 = vsel %vm1143, %v2041, 0
      %v2090 = vsel %vm1143, %v2043, 0
      %2092 = vmatprep.subr.bf16.mxu0 0
      %2093 = vmatpush1.bf16.xpose.msra.mxu0 %v2069
      %2094 = vmatprep.subr.bf16.mxu0 0
      %2095 = vmatpush1.bf16.xpose.msra.mxu0 %v2072
      %2096 = vmatprep.subr.bf16.mxu0 0
      %2097 = vmatpush1.bf16.xpose.msra.mxu0 %v2075
      %2098 = vmatprep.subr.bf16.mxu0 0
      %2099 = vmatpush1.bf16.xpose.msra.mxu0 %v2078
      %2100 = vmatprep.subr.bf16.mxu0 0
      %2101 = vmatpush1.bf16.xpose.msra.mxu0 %v2081
      %2102 = vmatprep.subr.bf16.mxu0 0
      %2103 = vmatpush1.bf16.xpose.msra.mxu0 %v2084
      %2104 = vmatprep.subr.bf16.mxu0 0
      %2105 = vmatpush1.bf16.xpose.msra.mxu0 %v2087
      %2106 = vmatprep.subr.bf16.mxu0 0
      %2107 = vmatpush1.bf16.xpose.msra.mxu0 %v2090
      %2108 = vmatprep.subr.bf16.mxu0 0
      %2109 = vmatpush1.bf16.xpose.msra.mxu0 0
      %2110 = vmatprep.subr.bf16.mxu0 0
      %2111 = vmatpush1.bf16.xpose.msra.mxu0 0
      %2112 = vmatprep.subr.bf16.mxu0 0
      %2113 = vmatpush1.bf16.xpose.msra.mxu0 0
      %2114 = vmatprep.subr.bf16.mxu0 0
      %2115 = vmatpush1.bf16.xpose.msra.mxu0 0
      %2116 = vmatprep.subr.bf16.mxu0 0
      %2117 = vmatpush1.bf16.xpose.msra.mxu0 0
      %2118 = vmatprep.subr.bf16.mxu0 0
      %2119 = vmatpush1.bf16.xpose.msra.mxu0 0
      %2120 = vmatprep.subr.bf16.mxu0 0
      %2121 = vmatpush1.bf16.xpose.msra.mxu0 0
      %2122 = vmatprep.subr.bf16.mxu0 0
      %2123 = vmatpush1.bf16.xpose.msra.mxu0 0
      %2124 = vmatprep.mubr.bf16.mxu0 0
      %2125 = vmatmul.mubr.bf16.gmra.mrb[0].mxu0 %v2045
      %v2126 = vpop.f32.mrb[0].mxu0
      %v2127 = vadd.f32 %v1118, %v2126
      %v2128 = vpop.f32.mrb[0].mxu0
      %v2129 = vpop.f32.mrb[0].mxu0
      %v2130 = vadd.f32 %v1118, %v2129
      %v2131 = vpop.f32.mrb[0].mxu0
      %2132 = vmatprep.mubr.bf16.mxu0 0
      %2133 = vmatmul.mubr.bf16.gmra.mrb[0].mxu0 %v2048
      %v2134 = vpop.f32.mrb[0].mxu0
      %v2135 = vadd.f32 %v1118, %v2134
      %v2136 = vpop.f32.mrb[0].mxu0
      %v2137 = vpop.f32.mrb[0].mxu0
      %v2138 = vadd.f32 %v1118, %v2137
      %v2139 = vpop.f32.mrb[0].mxu0
      %2140 = vmatprep.mubr.bf16.mxu0 0
      %2141 = vmatmul.mubr.bf16.gmra.mrb[0].mxu0 %v2051
      %v2142 = vpop.f32.mrb[0].mxu0
      %v2143 = vadd.f32 %v1118, %v2142
      %v2144 = vpop.f32.mrb[0].mxu0
      %v2145 = vpop.f32.mrb[0].mxu0
      %v2146 = vadd.f32 %v1118, %v2145
      %v2147 = vpop.f32.mrb[0].mxu0
      %2148 = vmatprep.mubr.bf16.mxu0 0
      %2149 = vmatmul.mubr.bf16.gmra.mrb[0].mxu0 %v2054
      %v2150 = vpop.f32.mrb[0].mxu0
      %v2151 = vadd.f32 %v1118, %v2150
      %v2152 = vpop.f32.mrb[0].mxu0
      %v2153 = vpop.f32.mrb[0].mxu0
      %v2154 = vadd.f32 %v1118, %v2153
      %v2155 = vpop.f32.mrb[0].mxu0
      %2156 = vmatprep.mubr.bf16.mxu0 0
      %2157 = vmatmul.mubr.bf16.gmra.mrb[0].mxu0 %v2057
      %v2158 = vpop.f32.mrb[0].mxu0
      %v2159 = vadd.f32 %v1118, %v2158
      %v2160 = vpop.f32.mrb[0].mxu0
      %v2161 = vpop.f32.mrb[0].mxu0
      %v2162 = vadd.f32 %v1118, %v2161
      %v2163 = vpop.f32.mrb[0].mxu0
      %2164 = vmatprep.mubr.bf16.mxu0 0
      %2165 = vmatmul.mubr.bf16.gmra.mrb[0].mxu0 %v2060
      %v2166 = vpop.f32.mrb[0].mxu0
      %v2167 = vadd.f32 %v1118, %v2166
      %v2168 = vpop.f32.mrb[0].mxu0
      %v2169 = vpop.f32.mrb[0].mxu0
      %v2170 = vadd.f32 %v1118, %v2169
      %v2171 = vpop.f32.mrb[0].mxu0
      %2172 = vmatprep.mubr.bf16.mxu0 0
      %2173 = vmatmul.mubr.bf16.gmra.mrb[0].mxu0 %v2063
      %v2174 = vpop.f32.mrb[0].mxu0
      %v2175 = vadd.f32 %v1118, %v2174
      %v2176 = vpop.f32.mrb[0].mxu0
      %v2177 = vpop.f32.mrb[0].mxu0
      %v2178 = vadd.f32 %v1118, %v2177
      %v2179 = vpop.f32.mrb[0].mxu0
      %2180 = vmatprep.mubr.bf16.mxu0 0
      %2181 = vmatmul.mubr.bf16.gmra.mrb[0].mxu0 %v2066
      %v2182 = vpop.f32.mrb[0].mxu0
      %v2183 = vadd.f32 %v1118, %v2182
      %v2184 = vpop.f32.mrb[0].mxu0
      %v2185 = vpop.f32.mrb[0].mxu0
      %v2186 = vadd.f32 %v1118, %v2185
      %v2187 = vpop.f32.mrb[0].mxu0
      %2188 = vdwg.mxu0
      %2189 = vmax.xlane.f32.xlu0 %v2127
      %v2190 = vpop.xlane.xlu0 %2189
      %2191 = vmax.xlane.f32.xlu0 %v2130
      %v2192 = vpop.xlane.xlu0 %2191
      %2193 = vmax.xlane.f32.xlu0 %v2135
      %v2194 = vpop.xlane.xlu0 %2193
      %2195 = vmax.xlane.f32.xlu0 %v2138
      %v2196 = vpop.xlane.xlu0 %2195
      %2197 = vmax.xlane.f32.xlu0 %v2143
      %v2198 = vpop.xlane.xlu0 %2197
      %2199 = vmax.xlane.f32.xlu0 %v2146
      %v2200 = vpop.xlane.xlu0 %2199
      %2201 = vmax.xlane.f32.xlu0 %v2151
      %v2202 = vpop.xlane.xlu0 %2201
      %2203 = vmax.xlane.f32.xlu0 %v2154
      %v2204 = vpop.xlane.xlu0 %2203
      %2205 = vmax.xlane.f32.xlu0 %v2159
      %v2206 = vpop.xlane.xlu0 %2205
      %2207 = vmax.xlane.f32.xlu0 %v2162
      %v2208 = vpop.xlane.xlu0 %2207
      %2209 = vmax.xlane.f32.xlu0 %v2167
      %v2210 = vpop.xlane.xlu0 %2209
      %2211 = vmax.xlane.f32.xlu0 %v2170
      %v2212 = vpop.xlane.xlu0 %2211
      %2213 = vmax.xlane.f32.xlu0 %v2175
      %v2214 = vpop.xlane.xlu0 %2213
      %2215 = vmax.xlane.f32.xlu0 %v2178
      %v2216 = vpop.xlane.xlu0 %2215
      %2217 = vmax.xlane.f32.xlu0 %v2183
      %v2218 = vpop.xlane.xlu0 %2217
      %2219 = vmax.xlane.f32.xlu0 %v2186
      %v2220 = vpop.xlane.xlu0 %2219
      %v2221 = vsub.f32 %v2127, %v2190
      %v2222 = vsub.f32 %v2130, %v2192
      %v2223 = vsub.f32 %v2135, %v2194
      %v2224 = vsub.f32 %v2138, %v2196
      %v2225 = vsub.f32 %v2143, %v2198
      %v2226 = vsub.f32 %v2146, %v2200
      %v2227 = vsub.f32 %v2151, %v2202
      %v2228 = vsub.f32 %v2154, %v2204
      %v2229 = vsub.f32 %v2159, %v2206
      %v2230 = vsub.f32 %v2162, %v2208
      %v2231 = vsub.f32 %v2167, %v2210
      %v2232 = vsub.f32 %v2170, %v2212
      %v2233 = vsub.f32 %v2175, %v2214
      %v2234 = vsub.f32 %v2178, %v2216
      %v2235 = vsub.f32 %v2183, %v2218
      %v2236 = vsub.f32 %v2186, %v2220
      %v2237 = vmul.f32 %v2221, 1.442695
      %v2238 = vpow.pop %v2237
      %v2239 = vmul.f32 %v2222, 1.442695
      %v2240 = vpow.pop %v2239
      %v2241 = vmul.f32 %v2223, 1.442695
      %v2242 = vpow.pop %v2241
      %v2243 = vmul.f32 %v2224, 1.442695
      %v2244 = vpow.pop %v2243
      %v2245 = vmul.f32 %v2225, 1.442695
      %v2246 = vpow.pop %v2245
      %v2247 = vmul.f32 %v2226, 1.442695
      %v2248 = vpow.pop %v2247
      %v2249 = vmul.f32 %v2227, 1.442695
      %v2250 = vpow.pop %v2249
      %v2251 = vmul.f32 %v2228, 1.442695
      %v2252 = vpow.pop %v2251
      %v2253 = vmul.f32 %v2229, 1.442695
      %v2254 = vpow.pop %v2253
      %v2255 = vmul.f32 %v2230, 1.442695
      %v2256 = vpow.pop %v2255
      %v2257 = vmul.f32 %v2231, 1.442695
      %v2258 = vpow.pop %v2257
      %v2259 = vmul.f32 %v2232, 1.442695
      %v2260 = vpow.pop %v2259
      %v2261 = vmul.f32 %v2233, 1.442695
      %v2262 = vpow.pop %v2261
      %v2263 = vmul.f32 %v2234, 1.442695
      %v2264 = vpow.pop %v2263
      %v2265 = vmul.f32 %v2235, 1.442695
      %v2266 = vpow.pop %v2265
      %v2267 = vmul.f32 %v2236, 1.442695
      %v2268 = vpow.pop %v2267
      %2269 = vadd.xlane.f32.xlu0 %v2238
      %v2270 = vpop.xlane.xlu0 %2269
      %2271 = vadd.xlane.f32.xlu0 %v2240
      %v2272 = vpop.xlane.xlu0 %2271
      %2273 = vadd.xlane.f32.xlu0 %v2242
      %v2274 = vpop.xlane.xlu0 %2273
      %2275 = vadd.xlane.f32.xlu0 %v2244
      %v2276 = vpop.xlane.xlu0 %2275
      %2277 = vadd.xlane.f32.xlu0 %v2246
      %v2278 = vpop.xlane.xlu0 %2277
      %2279 = vadd.xlane.f32.xlu0 %v2248
      %v2280 = vpop.xlane.xlu0 %2279
      %2281 = vadd.xlane.f32.xlu0 %v2250
      %v2282 = vpop.xlane.xlu0 %2281
      %2283 = vadd.xlane.f32.xlu0 %v2252
      %v2284 = vpop.xlane.xlu0 %2283
      %2285 = vadd.xlane.f32.xlu0 %v2254
      %v2286 = vpop.xlane.xlu0 %2285
      %2287 = vadd.xlane.f32.xlu0 %v2256
      %v2288 = vpop.xlane.xlu0 %2287
      %2289 = vadd.xlane.f32.xlu0 %v2258
      %v2290 = vpop.xlane.xlu0 %2289
      %2291 = vadd.xlane.f32.xlu0 %v2260
      %v2292 = vpop.xlane.xlu0 %2291
      %2293 = vadd.xlane.f32.xlu0 %v2262
      %v2294 = vpop.xlane.xlu0 %2293
      %2295 = vadd.xlane.f32.xlu0 %v2264
      %v2296 = vpop.xlane.xlu0 %2295
      %2297 = vadd.xlane.f32.xlu0 %v2266
      %v2298 = vpop.xlane.xlu0 %2297
      %2299 = vadd.xlane.f32.xlu0 %v2268
      %v2300 = vpop.xlane.xlu0 %2299
      %v2301 = vrcp.pop %v2270
      %v2302 = vrcp.pop %v2272
      %v2303 = vrcp.pop %v2274
      %v2304 = vrcp.pop %v2276
      %v2305 = vrcp.pop %v2278
      %v2306 = vrcp.pop %v2280
      %v2307 = vrcp.pop %v2282
      %v2308 = vrcp.pop %v2284
      %v2309 = vrcp.pop %v2286
      %v2310 = vrcp.pop %v2288
      %v2311 = vrcp.pop %v2290
      %v2312 = vrcp.pop %v2292
      %v2313 = vrcp.pop %v2294
      %v2314 = vrcp.pop %v2296
      %v2315 = vrcp.pop %v2298
      %v2316 = vrcp.pop %v2300
      %v2317 = vmul.f32 %v2238, %v2301
      %v2318 = vmul.f32 %v2240, %v2302
      %v2319 = vmul.f32 %v2242, %v2303
      %v2320 = vmul.f32 %v2244, %v2304
      %v2321 = vmul.f32 %v2246, %v2305
      %v2322 = vmul.f32 %v2248, %v2306
      %v2323 = vmul.f32 %v2250, %v2307
      %v2324 = vmul.f32 %v2252, %v2308
      %v2325 = vmul.f32 %v2254, %v2309
      %v2326 = vmul.f32 %v2256, %v2310
      %v2327 = vmul.f32 %v2258, %v2311
      %v2328 = vmul.f32 %v2260, %v2312
      %v2329 = vmul.f32 %v2262, %v2313
      %v2330 = vmul.f32 %v2264, %v2314
      %v2331 = vmul.f32 %v2266, %v2315
      %v2332 = vmul.f32 %v2268, %v2316
      %v2333 = vpack.c.bf16 %v2318, %v2317
      %v2334 = vpack.c.bf16 %v2320, %v2319
      %v2335 = vpack.c.bf16 %v2322, %v2321
      %v2336 = vpack.c.bf16 %v2324, %v2323
      %v2337 = vpack.c.bf16 %v2326, %v2325
      %v2338 = vpack.c.bf16 %v2328, %v2327
      %v2339 = vpack.c.bf16 %v2330, %v2329
      %v2340 = vpack.c.bf16 %v2332, %v2331
      %2341 = vrot.lane.b32.xlu0 %v1107, 48
      %v2342 = vpop.permute.xlu0 %2341
      %2343 = vrot.lane.b32.xlu0 %v1108, 48
      %v2344 = vpop.permute.xlu0 %2343
      %2345 = vrot.lane.b32.xlu0 %v1109, 48
      %v2346 = vpop.permute.xlu0 %2345
      %2347 = vrot.lane.b32.xlu0 %v1110, 48
      %v2348 = vpop.permute.xlu0 %2347
      %2349 = vrot.lane.b32.xlu0 %v1111, 48
      %v2350 = vpop.permute.xlu0 %2349
      %2351 = vrot.lane.b32.xlu0 %v1112, 48
      %v2352 = vpop.permute.xlu0 %2351
      %2353 = vrot.lane.b32.xlu0 %v1113, 48
      %v2354 = vpop.permute.xlu0 %2353
      %2355 = vrot.lane.b32.xlu0 %v1114, 48
      %v2356 = vpop.permute.xlu0 %2355
      %2365 = vmatprep.subr.bf16.mxu0 0
      %2366 = vmatpush1.bf16.msra.mxu0 %v2342
      %2367 = vmatprep.subr.bf16.mxu0 0
      %2368 = vmatpush1.bf16.msra.mxu0 %v2344
      %2369 = vmatprep.subr.bf16.mxu0 0
      %2370 = vmatpush1.bf16.msra.mxu0 %v2346
      %2371 = vmatprep.subr.bf16.mxu0 0
      %2372 = vmatpush1.bf16.msra.mxu0 %v2348
      %2373 = vmatprep.subr.bf16.mxu0 0
      %2374 = vmatpush1.bf16.msra.mxu0 %v2350
      %2375 = vmatprep.subr.bf16.mxu0 0
      %2376 = vmatpush1.bf16.msra.mxu0 %v2352
      %2377 = vmatprep.subr.bf16.mxu0 0
      %2378 = vmatpush1.bf16.msra.mxu0 %v2354
      %2379 = vmatprep.subr.bf16.mxu0 0
      %2380 = vmatpush1.bf16.msra.mxu0 %v2356
      %2381 = vmatprep.subr.bf16.mxu0 0
      %2382 = vmatpush1.bf16.msra.mxu0 0
      %2383 = vmatprep.subr.bf16.mxu0 0
      %2384 = vmatpush1.bf16.msra.mxu0 0
      %2385 = vmatprep.subr.bf16.mxu0 0
      %2386 = vmatpush1.bf16.msra.mxu0 0
      %2387 = vmatprep.subr.bf16.mxu0 0
      %2388 = vmatpush1.bf16.msra.mxu0 0
      %2389 = vmatprep.subr.bf16.mxu0 0
      %2390 = vmatpush1.bf16.msra.mxu0 0
      %2391 = vmatprep.subr.bf16.mxu0 0
      %2392 = vmatpush1.bf16.msra.mxu0 0
      %2393 = vmatprep.subr.bf16.mxu0 0
      %2394 = vmatpush1.bf16.msra.mxu0 0
      %2395 = vmatprep.subr.bf16.mxu0 0
      %2396 = vmatpush1.bf16.msra.mxu0 0
      %2397 = vmatprep.mubr.bf16.mxu0 0
      %2398 = vmatmul.mubr.bf16.gmra.mrb[0].mxu0 %v2333
      %v2399 = vpop.f32.mrb[0].mxu0
      %v2400 = vadd.f32 0.0, %v2399
      %v2401 = vpop.f32.mrb[0].mxu0
      %v2402 = vpop.f32.mrb[0].mxu0
      %v2403 = vadd.f32 0.0, %v2402
      %v2404 = vpop.f32.mrb[0].mxu0
      %2405 = vmatprep.mubr.bf16.mxu0 0
      %2406 = vmatmul.mubr.bf16.gmra.mrb[0].mxu0 %v2334
      %v2407 = vpop.f32.mrb[0].mxu0
      %v2408 = vadd.f32 0.0, %v2407
      %v2409 = vpop.f32.mrb[0].mxu0
      %v2410 = vpop.f32.mrb[0].mxu0
      %v2411 = vadd.f32 0.0, %v2410
      %v2412 = vpop.f32.mrb[0].mxu0
      %2413 = vmatprep.mubr.bf16.mxu0 0
      %2414 = vmatmul.mubr.bf16.gmra.mrb[0].mxu0 %v2335
      %v2415 = vpop.f32.mrb[0].mxu0
      %v2416 = vadd.f32 0.0, %v2415
      %v2417 = vpop.f32.mrb[0].mxu0
      %v2418 = vpop.f32.mrb[0].mxu0
      %v2419 = vadd.f32 0.0, %v2418
      %v2420 = vpop.f32.mrb[0].mxu0
      %2421 = vmatprep.mubr.bf16.mxu0 0
      %2422 = vmatmul.mubr.bf16.gmra.mrb[0].mxu0 %v2336
      %v2423 = vpop.f32.mrb[0].mxu0
      %v2424 = vadd.f32 0.0, %v2423
      %v2425 = vpop.f32.mrb[0].mxu0
      %v2426 = vpop.f32.mrb[0].mxu0
      %v2427 = vadd.f32 0.0, %v2426
      %v2428 = vpop.f32.mrb[0].mxu0
      %2429 = vmatprep.mubr.bf16.mxu0 0
      %2430 = vmatmul.mubr.bf16.gmra.mrb[0].mxu0 %v2337
      %v2431 = vpop.f32.mrb[0].mxu0
      %v2432 = vadd.f32 0.0, %v2431
      %v2433 = vpop.f32.mrb[0].mxu0
      %v2434 = vpop.f32.mrb[0].mxu0
      %v2435 = vadd.f32 0.0, %v2434
      %v2436 = vpop.f32.mrb[0].mxu0
      %2437 = vmatprep.mubr.bf16.mxu0 0
      %2438 = vmatmul.mubr.bf16.gmra.mrb[0].mxu0 %v2338
      %v2439 = vpop.f32.mrb[0].mxu0
      %v2440 = vadd.f32 0.0, %v2439
      %v2441 = vpop.f32.mrb[0].mxu0
      %v2442 = vpop.f32.mrb[0].mxu0
      %v2443 = vadd.f32 0.0, %v2442
      %v2444 = vpop.f32.mrb[0].mxu0
      %2445 = vmatprep.mubr.bf16.mxu0 0
      %2446 = vmatmul.mubr.bf16.gmra.mrb[0].mxu0 %v2339
      %v2447 = vpop.f32.mrb[0].mxu0
      %v2448 = vadd.f32 0.0, %v2447
      %v2449 = vpop.f32.mrb[0].mxu0
      %v2450 = vpop.f32.mrb[0].mxu0
      %v2451 = vadd.f32 0.0, %v2450
      %v2452 = vpop.f32.mrb[0].mxu0
      %2453 = vmatprep.mubr.bf16.mxu0 0
      %2454 = vmatmul.mubr.bf16.gmra.mrb[0].mxu0 %v2340
      %v2455 = vpop.f32.mrb[0].mxu0
      %v2456 = vadd.f32 0.0, %v2455
      %v2457 = vpop.f32.mrb[0].mxu0
      %v2458 = vpop.f32.mrb[0].mxu0
      %v2459 = vadd.f32 0.0, %v2458
      %v2460 = vpop.f32.mrb[0].mxu0
      %2461 = vdwg.mxu0
      %2462 = vrot.lane.b32.xlu0 %v1107, 104
      %v2463 = vpop.permute.xlu0 %2462
      %2464 = vrot.lane.b32.xlu0 %v1108, 104
      %v2465 = vpop.permute.xlu0 %2464
      %2466 = vrot.lane.b32.xlu0 %v1109, 104
      %v2467 = vpop.permute.xlu0 %2466
      %2468 = vrot.lane.b32.xlu0 %v1110, 104
      %v2469 = vpop.permute.xlu0 %2468
      %2470 = vrot.lane.b32.xlu0 %v1111, 104
      %v2471 = vpop.permute.xlu0 %2470
      %2472 = vrot.lane.b32.xlu0 %v1112, 104
      %v2473 = vpop.permute.xlu0 %2472
      %2474 = vrot.lane.b32.xlu0 %v1113, 104
      %v2475 = vpop.permute.xlu0 %2474
      %2476 = vrot.lane.b32.xlu0 %v1114, 104
      %v2477 = vpop.permute.xlu0 %2476
      %2478 = vrot.lane.b32.xlu0 %v1107, 72
      %v2479 = vpop.permute.xlu0 %2478
      %2480 = vrot.lane.b32.xlu0 %v1108, 72
      %v2481 = vpop.permute.xlu0 %2480
      %2482 = vrot.lane.b32.xlu0 %v1109, 72
      %v2483 = vpop.permute.xlu0 %2482
      %2484 = vrot.lane.b32.xlu0 %v1110, 72
      %v2485 = vpop.permute.xlu0 %2484
      %2486 = vrot.lane.b32.xlu0 %v1111, 72
      %v2487 = vpop.permute.xlu0 %2486
      %2488 = vrot.lane.b32.xlu0 %v1112, 72
      %v2489 = vpop.permute.xlu0 %2488
      %2490 = vrot.lane.b32.xlu0 %v1113, 72
      %v2491 = vpop.permute.xlu0 %2490
      %2492 = vrot.lane.b32.xlu0 %v1114, 72
      %v2493 = vpop.permute.xlu0 %2492
      %v2495 = vsel %vm1143, %v2463, 0
      %v2498 = vsel %vm1143, %v2465, 0
      %v2501 = vsel %vm1143, %v2467, 0
      %v2504 = vsel %vm1143, %v2469, 0
      %v2507 = vsel %vm1143, %v2471, 0
      %v2510 = vsel %vm1143, %v2473, 0
      %v2513 = vsel %vm1143, %v2475, 0
      %v2516 = vsel %vm1143, %v2477, 0
      %v2519 = vsel %vm1143, %v2479, 0
      %v2522 = vsel %vm1143, %v2481, 0
      %v2525 = vsel %vm1143, %v2483, 0
      %v2528 = vsel %vm1143, %v2485, 0
      %v2531 = vsel %vm1143, %v2487, 0
      %v2534 = vsel %vm1143, %v2489, 0
      %v2537 = vsel %vm1143, %v2491, 0
      %v2540 = vsel %vm1143, %v2493, 0
      %2542 = vmatprep.subr.bf16.mxu0 0
      %2543 = vmatpush1.bf16.xpose.msra.mxu0 %v2519
      %2544 = vmatprep.subr.bf16.mxu0 0
      %2545 = vmatpush1.bf16.xpose.msra.mxu0 %v2522
      %2546 = vmatprep.subr.bf16.mxu0 0
      %2547 = vmatpush1.bf16.xpose.msra.mxu0 %v2525
      %2548 = vmatprep.subr.bf16.mxu0 0
      %2549 = vmatpush1.bf16.xpose.msra.mxu0 %v2528
      %2550 = vmatprep.subr.bf16.mxu0 0
      %2551 = vmatpush1.bf16.xpose.msra.mxu0 %v2531
      %2552 = vmatprep.subr.bf16.mxu0 0
      %2553 = vmatpush1.bf16.xpose.msra.mxu0 %v2534
      %2554 = vmatprep.subr.bf16.mxu0 0
      %2555 = vmatpush1.bf16.xpose.msra.mxu0 %v2537
      %2556 = vmatprep.subr.bf16.mxu0 0
      %2557 = vmatpush1.bf16.xpose.msra.mxu0 %v2540
      %2558 = vmatprep.subr.bf16.mxu0 0
      %2559 = vmatpush1.bf16.xpose.msra.mxu0 0
      %2560 = vmatprep.subr.bf16.mxu0 0
      %2561 = vmatpush1.bf16.xpose.msra.mxu0 0
      %2562 = vmatprep.subr.bf16.mxu0 0
      %2563 = vmatpush1.bf16.xpose.msra.mxu0 0
      %2564 = vmatprep.subr.bf16.mxu0 0
      %2565 = vmatpush1.bf16.xpose.msra.mxu0 0
      %2566 = vmatprep.subr.bf16.mxu0 0
      %2567 = vmatpush1.bf16.xpose.msra.mxu0 0
      %2568 = vmatprep.subr.bf16.mxu0 0
      %2569 = vmatpush1.bf16.xpose.msra.mxu0 0
      %2570 = vmatprep.subr.bf16.mxu0 0
      %2571 = vmatpush1.bf16.xpose.msra.mxu0 0
      %2572 = vmatprep.subr.bf16.mxu0 0
      %2573 = vmatpush1.bf16.xpose.msra.mxu0 0
      %2574 = vmatprep.mubr.bf16.mxu0 0
      %2575 = vmatmul.mubr.bf16.gmra.mrb[0].mxu0 %v2495
      %v2576 = vpop.f32.mrb[0].mxu0
      %v2577 = vadd.f32 %v1118, %v2576
      %v2578 = vpop.f32.mrb[0].mxu0
      %v2579 = vpop.f32.mrb[0].mxu0
      %v2580 = vadd.f32 %v1118, %v2579
      %v2581 = vpop.f32.mrb[0].mxu0
      %2582 = vmatprep.mubr.bf16.mxu0 0
      %2583 = vmatmul.mubr.bf16.gmra.mrb[0].mxu0 %v2498
      %v2584 = vpop.f32.mrb[0].mxu0
      %v2585 = vadd.f32 %v1118, %v2584
      %v2586 = vpop.f32.mrb[0].mxu0
      %v2587 = vpop.f32.mrb[0].mxu0
      %v2588 = vadd.f32 %v1118, %v2587
      %v2589 = vpop.f32.mrb[0].mxu0
      %2590 = vmatprep.mubr.bf16.mxu0 0
      %2591 = vmatmul.mubr.bf16.gmra.mrb[0].mxu0 %v2501
      %v2592 = vpop.f32.mrb[0].mxu0
      %v2593 = vadd.f32 %v1118, %v2592
      %v2594 = vpop.f32.mrb[0].mxu0
      %v2595 = vpop.f32.mrb[0].mxu0
      %v2596 = vadd.f32 %v1118, %v2595
      %v2597 = vpop.f32.mrb[0].mxu0
      %2598 = vmatprep.mubr.bf16.mxu0 0
      %2599 = vmatmul.mubr.bf16.gmra.mrb[0].mxu0 %v2504
      %v2600 = vpop.f32.mrb[0].mxu0
      %v2601 = vadd.f32 %v1118, %v2600
      %v2602 = vpop.f32.mrb[0].mxu0
      %v2603 = vpop.f32.mrb[0].mxu0
      %v2604 = vadd.f32 %v1118, %v2603
      %v2605 = vpop.f32.mrb[0].mxu0
      %2606 = vmatprep.mubr.bf16.mxu0 0
      %2607 = vmatmul.mubr.bf16.gmra.mrb[0].mxu0 %v2507
      %v2608 = vpop.f32.mrb[0].mxu0
      %v2609 = vadd.f32 %v1118, %v2608
      %v2610 = vpop.f32.mrb[0].mxu0
      %v2611 = vpop.f32.mrb[0].mxu0
      %v2612 = vadd.f32 %v1118, %v2611
      %v2613 = vpop.f32.mrb[0].mxu0
      %2614 = vmatprep.mubr.bf16.mxu0 0
      %2615 = vmatmul.mubr.bf16.gmra.mrb[0].mxu0 %v2510
      %v2616 = vpop.f32.mrb[0].mxu0
      %v2617 = vadd.f32 %v1118, %v2616
      %v2618 = vpop.f32.mrb[0].mxu0
      %v2619 = vpop.f32.mrb[0].mxu0
      %v2620 = vadd.f32 %v1118, %v2619
      %v2621 = vpop.f32.mrb[0].mxu0
      %2622 = vmatprep.mubr.bf16.mxu0 0
      %2623 = vmatmul.mubr.bf16.gmra.mrb[0].mxu0 %v2513
      %v2624 = vpop.f32.mrb[0].mxu0
      %v2625 = vadd.f32 %v1118, %v2624
      %v2626 = vpop.f32.mrb[0].mxu0
      %v2627 = vpop.f32.mrb[0].mxu0
      %v2628 = vadd.f32 %v1118, %v2627
      %v2629 = vpop.f32.mrb[0].mxu0
      %2630 = vmatprep.mubr.bf16.mxu0 0
      %2631 = vmatmul.mubr.bf16.gmra.mrb[0].mxu0 %v2516
      %v2632 = vpop.f32.mrb[0].mxu0
      %v2633 = vadd.f32 %v1118, %v2632
      %v2634 = vpop.f32.mrb[0].mxu0
      %v2635 = vpop.f32.mrb[0].mxu0
      %v2636 = vadd.f32 %v1118, %v2635
      %v2637 = vpop.f32.mrb[0].mxu0
      %2638 = vdwg.mxu0
      %2639 = vmax.xlane.f32.xlu0 %v2577
      %v2640 = vpop.xlane.xlu0 %2639
      %2641 = vmax.xlane.f32.xlu0 %v2580
      %v2642 = vpop.xlane.xlu0 %2641
      %2643 = vmax.xlane.f32.xlu0 %v2585
      %v2644 = vpop.xlane.xlu0 %2643
      %2645 = vmax.xlane.f32.xlu0 %v2588
      %v2646 = vpop.xlane.xlu0 %2645
      %2647 = vmax.xlane.f32.xlu0 %v2593
      %v2648 = vpop.xlane.xlu0 %2647
      %2649 = vmax.xlane.f32.xlu0 %v2596
      %v2650 = vpop.xlane.xlu0 %2649
      %2651 = vmax.xlane.f32.xlu0 %v2601
      %v2652 = vpop.xlane.xlu0 %2651
      %2653 = vmax.xlane.f32.xlu0 %v2604
      %v2654 = vpop.xlane.xlu0 %2653
      %2655 = vmax.xlane.f32.xlu0 %v2609
      %v2656 = vpop.xlane.xlu0 %2655
      %2657 = vmax.xlane.f32.xlu0 %v2612
      %v2658 = vpop.xlane.xlu0 %2657
      %2659 = vmax.xlane.f32.xlu0 %v2617
      %v2660 = vpop.xlane.xlu0 %2659
      %2661 = vmax.xlane.f32.xlu0 %v2620
      %v2662 = vpop.xlane.xlu0 %2661
      %2663 = vmax.xlane.f32.xlu0 %v2625
      %v2664 = vpop.xlane.xlu0 %2663
      %2665 = vmax.xlane.f32.xlu0 %v2628
      %v2666 = vpop.xlane.xlu0 %2665
      %2667 = vmax.xlane.f32.xlu0 %v2633
      %v2668 = vpop.xlane.xlu0 %2667
      %2669 = vmax.xlane.f32.xlu0 %v2636
      %v2670 = vpop.xlane.xlu0 %2669
      %v2671 = vsub.f32 %v2577, %v2640
      %v2672 = vsub.f32 %v2580, %v2642
      %v2673 = vsub.f32 %v2585, %v2644
      %v2674 = vsub.f32 %v2588, %v2646
      %v2675 = vsub.f32 %v2593, %v2648
      %v2676 = vsub.f32 %v2596, %v2650
      %v2677 = vsub.f32 %v2601, %v2652
      %v2678 = vsub.f32 %v2604, %v2654
      %v2679 = vsub.f32 %v2609, %v2656
      %v2680 = vsub.f32 %v2612, %v2658
      %v2681 = vsub.f32 %v2617, %v2660
      %v2682 = vsub.f32 %v2620, %v2662
      %v2683 = vsub.f32 %v2625, %v2664
      %v2684 = vsub.f32 %v2628, %v2666
      %v2685 = vsub.f32 %v2633, %v2668
      %v2686 = vsub.f32 %v2636, %v2670
      %v2687 = vmul.f32 %v2671, 1.442695
      %v2688 = vpow.pop %v2687
      %v2689 = vmul.f32 %v2672, 1.442695
      %v2690 = vpow.pop %v2689
      %v2691 = vmul.f32 %v2673, 1.442695
      %v2692 = vpow.pop %v2691
      %v2693 = vmul.f32 %v2674, 1.442695
      %v2694 = vpow.pop %v2693
      %v2695 = vmul.f32 %v2675, 1.442695
      %v2696 = vpow.pop %v2695
      %v2697 = vmul.f32 %v2676, 1.442695
      %v2698 = vpow.pop %v2697
      %v2699 = vmul.f32 %v2677, 1.442695
      %v2700 = vpow.pop %v2699
      %v2701 = vmul.f32 %v2678, 1.442695
      %v2702 = vpow.pop %v2701
      %v2703 = vmul.f32 %v2679, 1.442695
      %v2704 = vpow.pop %v2703
      %v2705 = vmul.f32 %v2680, 1.442695
      %v2706 = vpow.pop %v2705
      %v2707 = vmul.f32 %v2681, 1.442695
      %v2708 = vpow.pop %v2707
      %v2709 = vmul.f32 %v2682, 1.442695
      %v2710 = vpow.pop %v2709
      %v2711 = vmul.f32 %v2683, 1.442695
      %v2712 = vpow.pop %v2711
      %v2713 = vmul.f32 %v2684, 1.442695
      %v2714 = vpow.pop %v2713
      %v2715 = vmul.f32 %v2685, 1.442695
      %v2716 = vpow.pop %v2715
      %v2717 = vmul.f32 %v2686, 1.442695
      %v2718 = vpow.pop %v2717
      %2719 = vadd.xlane.f32.xlu0 %v2688
      %v2720 = vpop.xlane.xlu0 %2719
      %2721 = vadd.xlane.f32.xlu0 %v2690
      %v2722 = vpop.xlane.xlu0 %2721
      %2723 = vadd.xlane.f32.xlu0 %v2692
      %v2724 = vpop.xlane.xlu0 %2723
      %2725 = vadd.xlane.f32.xlu0 %v2694
      %v2726 = vpop.xlane.xlu0 %2725
      %2727 = vadd.xlane.f32.xlu0 %v2696
      %v2728 = vpop.xlane.xlu0 %2727
      %2729 = vadd.xlane.f32.xlu0 %v2698
      %v2730 = vpop.xlane.xlu0 %2729
      %2731 = vadd.xlane.f32.xlu0 %v2700
      %v2732 = vpop.xlane.xlu0 %2731
      %2733 = vadd.xlane.f32.xlu0 %v2702
      %v2734 = vpop.xlane.xlu0 %2733
      %2735 = vadd.xlane.f32.xlu0 %v2704
      %v2736 = vpop.xlane.xlu0 %2735
      %2737 = vadd.xlane.f32.xlu0 %v2706
      %v2738 = vpop.xlane.xlu0 %2737
      %2739 = vadd.xlane.f32.xlu0 %v2708
      %v2740 = vpop.xlane.xlu0 %2739
      %2741 = vadd.xlane.f32.xlu0 %v2710
      %v2742 = vpop.xlane.xlu0 %2741
      %2743 = vadd.xlane.f32.xlu0 %v2712
      %v2744 = vpop.xlane.xlu0 %2743
      %2745 = vadd.xlane.f32.xlu0 %v2714
      %v2746 = vpop.xlane.xlu0 %2745
      %2747 = vadd.xlane.f32.xlu0 %v2716
      %v2748 = vpop.xlane.xlu0 %2747
      %2749 = vadd.xlane.f32.xlu0 %v2718
      %v2750 = vpop.xlane.xlu0 %2749
      %v2751 = vrcp.pop %v2720
      %v2752 = vrcp.pop %v2722
      %v2753 = vrcp.pop %v2724
      %v2754 = vrcp.pop %v2726
      %v2755 = vrcp.pop %v2728
      %v2756 = vrcp.pop %v2730
      %v2757 = vrcp.pop %v2732
      %v2758 = vrcp.pop %v2734
      %v2759 = vrcp.pop %v2736
      %v2760 = vrcp.pop %v2738
      %v2761 = vrcp.pop %v2740
      %v2762 = vrcp.pop %v2742
      %v2763 = vrcp.pop %v2744
      %v2764 = vrcp.pop %v2746
      %v2765 = vrcp.pop %v2748
      %v2766 = vrcp.pop %v2750
      %v2767 = vmul.f32 %v2688, %v2751
      %v2768 = vmul.f32 %v2690, %v2752
      %v2769 = vmul.f32 %v2692, %v2753
      %v2770 = vmul.f32 %v2694, %v2754
      %v2771 = vmul.f32 %v2696, %v2755
      %v2772 = vmul.f32 %v2698, %v2756
      %v2773 = vmul.f32 %v2700, %v2757
      %v2774 = vmul.f32 %v2702, %v2758
      %v2775 = vmul.f32 %v2704, %v2759
      %v2776 = vmul.f32 %v2706, %v2760
      %v2777 = vmul.f32 %v2708, %v2761
      %v2778 = vmul.f32 %v2710, %v2762
      %v2779 = vmul.f32 %v2712, %v2763
      %v2780 = vmul.f32 %v2714, %v2764
      %v2781 = vmul.f32 %v2716, %v2765
      %v2782 = vmul.f32 %v2718, %v2766
      %v2783 = vpack.c.bf16 %v2768, %v2767
      %v2784 = vpack.c.bf16 %v2770, %v2769
      %v2785 = vpack.c.bf16 %v2772, %v2771
      %v2786 = vpack.c.bf16 %v2774, %v2773
      %v2787 = vpack.c.bf16 %v2776, %v2775
      %v2788 = vpack.c.bf16 %v2778, %v2777
      %v2789 = vpack.c.bf16 %v2780, %v2779
      %v2790 = vpack.c.bf16 %v2782, %v2781
      %2791 = vrot.lane.b32.xlu0 %v1107, 40
      %v2792 = vpop.permute.xlu0 %2791
      %2793 = vrot.lane.b32.xlu0 %v1108, 40
      %v2794 = vpop.permute.xlu0 %2793
      %2795 = vrot.lane.b32.xlu0 %v1109, 40
      %v2796 = vpop.permute.xlu0 %2795
      %2797 = vrot.lane.b32.xlu0 %v1110, 40
      %v2798 = vpop.permute.xlu0 %2797
      %2799 = vrot.lane.b32.xlu0 %v1111, 40
      %v2800 = vpop.permute.xlu0 %2799
      %2801 = vrot.lane.b32.xlu0 %v1112, 40
      %v2802 = vpop.permute.xlu0 %2801
      %2803 = vrot.lane.b32.xlu0 %v1113, 40
      %v2804 = vpop.permute.xlu0 %2803
      %2805 = vrot.lane.b32.xlu0 %v1114, 40
      %v2806 = vpop.permute.xlu0 %2805
      %2815 = vmatprep.subr.bf16.mxu0 0
      %2816 = vmatpush1.bf16.msra.mxu0 %v2792
      %2817 = vmatprep.subr.bf16.mxu0 0
      %2818 = vmatpush1.bf16.msra.mxu0 %v2794
      %2819 = vmatprep.subr.bf16.mxu0 0
      %2820 = vmatpush1.bf16.msra.mxu0 %v2796
      %2821 = vmatprep.subr.bf16.mxu0 0
      %2822 = vmatpush1.bf16.msra.mxu0 %v2798
      %2823 = vmatprep.subr.bf16.mxu0 0
      %2824 = vmatpush1.bf16.msra.mxu0 %v2800
      %2825 = vmatprep.subr.bf16.mxu0 0
      %2826 = vmatpush1.bf16.msra.mxu0 %v2802
      %2827 = vmatprep.subr.bf16.mxu0 0
      %2828 = vmatpush1.bf16.msra.mxu0 %v2804
      %2829 = vmatprep.subr.bf16.mxu0 0
      %2830 = vmatpush1.bf16.msra.mxu0 %v2806
      %2831 = vmatprep.subr.bf16.mxu0 0
      %2832 = vmatpush1.bf16.msra.mxu0 0
      %2833 = vmatprep.subr.bf16.mxu0 0
      %2834 = vmatpush1.bf16.msra.mxu0 0
      %2835 = vmatprep.subr.bf16.mxu0 0
      %2836 = vmatpush1.bf16.msra.mxu0 0
      %2837 = vmatprep.subr.bf16.mxu0 0
      %2838 = vmatpush1.bf16.msra.mxu0 0
      %2839 = vmatprep.subr.bf16.mxu0 0
      %2840 = vmatpush1.bf16.msra.mxu0 0
      %2841 = vmatprep.subr.bf16.mxu0 0
      %2842 = vmatpush1.bf16.msra.mxu0 0
      %2843 = vmatprep.subr.bf16.mxu0 0
      %2844 = vmatpush1.bf16.msra.mxu0 0
      %2845 = vmatprep.subr.bf16.mxu0 0
      %2846 = vmatpush1.bf16.msra.mxu0 0
      %2847 = vmatprep.mubr.bf16.mxu0 0
      %2848 = vmatmul.mubr.bf16.gmra.mrb[0].mxu0 %v2783
      %v2849 = vpop.f32.mrb[0].mxu0
      %v2850 = vadd.f32 0.0, %v2849
      %v2851 = vpop.f32.mrb[0].mxu0
      %v2852 = vpop.f32.mrb[0].mxu0
      %v2853 = vadd.f32 0.0, %v2852
      %v2854 = vpop.f32.mrb[0].mxu0
      %2855 = vmatprep.mubr.bf16.mxu0 0
      %2856 = vmatmul.mubr.bf16.gmra.mrb[0].mxu0 %v2784
      %v2857 = vpop.f32.mrb[0].mxu0
      %v2858 = vadd.f32 0.0, %v2857
      %v2859 = vpop.f32.mrb[0].mxu0
      %v2860 = vpop.f32.mrb[0].mxu0
      %v2861 = vadd.f32 0.0, %v2860
      %v2862 = vpop.f32.mrb[0].mxu0
      %2863 = vmatprep.mubr.bf16.mxu0 0
      %2864 = vmatmul.mubr.bf16.gmra.mrb[0].mxu0 %v2785
      %v2865 = vpop.f32.mrb[0].mxu0
      %v2866 = vadd.f32 0.0, %v2865
      %v2867 = vpop.f32.mrb[0].mxu0
      %v2868 = vpop.f32.mrb[0].mxu0
      %v2869 = vadd.f32 0.0, %v2868
      %v2870 = vpop.f32.mrb[0].mxu0
      %2871 = vmatprep.mubr.bf16.mxu0 0
      %2872 = vmatmul.mubr.bf16.gmra.mrb[0].mxu0 %v2786
      %v2873 = vpop.f32.mrb[0].mxu0
      %v2874 = vadd.f32 0.0, %v2873
      %v2875 = vpop.f32.mrb[0].mxu0
      %v2876 = vpop.f32.mrb[0].mxu0
      %v2877 = vadd.f32 0.0, %v2876
      %v2878 = vpop.f32.mrb[0].mxu0
      %2879 = vmatprep.mubr.bf16.mxu0 0
      %2880 = vmatmul.mubr.bf16.gmra.mrb[0].mxu0 %v2787
      %v2881 = vpop.f32.mrb[0].mxu0
      %v2882 = vadd.f32 0.0, %v2881
      %v2883 = vpop.f32.mrb[0].mxu0
      %v2884 = vpop.f32.mrb[0].mxu0
      %v2885 = vadd.f32 0.0, %v2884
      %v2886 = vpop.f32.mrb[0].mxu0
      %2887 = vmatprep.mubr.bf16.mxu0 0
      %2888 = vmatmul.mubr.bf16.gmra.mrb[0].mxu0 %v2788
      %v2889 = vpop.f32.mrb[0].mxu0
      %v2890 = vadd.f32 0.0, %v2889
      %v2891 = vpop.f32.mrb[0].mxu0
      %v2892 = vpop.f32.mrb[0].mxu0
      %v2893 = vadd.f32 0.0, %v2892
      %v2894 = vpop.f32.mrb[0].mxu0
      %2895 = vmatprep.mubr.bf16.mxu0 0
      %2896 = vmatmul.mubr.bf16.gmra.mrb[0].mxu0 %v2789
      %v2897 = vpop.f32.mrb[0].mxu0
      %v2898 = vadd.f32 0.0, %v2897
      %v2899 = vpop.f32.mrb[0].mxu0
      %v2900 = vpop.f32.mrb[0].mxu0
      %v2901 = vadd.f32 0.0, %v2900
      %v2902 = vpop.f32.mrb[0].mxu0
      %2903 = vmatprep.mubr.bf16.mxu0 0
      %2904 = vmatmul.mubr.bf16.gmra.mrb[0].mxu0 %v2790
      %v2905 = vpop.f32.mrb[0].mxu0
      %v2906 = vadd.f32 0.0, %v2905
      %v2907 = vpop.f32.mrb[0].mxu0
      %v2908 = vpop.f32.mrb[0].mxu0
      %v2909 = vadd.f32 0.0, %v2908
      %v2910 = vpop.f32.mrb[0].mxu0
      %2911 = vdwg.mxu0
      %2928 = vrot.lane.b32.xlu0 %v1950, 8
      %v2929 = vpop.permute.xlu0 %2928
      %2930 = vrot.lane.b32.xlu0 %v1953, 8
      %v2931 = vpop.permute.xlu0 %2930
      %2932 = vrot.lane.b32.xlu0 %v1958, 8
      %v2933 = vpop.permute.xlu0 %2932
      %2934 = vrot.lane.b32.xlu0 %v1961, 8
      %v2935 = vpop.permute.xlu0 %2934
      %2936 = vrot.lane.b32.xlu0 %v1966, 8
      %v2937 = vpop.permute.xlu0 %2936
      %2938 = vrot.lane.b32.xlu0 %v1969, 8
      %v2939 = vpop.permute.xlu0 %2938
      %2940 = vrot.lane.b32.xlu0 %v1974, 8
      %v2941 = vpop.permute.xlu0 %2940
      %2942 = vrot.lane.b32.xlu0 %v1977, 8
      %v2943 = vpop.permute.xlu0 %2942
      %2944 = vrot.lane.b32.xlu0 %v1982, 8
      %v2945 = vpop.permute.xlu0 %2944
      %2946 = vrot.lane.b32.xlu0 %v1985, 8
      %v2947 = vpop.permute.xlu0 %2946
      %2948 = vrot.lane.b32.xlu0 %v1990, 8
      %v2949 = vpop.permute.xlu0 %2948
      %2950 = vrot.lane.b32.xlu0 %v1993, 8
      %v2951 = vpop.permute.xlu0 %2950
      %2952 = vrot.lane.b32.xlu0 %v1998, 8
      %v2953 = vpop.permute.xlu0 %2952
      %2954 = vrot.lane.b32.xlu0 %v2001, 8
      %v2955 = vpop.permute.xlu0 %2954
      %2956 = vrot.lane.b32.xlu0 %v2006, 8
      %v2957 = vpop.permute.xlu0 %2956
      %2958 = vrot.lane.b32.xlu0 %v2009, 8
      %v2959 = vpop.permute.xlu0 %2958
      %2992 = vrot.lane.b32.xlu0 %v2400, 16
      %v2993 = vpop.permute.xlu0 %2992
      %2994 = vrot.lane.b32.xlu0 %v2403, 16
      %v2995 = vpop.permute.xlu0 %2994
      %2996 = vrot.lane.b32.xlu0 %v2408, 16
      %v2997 = vpop.permute.xlu0 %2996
      %2998 = vrot.lane.b32.xlu0 %v2411, 16
      %v2999 = vpop.permute.xlu0 %2998
      %3000 = vrot.lane.b32.xlu0 %v2416, 16
      %v3001 = vpop.permute.xlu0 %3000
      %3002 = vrot.lane.b32.xlu0 %v2419, 16
      %v3003 = vpop.permute.xlu0 %3002
      %3004 = vrot.lane.b32.xlu0 %v2424, 16
      %v3005 = vpop.permute.xlu0 %3004
      %3006 = vrot.lane.b32.xlu0 %v2427, 16
      %v3007 = vpop.permute.xlu0 %3006
      %3008 = vrot.lane.b32.xlu0 %v2432, 16
      %v3009 = vpop.permute.xlu0 %3008
      %3010 = vrot.lane.b32.xlu0 %v2435, 16
      %v3011 = vpop.permute.xlu0 %3010
      %3012 = vrot.lane.b32.xlu0 %v2440, 16
      %v3013 = vpop.permute.xlu0 %3012
      %3014 = vrot.lane.b32.xlu0 %v2443, 16
      %v3015 = vpop.permute.xlu0 %3014
      %3016 = vrot.lane.b32.xlu0 %v2448, 16
      %v3017 = vpop.permute.xlu0 %3016
      %3018 = vrot.lane.b32.xlu0 %v2451, 16
      %v3019 = vpop.permute.xlu0 %3018
      %3020 = vrot.lane.b32.xlu0 %v2456, 16
      %v3021 = vpop.permute.xlu0 %3020
      %3022 = vrot.lane.b32.xlu0 %v2459, 16
      %v3023 = vpop.permute.xlu0 %3022
      %3056 = vrot.lane.b32.xlu0 %v2850, 24
      %v3057 = vpop.permute.xlu0 %3056
      %3058 = vrot.lane.b32.xlu0 %v2853, 24
      %v3059 = vpop.permute.xlu0 %3058
      %3060 = vrot.lane.b32.xlu0 %v2858, 24
      %v3061 = vpop.permute.xlu0 %3060
      %3062 = vrot.lane.b32.xlu0 %v2861, 24
      %v3063 = vpop.permute.xlu0 %3062
      %3064 = vrot.lane.b32.xlu0 %v2866, 24
      %v3065 = vpop.permute.xlu0 %3064
      %3066 = vrot.lane.b32.xlu0 %v2869, 24
      %v3067 = vpop.permute.xlu0 %3066
      %3068 = vrot.lane.b32.xlu0 %v2874, 24
      %v3069 = vpop.permute.xlu0 %3068
      %3070 = vrot.lane.b32.xlu0 %v2877, 24
      %v3071 = vpop.permute.xlu0 %3070
      %3072 = vrot.lane.b32.xlu0 %v2882, 24
      %v3073 = vpop.permute.xlu0 %3072
      %3074 = vrot.lane.b32.xlu0 %v2885, 24
      %v3075 = vpop.permute.xlu0 %3074
      %3076 = vrot.lane.b32.xlu0 %v2890, 24
      %v3077 = vpop.permute.xlu0 %3076
      %3078 = vrot.lane.b32.xlu0 %v2893, 24
      %v3079 = vpop.permute.xlu0 %3078
      %3080 = vrot.lane.b32.xlu0 %v2898, 24
      %v3081 = vpop.permute.xlu0 %3080
      %3082 = vrot.lane.b32.xlu0 %v2901, 24
      %v3083 = vpop.permute.xlu0 %3082
      %3084 = vrot.lane.b32.xlu0 %v2906, 24
      %v3085 = vpop.permute.xlu0 %3084
      %3086 = vrot.lane.b32.xlu0 %v2909, 24
      %v3087 = vpop.permute.xlu0 %3086
      %v3104 = vsel %vm1143, %v1500, %v2929
      %v3105 = vsel %vm1143, %v1503, %v2931
      %v3106 = vsel %vm1143, %v1508, %v2933
      %v3107 = vsel %vm1143, %v1511, %v2935
      %v3108 = vsel %vm1143, %v1516, %v2937
      %v3109 = vsel %vm1143, %v1519, %v2939
      %v3110 = vsel %vm1143, %v1524, %v2941
      %v3111 = vsel %vm1143, %v1527, %v2943
      %v3112 = vsel %vm1143, %v1532, %v2945
      %v3113 = vsel %vm1143, %v1535, %v2947
      %v3114 = vsel %vm1143, %v1540, %v2949
      %v3115 = vsel %vm1143, %v1543, %v2951
      %v3116 = vsel %vm1143, %v1548, %v2953
      %v3117 = vsel %vm1143, %v1551, %v2955
      %v3118 = vsel %vm1143, %v1556, %v2957
      %v3119 = vsel %vm1143, %v1559, %v2959
      %vm3120 = vcmask 130048
      %v3121 = vsel %vm3120, %v3104, %v2993
      %v3122 = vsel %vm3120, %v3105, %v2995
      %v3123 = vsel %vm3120, %v3106, %v2997
      %v3124 = vsel %vm3120, %v3107, %v2999
      %v3125 = vsel %vm3120, %v3108, %v3001
      %v3126 = vsel %vm3120, %v3109, %v3003
      %v3127 = vsel %vm3120, %v3110, %v3005
      %v3128 = vsel %vm3120, %v3111, %v3007
      %v3129 = vsel %vm3120, %v3112, %v3009
      %v3130 = vsel %vm3120, %v3113, %v3011
      %v3131 = vsel %vm3120, %v3114, %v3013
      %v3132 = vsel %vm3120, %v3115, %v3015
      %v3133 = vsel %vm3120, %v3116, %v3017
      %v3134 = vsel %vm3120, %v3117, %v3019
      %v3135 = vsel %vm3120, %v3118, %v3021
      %v3136 = vsel %vm3120, %v3119, %v3023
      %vm3137 = vcmask 195584
      %v3138 = vsel %vm3137, %v3121, %v3057
      %v3139 = vsel %vm3137, %v3122, %v3059
      %v3140 = vsel %vm3137, %v3123, %v3061
      %v3141 = vsel %vm3137, %v3124, %v3063
      %v3142 = vsel %vm3137, %v3125, %v3065
      %v3143 = vsel %vm3137, %v3126, %v3067
      %v3144 = vsel %vm3137, %v3127, %v3069
      %v3145 = vsel %vm3137, %v3128, %v3071
      %v3146 = vsel %vm3137, %v3129, %v3073
      %v3147 = vsel %vm3137, %v3130, %v3075
      %v3148 = vsel %vm3137, %v3131, %v3077
      %v3149 = vsel %vm3137, %v3132, %v3079
      %v3150 = vsel %vm3137, %v3133, %v3081
      %v3151 = vsel %vm3137, %v3134, %v3083
      %v3152 = vsel %vm3137, %v3135, %v3085
      %v3153 = vsel %vm3137, %v3136, %v3087
      %v3154 = vpack.c.bf16 %v3139, %v3138
      %v3155 = vpack.c.bf16 %v3141, %v3140
      %v3156 = vpack.c.bf16 %v3143, %v3142
      %v3157 = vpack.c.bf16 %v3145, %v3144
      %v3158 = vpack.c.bf16 %v3147, %v3146
      %v3159 = vpack.c.bf16 %v3149, %v3148
      %v3160 = vpack.c.bf16 %v3151, %v3150
      %v3161 = vpack.c.bf16 %v3153, %v3152
      %v3162 = vld [vmem:[%s614] sm:$0xf]
      %v3163 = vld [vmem:[%s614 + $0x4] sm:$0xf]
      %v3164 = vld [vmem:[%s614 + $0x8] sm:$0xf]
      %v3165 = vld [vmem:[%s614 + $0xc] sm:$0xf]
      %v3166 = vld [vmem:[%s617] sm:$0x1]
      %v3168 = vlaneseq
      %v3169 = vshrl.u32 %v3168, 7
      %v3170 = vsub.s32 0, %v3169
      %v3171 = vrot.slane %v3166, %v3170
      %v3177 = vunpack.c.l.b16 %v3162
      %v3178 = vunpack.c.l.b16 %v3163
      %v3179 = vunpack.c.l.b16 %v3164
      %v3180 = vunpack.c.l.b16 %v3165
      %v3181 = vpack.c.b16 %v3178, %v3177
      %v3182 = vpack.c.b16 %v3180, %v3179
      %v3186 = vsel %vm701, %v3154, 0
      %v3189 = vsel %vm701, %v3155, 0
      %v3192 = vsel %vm701, %v3156, 0
      %v3195 = vsel %vm701, %v3157, 0
      %v3198 = vsel %vm701, %v3158, 0
      %v3201 = vsel %vm701, %v3159, 0
      %v3204 = vsel %vm701, %v3160, 0
      %v3207 = vsel %vm701, %v3161, 0
      %3209 = vmatprep.subr.bf16.mxu0 0
      %3210 = vmatpush1.bf16.msra.mxu0 %v3181
      %3211 = vmatprep.subr.bf16.mxu0 0
      %3212 = vmatpush1.bf16.msra.mxu0 %v3182
      %3213 = vmatprep.subr.bf16.mxu0 0
      %3214 = vmatpush1.bf16.msra.mxu0 0
      %3215 = vmatprep.subr.bf16.mxu0 0
      %3216 = vmatpush1.bf16.msra.mxu0 0
      %3217 = vmatprep.subr.bf16.mxu0 0
      %3218 = vmatpush1.bf16.msra.mxu0 0
      %3219 = vmatprep.subr.bf16.mxu0 0
      %3220 = vmatpush1.bf16.msra.mxu0 0
      %3221 = vmatprep.subr.bf16.mxu0 0
      %3222 = vmatpush1.bf16.msra.mxu0 0
      %3223 = vmatprep.subr.bf16.mxu0 0
      %3224 = vmatpush1.bf16.msra.mxu0 0
      %3225 = vmatprep.subr.bf16.mxu0 0
      %3226 = vmatpush1.bf16.msra.mxu0 0
      %3227 = vmatprep.subr.bf16.mxu0 0
      %3228 = vmatpush1.bf16.msra.mxu0 0
      %3229 = vmatprep.subr.bf16.mxu0 0
      %3230 = vmatpush1.bf16.msra.mxu0 0
      %3231 = vmatprep.subr.bf16.mxu0 0
      %3232 = vmatpush1.bf16.msra.mxu0 0
      %3233 = vmatprep.subr.bf16.mxu0 0
      %3234 = vmatpush1.bf16.msra.mxu0 0
      %3235 = vmatprep.subr.bf16.mxu0 0
      %3236 = vmatpush1.bf16.msra.mxu0 0
      %3237 = vmatprep.subr.bf16.mxu0 0
      %3238 = vmatpush1.bf16.msra.mxu0 0
      %3239 = vmatprep.subr.bf16.mxu0 0
      %3240 = vmatpush1.bf16.msra.mxu0 0
      %3241 = vmatprep.mubr.bf16.mxu0 0
      %3242 = vmatmul.mubr.bf16.gmra.mrb[0].mxu0 %v3186
      %v3243 = vpop.f32.mrb[0].mxu0
      %v3244 = vadd.f32 %v3171, %v3243
      %v3245 = vpop.f32.mrb[0].mxu0
      %v3246 = vpop.f32.mrb[0].mxu0
      %v3247 = vadd.f32 %v3171, %v3246
      %v3248 = vpop.f32.mrb[0].mxu0
      %3249 = vmatprep.mubr.bf16.mxu0 0
      %3250 = vmatmul.mubr.bf16.gmra.mrb[0].mxu0 %v3189
      %v3251 = vpop.f32.mrb[0].mxu0
      %v3252 = vadd.f32 %v3171, %v3251
      %v3253 = vpop.f32.mrb[0].mxu0
      %v3254 = vpop.f32.mrb[0].mxu0
      %v3255 = vadd.f32 %v3171, %v3254
      %v3256 = vpop.f32.mrb[0].mxu0
      %3257 = vmatprep.mubr.bf16.mxu0 0
      %3258 = vmatmul.mubr.bf16.gmra.mrb[0].mxu0 %v3192
      %v3259 = vpop.f32.mrb[0].mxu0
      %v3260 = vadd.f32 %v3171, %v3259
      %v3261 = vpop.f32.mrb[0].mxu0
      %v3262 = vpop.f32.mrb[0].mxu0
      %v3263 = vadd.f32 %v3171, %v3262
      %v3264 = vpop.f32.mrb[0].mxu0
      %3265 = vmatprep.mubr.bf16.mxu0 0
      %3266 = vmatmul.mubr.bf16.gmra.mrb[0].mxu0 %v3195
      %v3267 = vpop.f32.mrb[0].mxu0
      %v3268 = vadd.f32 %v3171, %v3267
      %v3269 = vpop.f32.mrb[0].mxu0
      %v3270 = vpop.f32.mrb[0].mxu0
      %v3271 = vadd.f32 %v3171, %v3270
      %v3272 = vpop.f32.mrb[0].mxu0
      %3273 = vmatprep.mubr.bf16.mxu0 0
      %3274 = vmatmul.mubr.bf16.gmra.mrb[0].mxu0 %v3198
      %v3275 = vpop.f32.mrb[0].mxu0
      %v3276 = vadd.f32 %v3171, %v3275
      %v3277 = vpop.f32.mrb[0].mxu0
      %v3278 = vpop.f32.mrb[0].mxu0
      %v3279 = vadd.f32 %v3171, %v3278
      %v3280 = vpop.f32.mrb[0].mxu0
      %3281 = vmatprep.mubr.bf16.mxu0 0
      %3282 = vmatmul.mubr.bf16.gmra.mrb[0].mxu0 %v3201
      %v3283 = vpop.f32.mrb[0].mxu0
      %v3284 = vadd.f32 %v3171, %v3283
      %v3285 = vpop.f32.mrb[0].mxu0
      %v3286 = vpop.f32.mrb[0].mxu0
      %v3287 = vadd.f32 %v3171, %v3286
      %v3288 = vpop.f32.mrb[0].mxu0
      %3289 = vmatprep.mubr.bf16.mxu0 0
      %3290 = vmatmul.mubr.bf16.gmra.mrb[0].mxu0 %v3204
      %v3291 = vpop.f32.mrb[0].mxu0
      %v3292 = vadd.f32 %v3171, %v3291
      %v3293 = vpop.f32.mrb[0].mxu0
      %v3294 = vpop.f32.mrb[0].mxu0
      %v3295 = vadd.f32 %v3171, %v3294
      %v3296 = vpop.f32.mrb[0].mxu0
      %3297 = vmatprep.mubr.bf16.mxu0 0
      %3298 = vmatmul.mubr.bf16.gmra.mrb[0].mxu0 %v3207
      %v3299 = vpop.f32.mrb[0].mxu0
      %v3300 = vadd.f32 %v3171, %v3299
      %v3301 = vpop.f32.mrb[0].mxu0
      %v3302 = vpop.f32.mrb[0].mxu0
      %v3303 = vadd.f32 %v3171, %v3302
      %v3304 = vpop.f32.mrb[0].mxu0
      %3305 = vdwg.mxu0
      %v3306 = vadd.f32 %v683, %v3244
      %v3307 = vadd.f32 %v684, %v3247
      %v3308 = vadd.f32 %v685, %v3252
      %v3309 = vadd.f32 %v686, %v3255
      %v3310 = vadd.f32 %v687, %v3260
      %v3311 = vadd.f32 %v688, %v3263
      %v3312 = vadd.f32 %v689, %v3268
      %v3313 = vadd.f32 %v690, %v3271
      %v3314 = vadd.f32 %v691, %v3276
      %v3315 = vadd.f32 %v692, %v3279
      %v3316 = vadd.f32 %v693, %v3284
      %v3317 = vadd.f32 %v694, %v3287
      %v3318 = vadd.f32 %v695, %v3292
      %v3319 = vadd.f32 %v696, %v3295
      %v3320 = vadd.f32 %v697, %v3300
      %v3321 = vadd.f32 %v698, %v3303
      %v3322 = vld [vmem:[%s620] sm:$0x1]
      %v3323 = vld [vmem:[%s623] sm:$0x1]
      %v3324 = vsel %vm701, %v3306, 0.0
      %3325 = vadd.xlane.f32.xlu0 %v3324
      %v3326 = vpop.xlane.xlu0 %3325
      %v3327 = vsel %vm701, %v3307, 0.0
      %3328 = vadd.xlane.f32.xlu0 %v3327
      %v3329 = vpop.xlane.xlu0 %3328
      %v3330 = vsel %vm701, %v3308, 0.0
      %3331 = vadd.xlane.f32.xlu0 %v3330
      %v3332 = vpop.xlane.xlu0 %3331
      %v3333 = vsel %vm701, %v3309, 0.0
      %3334 = vadd.xlane.f32.xlu0 %v3333
      %v3335 = vpop.xlane.xlu0 %3334
      %v3336 = vsel %vm701, %v3310, 0.0
      %3337 = vadd.xlane.f32.xlu0 %v3336
      %v3338 = vpop.xlane.xlu0 %3337
      %v3339 = vsel %vm701, %v3311, 0.0
      %3340 = vadd.xlane.f32.xlu0 %v3339
      %v3341 = vpop.xlane.xlu0 %3340
      %v3342 = vsel %vm701, %v3312, 0.0
      %3343 = vadd.xlane.f32.xlu0 %v3342
      %v3344 = vpop.xlane.xlu0 %3343
      %v3345 = vsel %vm701, %v3313, 0.0
      %3346 = vadd.xlane.f32.xlu0 %v3345
      %v3347 = vpop.xlane.xlu0 %3346
      %v3348 = vsel %vm701, %v3314, 0.0
      %3349 = vadd.xlane.f32.xlu0 %v3348
      %v3350 = vpop.xlane.xlu0 %3349
      %v3351 = vsel %vm701, %v3315, 0.0
      %3352 = vadd.xlane.f32.xlu0 %v3351
      %v3353 = vpop.xlane.xlu0 %3352
      %v3354 = vsel %vm701, %v3316, 0.0
      %3355 = vadd.xlane.f32.xlu0 %v3354
      %v3356 = vpop.xlane.xlu0 %3355
      %v3357 = vsel %vm701, %v3317, 0.0
      %3358 = vadd.xlane.f32.xlu0 %v3357
      %v3359 = vpop.xlane.xlu0 %3358
      %v3360 = vsel %vm701, %v3318, 0.0
      %3361 = vadd.xlane.f32.xlu0 %v3360
      %v3362 = vpop.xlane.xlu0 %3361
      %v3363 = vsel %vm701, %v3319, 0.0
      %3364 = vadd.xlane.f32.xlu0 %v3363
      %v3365 = vpop.xlane.xlu0 %3364
      %v3366 = vsel %vm701, %v3320, 0.0
      %3367 = vadd.xlane.f32.xlu0 %v3366
      %v3368 = vpop.xlane.xlu0 %3367
      %v3369 = vsel %vm701, %v3321, 0.0
      %3370 = vadd.xlane.f32.xlu0 %v3369
      %v3371 = vpop.xlane.xlu0 %3370
      %v3372 = vmul.f32 %v3326, %v750
      %v3373 = vmul.f32 %v3329, %v750
      %v3374 = vmul.f32 %v3332, %v750
      %v3375 = vmul.f32 %v3335, %v750
      %v3376 = vmul.f32 %v3338, %v750
      %v3377 = vmul.f32 %v3341, %v750
      %v3378 = vmul.f32 %v3344, %v750
      %v3379 = vmul.f32 %v3347, %v750
      %v3380 = vmul.f32 %v3350, %v750
      %v3381 = vmul.f32 %v3353, %v750
      %v3382 = vmul.f32 %v3356, %v750
      %v3383 = vmul.f32 %v3359, %v750
      %v3384 = vmul.f32 %v3362, %v750
      %v3385 = vmul.f32 %v3365, %v750
      %v3386 = vmul.f32 %v3368, %v750
      %v3387 = vmul.f32 %v3371, %v750
      %v3388 = vsub.f32 %v3306, %v3372
      %v3389 = vsub.f32 %v3307, %v3373
      %v3390 = vsub.f32 %v3308, %v3374
      %v3391 = vsub.f32 %v3309, %v3375
      %v3392 = vsub.f32 %v3310, %v3376
      %v3393 = vsub.f32 %v3311, %v3377
      %v3394 = vsub.f32 %v3312, %v3378
      %v3395 = vsub.f32 %v3313, %v3379
      %v3396 = vsub.f32 %v3314, %v3380
      %v3397 = vsub.f32 %v3315, %v3381
      %v3398 = vsub.f32 %v3316, %v3382
      %v3399 = vsub.f32 %v3317, %v3383
      %v3400 = vsub.f32 %v3318, %v3384
      %v3401 = vsub.f32 %v3319, %v3385
      %v3402 = vsub.f32 %v3320, %v3386
      %v3403 = vsub.f32 %v3321, %v3387
      %v3404 = vmul.f32 %v3388, %v3388
      %v3405 = vmul.f32 %v3389, %v3389
      %v3406 = vmul.f32 %v3390, %v3390
      %v3407 = vmul.f32 %v3391, %v3391
      %v3408 = vmul.f32 %v3392, %v3392
      %v3409 = vmul.f32 %v3393, %v3393
      %v3410 = vmul.f32 %v3394, %v3394
      %v3411 = vmul.f32 %v3395, %v3395
      %v3412 = vmul.f32 %v3396, %v3396
      %v3413 = vmul.f32 %v3397, %v3397
      %v3414 = vmul.f32 %v3398, %v3398
      %v3415 = vmul.f32 %v3399, %v3399
      %v3416 = vmul.f32 %v3400, %v3400
      %v3417 = vmul.f32 %v3401, %v3401
      %v3418 = vmul.f32 %v3402, %v3402
      %v3419 = vmul.f32 %v3403, %v3403
      %v3420 = vsel %vm701, %v3404, 0.0
      %3421 = vadd.xlane.f32.xlu0 %v3420
      %v3422 = vpop.xlane.xlu0 %3421
      %v3423 = vsel %vm701, %v3405, 0.0
      %3424 = vadd.xlane.f32.xlu0 %v3423
      %v3425 = vpop.xlane.xlu0 %3424
      %v3426 = vsel %vm701, %v3406, 0.0
      %3427 = vadd.xlane.f32.xlu0 %v3426
      %v3428 = vpop.xlane.xlu0 %3427
      %v3429 = vsel %vm701, %v3407, 0.0
      %3430 = vadd.xlane.f32.xlu0 %v3429
      %v3431 = vpop.xlane.xlu0 %3430
      %v3432 = vsel %vm701, %v3408, 0.0
      %3433 = vadd.xlane.f32.xlu0 %v3432
      %v3434 = vpop.xlane.xlu0 %3433
      %v3435 = vsel %vm701, %v3409, 0.0
      %3436 = vadd.xlane.f32.xlu0 %v3435
      %v3437 = vpop.xlane.xlu0 %3436
      %v3438 = vsel %vm701, %v3410, 0.0
      %3439 = vadd.xlane.f32.xlu0 %v3438
      %v3440 = vpop.xlane.xlu0 %3439
      %v3441 = vsel %vm701, %v3411, 0.0
      %3442 = vadd.xlane.f32.xlu0 %v3441
      %v3443 = vpop.xlane.xlu0 %3442
      %v3444 = vsel %vm701, %v3412, 0.0
      %3445 = vadd.xlane.f32.xlu0 %v3444
      %v3446 = vpop.xlane.xlu0 %3445
      %v3447 = vsel %vm701, %v3413, 0.0
      %3448 = vadd.xlane.f32.xlu0 %v3447
      %v3449 = vpop.xlane.xlu0 %3448
      %v3450 = vsel %vm701, %v3414, 0.0
      %3451 = vadd.xlane.f32.xlu0 %v3450
      %v3452 = vpop.xlane.xlu0 %3451
      %v3453 = vsel %vm701, %v3415, 0.0
      %3454 = vadd.xlane.f32.xlu0 %v3453
      %v3455 = vpop.xlane.xlu0 %3454
      %v3456 = vsel %vm701, %v3416, 0.0
      %3457 = vadd.xlane.f32.xlu0 %v3456
      %v3458 = vpop.xlane.xlu0 %3457
      %v3459 = vsel %vm701, %v3417, 0.0
      %3460 = vadd.xlane.f32.xlu0 %v3459
      %v3461 = vpop.xlane.xlu0 %3460
      %v3462 = vsel %vm701, %v3418, 0.0
      %3463 = vadd.xlane.f32.xlu0 %v3462
      %v3464 = vpop.xlane.xlu0 %3463
      %v3465 = vsel %vm701, %v3419, 0.0
      %3466 = vadd.xlane.f32.xlu0 %v3465
      %v3467 = vpop.xlane.xlu0 %3466
      %v3468 = vmul.f32 %v3422, %v750
      %v3469 = vmul.f32 %v3425, %v750
      %v3470 = vmul.f32 %v3428, %v750
      %v3471 = vmul.f32 %v3431, %v750
      %v3472 = vmul.f32 %v3434, %v750
      %v3473 = vmul.f32 %v3437, %v750
      %v3474 = vmul.f32 %v3440, %v750
      %v3475 = vmul.f32 %v3443, %v750
      %v3476 = vmul.f32 %v3446, %v750
      %v3477 = vmul.f32 %v3449, %v750
      %v3478 = vmul.f32 %v3452, %v750
      %v3479 = vmul.f32 %v3455, %v750
      %v3480 = vmul.f32 %v3458, %v750
      %v3481 = vmul.f32 %v3461, %v750
      %v3482 = vmul.f32 %v3464, %v750
      %v3483 = vmul.f32 %v3467, %v750
      %v3484 = vadd.f32 %v3468, 1e-05
      %v3485 = vadd.f32 %v3469, 1e-05
      %v3486 = vadd.f32 %v3470, 1e-05
      %v3487 = vadd.f32 %v3471, 1e-05
      %v3488 = vadd.f32 %v3472, 1e-05
      %v3489 = vadd.f32 %v3473, 1e-05
      %v3490 = vadd.f32 %v3474, 1e-05
      %v3491 = vadd.f32 %v3475, 1e-05
      %v3492 = vadd.f32 %v3476, 1e-05
      %v3493 = vadd.f32 %v3477, 1e-05
      %v3494 = vadd.f32 %v3478, 1e-05
      %v3495 = vadd.f32 %v3479, 1e-05
      %v3496 = vadd.f32 %v3480, 1e-05
      %v3497 = vadd.f32 %v3481, 1e-05
      %v3498 = vadd.f32 %v3482, 1e-05
      %v3499 = vadd.f32 %v3483, 1e-05
      %v3500 = vrsqrt.pop %v3484
      %v3501 = vrsqrt.pop %v3485
      %v3502 = vrsqrt.pop %v3486
      %v3503 = vrsqrt.pop %v3487
      %v3504 = vrsqrt.pop %v3488
      %v3505 = vrsqrt.pop %v3489
      %v3506 = vrsqrt.pop %v3490
      %v3507 = vrsqrt.pop %v3491
      %v3508 = vrsqrt.pop %v3492
      %v3509 = vrsqrt.pop %v3493
      %v3510 = vrsqrt.pop %v3494
      %v3511 = vrsqrt.pop %v3495
      %v3512 = vrsqrt.pop %v3496
      %v3513 = vrsqrt.pop %v3497
      %v3514 = vrsqrt.pop %v3498
      %v3515 = vrsqrt.pop %v3499
      %v3516 = vmul.f32 %v3388, %v3500
      %v3517 = vmul.f32 %v3389, %v3501
      %v3518 = vmul.f32 %v3390, %v3502
      %v3519 = vmul.f32 %v3391, %v3503
      %v3520 = vmul.f32 %v3392, %v3504
      %v3521 = vmul.f32 %v3393, %v3505
      %v3522 = vmul.f32 %v3394, %v3506
      %v3523 = vmul.f32 %v3395, %v3507
      %v3524 = vmul.f32 %v3396, %v3508
      %v3525 = vmul.f32 %v3397, %v3509
      %v3526 = vmul.f32 %v3398, %v3510
      %v3527 = vmul.f32 %v3399, %v3511
      %v3528 = vmul.f32 %v3400, %v3512
      %v3529 = vmul.f32 %v3401, %v3513
      %v3530 = vmul.f32 %v3402, %v3514
      %v3531 = vmul.f32 %v3403, %v3515
      %v3533 = vlaneseq
      %v3534 = vshrl.u32 %v3533, 7
      %v3535 = vsub.s32 0, %v3534
      %v3536 = vrot.slane %v3322, %v3535
      %v3538 = vmul.f32 %v3516, %v3536
      %v3539 = vmul.f32 %v3517, %v3536
      %v3540 = vmul.f32 %v3518, %v3536
      %v3541 = vmul.f32 %v3519, %v3536
      %v3542 = vmul.f32 %v3520, %v3536
      %v3543 = vmul.f32 %v3521, %v3536
      %v3544 = vmul.f32 %v3522, %v3536
      %v3545 = vmul.f32 %v3523, %v3536
      %v3546 = vmul.f32 %v3524, %v3536
      %v3547 = vmul.f32 %v3525, %v3536
      %v3548 = vmul.f32 %v3526, %v3536
      %v3549 = vmul.f32 %v3527, %v3536
      %v3550 = vmul.f32 %v3528, %v3536
      %v3551 = vmul.f32 %v3529, %v3536
      %v3552 = vmul.f32 %v3530, %v3536
      %v3553 = vmul.f32 %v3531, %v3536
      %v3555 = vlaneseq
      %v3556 = vshrl.u32 %v3555, 7
      %v3557 = vsub.s32 0, %v3556
      %v3558 = vrot.slane %v3323, %v3557
      %v3560 = vadd.f32 %v3538, %v3558
      %v3561 = vadd.f32 %v3539, %v3558
      %v3562 = vadd.f32 %v3540, %v3558
      %v3563 = vadd.f32 %v3541, %v3558
      %v3564 = vadd.f32 %v3542, %v3558
      %v3565 = vadd.f32 %v3543, %v3558
      %v3566 = vadd.f32 %v3544, %v3558
      %v3567 = vadd.f32 %v3545, %v3558
      %v3568 = vadd.f32 %v3546, %v3558
      %v3569 = vadd.f32 %v3547, %v3558
      %v3570 = vadd.f32 %v3548, %v3558
      %v3571 = vadd.f32 %v3549, %v3558
      %v3572 = vadd.f32 %v3550, %v3558
      %v3573 = vadd.f32 %v3551, %v3558
      %v3574 = vadd.f32 %v3552, %v3558
      %v3575 = vadd.f32 %v3553, %v3558
      %v3576 = vpack.c.bf16 %v3561, %v3560
      %v3577 = vpack.c.bf16 %v3563, %v3562
      %v3578 = vpack.c.bf16 %v3565, %v3564
      %v3579 = vpack.c.bf16 %v3567, %v3566
      %v3580 = vpack.c.bf16 %v3569, %v3568
      %v3581 = vpack.c.bf16 %v3571, %v3570
      %v3582 = vpack.c.bf16 %v3573, %v3572
      %v3583 = vpack.c.bf16 %v3575, %v3574
      %v3584 = vld [vmem:[%s628] sm:$0xf]
      %v3585 = vld [vmem:[%s628 + $0x4] sm:$0xf]
      %v3586 = vld [vmem:[%s628 + $0x8] sm:$0xf]
      %v3587 = vld [vmem:[%s628 + $0xc] sm:$0xf]
      %v3588 = vld [vmem:[%s631] sm:$0x1]
      %v3590 = vlaneseq
      %v3591 = vshrl.u32 %v3590, 7
      %v3592 = vsub.s32 0, %v3591
      %v3593 = vrot.slane %v3588, %v3592
      %v3599 = vunpack.c.l.b16 %v3584
      %v3600 = vunpack.c.l.b16 %v3585
      %v3601 = vunpack.c.l.b16 %v3586
      %v3602 = vunpack.c.l.b16 %v3587
      %v3603 = vpack.c.b16 %v3600, %v3599
      %v3604 = vpack.c.b16 %v3602, %v3601
      %v3608 = vsel %vm701, %v3576, 0
      %v3611 = vsel %vm701, %v3577, 0
      %v3614 = vsel %vm701, %v3578, 0
      %v3617 = vsel %vm701, %v3579, 0
      %v3620 = vsel %vm701, %v3580, 0
      %v3623 = vsel %vm701, %v3581, 0
      %v3626 = vsel %vm701, %v3582, 0
      %v3629 = vsel %vm701, %v3583, 0
      %3631 = vmatprep.subr.bf16.mxu0 0
      %3632 = vmatpush1.bf16.msra.mxu0 %v3603
      %3633 = vmatprep.subr.bf16.mxu0 0
      %3634 = vmatpush1.bf16.msra.mxu0 %v3604
      %3635 = vmatprep.subr.bf16.mxu0 0
      %3636 = vmatpush1.bf16.msra.mxu0 0
      %3637 = vmatprep.subr.bf16.mxu0 0
      %3638 = vmatpush1.bf16.msra.mxu0 0
      %3639 = vmatprep.subr.bf16.mxu0 0
      %3640 = vmatpush1.bf16.msra.mxu0 0
      %3641 = vmatprep.subr.bf16.mxu0 0
      %3642 = vmatpush1.bf16.msra.mxu0 0
      %3643 = vmatprep.subr.bf16.mxu0 0
      %3644 = vmatpush1.bf16.msra.mxu0 0
      %3645 = vmatprep.subr.bf16.mxu0 0
      %3646 = vmatpush1.bf16.msra.mxu0 0
      %3647 = vmatprep.subr.bf16.mxu0 0
      %3648 = vmatpush1.bf16.msra.mxu0 0
      %3649 = vmatprep.subr.bf16.mxu0 0
      %3650 = vmatpush1.bf16.msra.mxu0 0
      %3651 = vmatprep.subr.bf16.mxu0 0
      %3652 = vmatpush1.bf16.msra.mxu0 0
      %3653 = vmatprep.subr.bf16.mxu0 0
      %3654 = vmatpush1.bf16.msra.mxu0 0
      %3655 = vmatprep.subr.bf16.mxu0 0
      %3656 = vmatpush1.bf16.msra.mxu0 0
      %3657 = vmatprep.subr.bf16.mxu0 0
      %3658 = vmatpush1.bf16.msra.mxu0 0
      %3659 = vmatprep.subr.bf16.mxu0 0
      %3660 = vmatpush1.bf16.msra.mxu0 0
      %3661 = vmatprep.subr.bf16.mxu0 0
      %3662 = vmatpush1.bf16.msra.mxu0 0
      %3663 = vmatprep.mubr.bf16.mxu0 0
      %3664 = vmatmul.mubr.bf16.gmra.mrb[0].mxu0 %v3608
      %v3665 = vpop.f32.mrb[0].mxu0
      %v3666 = vadd.f32 %v3593, %v3665
      %v3667 = vpop.f32.mrb[0].mxu0
      %v3668 = vpop.f32.mrb[0].mxu0
      %v3669 = vadd.f32 %v3593, %v3668
      %v3670 = vpop.f32.mrb[0].mxu0
      %3671 = vmatprep.mubr.bf16.mxu0 0
      %3672 = vmatmul.mubr.bf16.gmra.mrb[0].mxu0 %v3611
      %v3673 = vpop.f32.mrb[0].mxu0
      %v3674 = vadd.f32 %v3593, %v3673
      %v3675 = vpop.f32.mrb[0].mxu0
      %v3676 = vpop.f32.mrb[0].mxu0
      %v3677 = vadd.f32 %v3593, %v3676
      %v3678 = vpop.f32.mrb[0].mxu0
      %3679 = vmatprep.mubr.bf16.mxu0 0
      %3680 = vmatmul.mubr.bf16.gmra.mrb[0].mxu0 %v3614
      %v3681 = vpop.f32.mrb[0].mxu0
      %v3682 = vadd.f32 %v3593, %v3681
      %v3683 = vpop.f32.mrb[0].mxu0
      %v3684 = vpop.f32.mrb[0].mxu0
      %v3685 = vadd.f32 %v3593, %v3684
      %v3686 = vpop.f32.mrb[0].mxu0
      %3687 = vmatprep.mubr.bf16.mxu0 0
      %3688 = vmatmul.mubr.bf16.gmra.mrb[0].mxu0 %v3617
      %v3689 = vpop.f32.mrb[0].mxu0
      %v3690 = vadd.f32 %v3593, %v3689
      %v3691 = vpop.f32.mrb[0].mxu0
      %v3692 = vpop.f32.mrb[0].mxu0
      %v3693 = vadd.f32 %v3593, %v3692
      %v3694 = vpop.f32.mrb[0].mxu0
      %3695 = vmatprep.mubr.bf16.mxu0 0
      %3696 = vmatmul.mubr.bf16.gmra.mrb[0].mxu0 %v3620
      %v3697 = vpop.f32.mrb[0].mxu0
      %v3698 = vadd.f32 %v3593, %v3697
      %v3699 = vpop.f32.mrb[0].mxu0
      %v3700 = vpop.f32.mrb[0].mxu0
      %v3701 = vadd.f32 %v3593, %v3700
      %v3702 = vpop.f32.mrb[0].mxu0
      %3703 = vmatprep.mubr.bf16.mxu0 0
      %3704 = vmatmul.mubr.bf16.gmra.mrb[0].mxu0 %v3623
      %v3705 = vpop.f32.mrb[0].mxu0
      %v3706 = vadd.f32 %v3593, %v3705
      %v3707 = vpop.f32.mrb[0].mxu0
      %v3708 = vpop.f32.mrb[0].mxu0
      %v3709 = vadd.f32 %v3593, %v3708
      %v3710 = vpop.f32.mrb[0].mxu0
      %3711 = vmatprep.mubr.bf16.mxu0 0
      %3712 = vmatmul.mubr.bf16.gmra.mrb[0].mxu0 %v3626
      %v3713 = vpop.f32.mrb[0].mxu0
      %v3714 = vadd.f32 %v3593, %v3713
      %v3715 = vpop.f32.mrb[0].mxu0
      %v3716 = vpop.f32.mrb[0].mxu0
      %v3717 = vadd.f32 %v3593, %v3716
      %v3718 = vpop.f32.mrb[0].mxu0
      %3719 = vmatprep.mubr.bf16.mxu0 0
      %3720 = vmatmul.mubr.bf16.gmra.mrb[0].mxu0 %v3629
      %v3721 = vpop.f32.mrb[0].mxu0
      %v3722 = vadd.f32 %v3593, %v3721
      %v3723 = vpop.f32.mrb[0].mxu0
      %v3724 = vpop.f32.mrb[0].mxu0
      %v3725 = vadd.f32 %v3593, %v3724
      %v3726 = vpop.f32.mrb[0].mxu0
      %3727 = vdwg.mxu0
      %v3728 = vmul.f32 %v3666, 1.702
      %v3729 = vmul.f32 %v3669, 1.702
      %v3730 = vmul.f32 %v3674, 1.702
      %v3731 = vmul.f32 %v3677, 1.702
      %v3732 = vmul.f32 %v3682, 1.702
      %v3733 = vmul.f32 %v3685, 1.702
      %v3734 = vmul.f32 %v3690, 1.702
      %v3735 = vmul.f32 %v3693, 1.702
      %v3736 = vmul.f32 %v3698, 1.702
      %v3737 = vmul.f32 %v3701, 1.702
      %v3738 = vmul.f32 %v3706, 1.702
      %v3739 = vmul.f32 %v3709, 1.702
      %v3740 = vmul.f32 %v3714, 1.702
      %v3741 = vmul.f32 %v3717, 1.702
      %v3742 = vmul.f32 %v3722, 1.702
      %v3743 = vmul.f32 %v3725, 1.702
      %v3744 = vxor.u32 %v3728, 2147483648
      %v3745 = vxor.u32 %v3729, 2147483648
      %v3746 = vxor.u32 %v3730, 2147483648
      %v3747 = vxor.u32 %v3731, 2147483648
      %v3748 = vxor.u32 %v3732, 2147483648
      %v3749 = vxor.u32 %v3733, 2147483648
      %v3750 = vxor.u32 %v3734, 2147483648
      %v3751 = vxor.u32 %v3735, 2147483648
      %v3752 = vxor.u32 %v3736, 2147483648
      %v3753 = vxor.u32 %v3737, 2147483648
      %v3754 = vxor.u32 %v3738, 2147483648
      %v3755 = vxor.u32 %v3739, 2147483648
      %v3756 = vxor.u32 %v3740, 2147483648
      %v3757 = vxor.u32 %v3741, 2147483648
      %v3758 = vxor.u32 %v3742, 2147483648
      %v3759 = vxor.u32 %v3743, 2147483648
      %v3760 = vmul.f32 %v3744, 1.442695
      %v3761 = vpow.pop %v3760
      %v3762 = vmul.f32 %v3745, 1.442695
      %v3763 = vpow.pop %v3762
      %v3764 = vmul.f32 %v3746, 1.442695
      %v3765 = vpow.pop %v3764
      %v3766 = vmul.f32 %v3747, 1.442695
      %v3767 = vpow.pop %v3766
      %v3768 = vmul.f32 %v3748, 1.442695
      %v3769 = vpow.pop %v3768
      %v3770 = vmul.f32 %v3749, 1.442695
      %v3771 = vpow.pop %v3770
      %v3772 = vmul.f32 %v3750, 1.442695
      %v3773 = vpow.pop %v3772
      %v3774 = vmul.f32 %v3751, 1.442695
      %v3775 = vpow.pop %v3774
      %v3776 = vmul.f32 %v3752, 1.442695
      %v3777 = vpow.pop %v3776
      %v3778 = vmul.f32 %v3753, 1.442695
      %v3779 = vpow.pop %v3778
      %v3780 = vmul.f32 %v3754, 1.442695
      %v3781 = vpow.pop %v3780
      %v3782 = vmul.f32 %v3755, 1.442695
      %v3783 = vpow.pop %v3782
      %v3784 = vmul.f32 %v3756, 1.442695
      %v3785 = vpow.pop %v3784
      %v3786 = vmul.f32 %v3757, 1.442695
      %v3787 = vpow.pop %v3786
      %v3788 = vmul.f32 %v3758, 1.442695
      %v3789 = vpow.pop %v3788
      %v3790 = vmul.f32 %v3759, 1.442695
      %v3791 = vpow.pop %v3790
      %v3792 = vadd.f32 %v3761, 1.0
      %v3793 = vadd.f32 %v3763, 1.0
      %v3794 = vadd.f32 %v3765, 1.0
      %v3795 = vadd.f32 %v3767, 1.0
      %v3796 = vadd.f32 %v3769, 1.0
      %v3797 = vadd.f32 %v3771, 1.0
      %v3798 = vadd.f32 %v3773, 1.0
      %v3799 = vadd.f32 %v3775, 1.0
      %v3800 = vadd.f32 %v3777, 1.0
      %v3801 = vadd.f32 %v3779, 1.0
      %v3802 = vadd.f32 %v3781, 1.0
      %v3803 = vadd.f32 %v3783, 1.0
      %v3804 = vadd.f32 %v3785, 1.0
      %v3805 = vadd.f32 %v3787, 1.0
      %v3806 = vadd.f32 %v3789, 1.0
      %v3807 = vadd.f32 %v3791, 1.0
      %v3808 = vrcp.pop %v3792
      %v3809 = vmul.f32 1.0, %v3808
      %v3810 = vrcp.pop %v3793
      %v3811 = vmul.f32 1.0, %v3810
      %v3812 = vrcp.pop %v3794
      %v3813 = vmul.f32 1.0, %v3812
      %v3814 = vrcp.pop %v3795
      %v3815 = vmul.f32 1.0, %v3814
      %v3816 = vrcp.pop %v3796
      %v3817 = vmul.f32 1.0, %v3816
      %v3818 = vrcp.pop %v3797
      %v3819 = vmul.f32 1.0, %v3818
      %v3820 = vrcp.pop %v3798
      %v3821 = vmul.f32 1.0, %v3820
      %v3822 = vrcp.pop %v3799
      %v3823 = vmul.f32 1.0, %v3822
      %v3824 = vrcp.pop %v3800
      %v3825 = vmul.f32 1.0, %v3824
      %v3826 = vrcp.pop %v3801
      %v3827 = vmul.f32 1.0, %v3826
      %v3828 = vrcp.pop %v3802
      %v3829 = vmul.f32 1.0, %v3828
      %v3830 = vrcp.pop %v3803
      %v3831 = vmul.f32 1.0, %v3830
      %v3832 = vrcp.pop %v3804
      %v3833 = vmul.f32 1.0, %v3832
      %v3834 = vrcp.pop %v3805
      %v3835 = vmul.f32 1.0, %v3834
      %v3836 = vrcp.pop %v3806
      %v3837 = vmul.f32 1.0, %v3836
      %v3838 = vrcp.pop %v3807
      %v3839 = vmul.f32 1.0, %v3838
      %v3840 = vmul.f32 %v3666, %v3809
      %v3841 = vmul.f32 %v3669, %v3811
      %v3842 = vmul.f32 %v3674, %v3813
      %v3843 = vmul.f32 %v3677, %v3815
      %v3844 = vmul.f32 %v3682, %v3817
      %v3845 = vmul.f32 %v3685, %v3819
      %v3846 = vmul.f32 %v3690, %v3821
      %v3847 = vmul.f32 %v3693, %v3823
      %v3848 = vmul.f32 %v3698, %v3825
      %v3849 = vmul.f32 %v3701, %v3827
      %v3850 = vmul.f32 %v3706, %v3829
      %v3851 = vmul.f32 %v3709, %v3831
      %v3852 = vmul.f32 %v3714, %v3833
      %v3853 = vmul.f32 %v3717, %v3835
      %v3854 = vmul.f32 %v3722, %v3837
      %v3855 = vmul.f32 %v3725, %v3839
      %v3856 = vpack.c.bf16 %v3841, %v3840
      %v3857 = vpack.c.bf16 %v3843, %v3842
      %v3858 = vpack.c.bf16 %v3845, %v3844
      %v3859 = vpack.c.bf16 %v3847, %v3846
      %v3860 = vpack.c.bf16 %v3849, %v3848
      %v3861 = vpack.c.bf16 %v3851, %v3850
      %v3862 = vpack.c.bf16 %v3853, %v3852
      %v3863 = vpack.c.bf16 %v3855, %v3854
      %v3864 = vld [vmem:[%s636] sm:$0xf]
      %v3865 = vld [vmem:[%s636 + $0x4] sm:$0xf]
      %v3866 = vld [vmem:[%s636 + $0x8] sm:$0xf]
      %v3867 = vld [vmem:[%s636 + $0xc] sm:$0xf]
      %v3868 = vld [vmem:[%s636 + $0x10] sm:$0xf]
      %v3869 = vld [vmem:[%s636 + $0x14] sm:$0xf]
      %v3870 = vld [vmem:[%s636 + $0x18] sm:$0xf]
      %v3871 = vld [vmem:[%s636 + $0x1c] sm:$0xf]
      %v3872 = vld [vmem:[%s636 + $0x20] sm:$0xf]
      %v3873 = vld [vmem:[%s636 + $0x24] sm:$0xf]
      %v3874 = vld [vmem:[%s636 + $0x28] sm:$0xf]
      %v3875 = vld [vmem:[%s636 + $0x2c] sm:$0xf]
      %v3876 = vld [vmem:[%s636 + $0x30] sm:$0xf]
      %v3877 = vld [vmem:[%s636 + $0x34] sm:$0xf]
      %v3878 = vld [vmem:[%s636 + $0x38] sm:$0xf]
      %v3879 = vld [vmem:[%s636 + $0x3c] sm:$0xf]
      %v3880 = vld [vmem:[%s639] sm:$0x1]
      %v3882 = vlaneseq
      %v3883 = vshrl.u32 %v3882, 7
      %v3884 = vsub.s32 0, %v3883
      %v3885 = vrot.slane %v3880, %v3884
      %v3903 = vunpack.c.l.b16 %v3864
      %v3904 = vunpack.c.l.b16 %v3865
      %v3905 = vunpack.c.l.b16 %v3866
      %v3906 = vunpack.c.l.b16 %v3867
      %v3907 = vunpack.c.l.b16 %v3868
      %v3908 = vunpack.c.l.b16 %v3869
      %v3909 = vunpack.c.l.b16 %v3870
      %v3910 = vunpack.c.l.b16 %v3871
      %v3911 = vunpack.c.l.b16 %v3872
      %v3912 = vunpack.c.l.b16 %v3873
      %v3913 = vunpack.c.l.b16 %v3874
      %v3914 = vunpack.c.l.b16 %v3875
      %v3915 = vunpack.c.l.b16 %v3876
      %v3916 = vunpack.c.l.b16 %v3877
      %v3917 = vunpack.c.l.b16 %v3878
      %v3918 = vunpack.c.l.b16 %v3879
      %v3919 = vpack.c.b16 %v3904, %v3903
      %v3920 = vpack.c.b16 %v3906, %v3905
      %v3921 = vpack.c.b16 %v3908, %v3907
      %v3922 = vpack.c.b16 %v3910, %v3909
      %v3923 = vpack.c.b16 %v3912, %v3911
      %v3924 = vpack.c.b16 %v3914, %v3913
      %v3925 = vpack.c.b16 %v3916, %v3915
      %v3926 = vpack.c.b16 %v3918, %v3917
      %3935 = vmatprep.subr.bf16.mxu0 0
      %3936 = vmatpush1.bf16.msra.mxu0 %v3919
      %3937 = vmatprep.subr.bf16.mxu0 0
      %3938 = vmatpush1.bf16.msra.mxu0 %v3920
      %3939 = vmatprep.subr.bf16.mxu0 0
      %3940 = vmatpush1.bf16.msra.mxu0 %v3921
      %3941 = vmatprep.subr.bf16.mxu0 0
      %3942 = vmatpush1.bf16.msra.mxu0 %v3922
      %3943 = vmatprep.subr.bf16.mxu0 0
      %3944 = vmatpush1.bf16.msra.mxu0 %v3923
      %3945 = vmatprep.subr.bf16.mxu0 0
      %3946 = vmatpush1.bf16.msra.mxu0 %v3924
      %3947 = vmatprep.subr.bf16.mxu0 0
      %3948 = vmatpush1.bf16.msra.mxu0 %v3925
      %3949 = vmatprep.subr.bf16.mxu0 0
      %3950 = vmatpush1.bf16.msra.mxu0 %v3926
      %3951 = vmatprep.subr.bf16.mxu0 0
      %3952 = vmatpush1.bf16.msra.mxu0 0
      %3953 = vmatprep.subr.bf16.mxu0 0
      %3954 = vmatpush1.bf16.msra.mxu0 0
      %3955 = vmatprep.subr.bf16.mxu0 0
      %3956 = vmatpush1.bf16.msra.mxu0 0
      %3957 = vmatprep.subr.bf16.mxu0 0
      %3958 = vmatpush1.bf16.msra.mxu0 0
      %3959 = vmatprep.subr.bf16.mxu0 0
      %3960 = vmatpush1.bf16.msra.mxu0 0
      %3961 = vmatprep.subr.bf16.mxu0 0
      %3962 = vmatpush1.bf16.msra.mxu0 0
      %3963 = vmatprep.subr.bf16.mxu0 0
      %3964 = vmatpush1.bf16.msra.mxu0 0
      %3965 = vmatprep.subr.bf16.mxu0 0
      %3966 = vmatpush1.bf16.msra.mxu0 0
      %3967 = vmatprep.mubr.bf16.mxu0 0
      %3968 = vmatmul.mubr.bf16.gmra.mrb[0].mxu0 %v3856
      %v3969 = vpop.f32.mrb[0].mxu0
      %v3970 = vadd.f32 %v3885, %v3969
      %v3971 = vpop.f32.mrb[0].mxu0
      %v3972 = vpop.f32.mrb[0].mxu0
      %v3973 = vadd.f32 %v3885, %v3972
      %v3974 = vpop.f32.mrb[0].mxu0
      %3975 = vmatprep.mubr.bf16.mxu0 0
      %3976 = vmatmul.mubr.bf16.gmra.mrb[0].mxu0 %v3857
      %v3977 = vpop.f32.mrb[0].mxu0
      %v3978 = vadd.f32 %v3885, %v3977
      %v3979 = vpop.f32.mrb[0].mxu0
      %v3980 = vpop.f32.mrb[0].mxu0
      %v3981 = vadd.f32 %v3885, %v3980
      %v3982 = vpop.f32.mrb[0].mxu0
      %3983 = vmatprep.mubr.bf16.mxu0 0
      %3984 = vmatmul.mubr.bf16.gmra.mrb[0].mxu0 %v3858
      %v3985 = vpop.f32.mrb[0].mxu0
      %v3986 = vadd.f32 %v3885, %v3985
      %v3987 = vpop.f32.mrb[0].mxu0
      %v3988 = vpop.f32.mrb[0].mxu0
      %v3989 = vadd.f32 %v3885, %v3988
      %v3990 = vpop.f32.mrb[0].mxu0
      %3991 = vmatprep.mubr.bf16.mxu0 0
      %3992 = vmatmul.mubr.bf16.gmra.mrb[0].mxu0 %v3859
      %v3993 = vpop.f32.mrb[0].mxu0
      %v3994 = vadd.f32 %v3885, %v3993
      %v3995 = vpop.f32.mrb[0].mxu0
      %v3996 = vpop.f32.mrb[0].mxu0
      %v3997 = vadd.f32 %v3885, %v3996
      %v3998 = vpop.f32.mrb[0].mxu0
      %3999 = vmatprep.mubr.bf16.mxu0 0
      %4000 = vmatmul.mubr.bf16.gmra.mrb[0].mxu0 %v3860
      %v4001 = vpop.f32.mrb[0].mxu0
      %v4002 = vadd.f32 %v3885, %v4001
      %v4003 = vpop.f32.mrb[0].mxu0
      %v4004 = vpop.f32.mrb[0].mxu0
      %v4005 = vadd.f32 %v3885, %v4004
      %v4006 = vpop.f32.mrb[0].mxu0
      %4007 = vmatprep.mubr.bf16.mxu0 0
      %4008 = vmatmul.mubr.bf16.gmra.mrb[0].mxu0 %v3861
      %v4009 = vpop.f32.mrb[0].mxu0
      %v4010 = vadd.f32 %v3885, %v4009
      %v4011 = vpop.f32.mrb[0].mxu0
      %v4012 = vpop.f32.mrb[0].mxu0
      %v4013 = vadd.f32 %v3885, %v4012
      %v4014 = vpop.f32.mrb[0].mxu0
      %4015 = vmatprep.mubr.bf16.mxu0 0
      %4016 = vmatmul.mubr.bf16.gmra.mrb[0].mxu0 %v3862
      %v4017 = vpop.f32.mrb[0].mxu0
      %v4018 = vadd.f32 %v3885, %v4017
      %v4019 = vpop.f32.mrb[0].mxu0
      %v4020 = vpop.f32.mrb[0].mxu0
      %v4021 = vadd.f32 %v3885, %v4020
      %v4022 = vpop.f32.mrb[0].mxu0
      %4023 = vmatprep.mubr.bf16.mxu0 0
      %4024 = vmatmul.mubr.bf16.gmra.mrb[0].mxu0 %v3863
      %v4025 = vpop.f32.mrb[0].mxu0
      %v4026 = vadd.f32 %v3885, %v4025
      %v4027 = vpop.f32.mrb[0].mxu0
      %v4028 = vpop.f32.mrb[0].mxu0
      %v4029 = vadd.f32 %v3885, %v4028
      %v4030 = vpop.f32.mrb[0].mxu0
      %4031 = vdwg.mxu0
      %v4032 = vadd.f32 %v3306, %v3970
      %v4033 = vadd.f32 %v3307, %v3973
      %v4034 = vadd.f32 %v3308, %v3978
      %v4035 = vadd.f32 %v3309, %v3981
      %v4036 = vadd.f32 %v3310, %v3986
      %v4037 = vadd.f32 %v3311, %v3989
      %v4038 = vadd.f32 %v3312, %v3994
      %v4039 = vadd.f32 %v3313, %v3997
      %v4040 = vadd.f32 %v3314, %v4002
      %v4041 = vadd.f32 %v3315, %v4005
      %v4042 = vadd.f32 %v3316, %v4010
      %v4043 = vadd.f32 %v3317, %v4013
      %v4044 = vadd.f32 %v3318, %v4018
      %v4045 = vadd.f32 %v3319, %v4021
      %v4046 = vadd.f32 %v3320, %v4026
      %v4047 = vadd.f32 %v3321, %v4029
      %4048 = vst.msk [vmem:[%s644] sm:$0xff] %vm701, %v4032
      %4049 = vst.msk [vmem:[%s644 + $0x8] sm:$0xff] %vm701, %v4033
      %4050 = vst.msk [vmem:[%s644 + $0x10] sm:$0xff] %vm701, %v4034
      %4051 = vst.msk [vmem:[%s644 + $0x18] sm:$0xff] %vm701, %v4035
      %4052 = vst.msk [vmem:[%s644 + $0x20] sm:$0xff] %vm701, %v4036
      %4053 = vst.msk [vmem:[%s644 + $0x28] sm:$0xff] %vm701, %v4037
      %4054 = vst.msk [vmem:[%s644 + $0x30] sm:$0xff] %vm701, %v4038
      %4055 = vst.msk [vmem:[%s644 + $0x38] sm:$0xff] %vm701, %v4039
      %4056 = vst.msk [vmem:[%s644 + $0x40] sm:$0xff] %vm701, %v4040
      %4057 = vst.msk [vmem:[%s644 + $0x48] sm:$0xff] %vm701, %v4041
      %4058 = vst.msk [vmem:[%s644 + $0x50] sm:$0xff] %vm701, %v4042
      %4059 = vst.msk [vmem:[%s644 + $0x58] sm:$0xff] %vm701, %v4043
      %4060 = vst.msk [vmem:[%s644 + $0x60] sm:$0xff] %vm701, %v4044
      %4061 = vst.msk [vmem:[%s644 + $0x68] sm:$0xff] %vm701, %v4045
      %4062 = vst.msk [vmem:[%s644 + $0x70] sm:$0xff] %vm701, %v4046
      %4063 = vst.msk [vmem:[%s644 + $0x78] sm:$0xff] %vm701, %v4047
      %p4064 = scmp.lt.s32.totalorder %s28, 1
      %s4065 = scalar_select %p4064, %s28, 1
      %s4066 = smul.addr %s4065, 16
      %s4067 = smul.addr %s4066, 8
      %s4068 = scalar_lea.vmem %s13, %s4067
      // Predicated region
      $region77: #{transformer_forward.1} parent=71 // pred_check
        %p4069 = pneg %p392
      $region78: #{transformer_forward.1} parent=71 // pred_check_branch
        %4071 = sbr.rel (%p4069) target = $region80
      $region79: #{transformer_forward.1} parent=71 // pred_region
        _
      $region80: #{transformer_forward.1} parent=71 // pred_fallthru
        _
    $region72: #{transformer_forward.1} parent=5 // pred_fallthru
      _
    %p4072 = scmp.le.s32.totalorder 2, %s19
    // Predicated region
    $region81: #{transformer_forward.1} parent=5 // pred_check
      %p4073 = pneg %p4072
    $region82: #{transformer_forward.1} parent=5 // pred_check_branch
      %4075 = sbr.rel (%p4073) target = $region84
    $region83: #{transformer_forward.1} parent=5 // pred_region
      %s4076 = ssub.s32 %s19, 2
      // Predicated region
      $region85: #{transformer_forward.1} parent=83 // pred_check
        %p4077 = pneg %p398
      $region86: #{transformer_forward.1} parent=83 // pred_check_branch
        %4079 = sbr.rel (%p4077) target = $region88
      $region87: #{transformer_forward.1} parent=83 // pred_region
        %p4080 = scmp.lt.s32.totalorder %s30, 1
        %s4081 = scalar_select %p4080, %s30, 1
        %s4082 = smul.addr %s4081, 16
        %s4083 = smul.addr %s4082, 8
        %s4084 = scalar_lea.vmem %s13, %s4083
      $region88: #{transformer_forward.1} parent=83 // pred_fallthru
        _
    $region84: #{transformer_forward.1} parent=5 // pred_fallthru
      _
  $region6: #{transformer_forward.1} parent=0 // loop_footer
    %s23 = sadd.s32 1, %s19
  $region7: #{transformer_forward.1} parent=0 // loop_footer_branch
    %18 = sbr.rel target = $region3
  $region8: #{transformer_forward.1} parent=0 // loop_exit
    _

</llo_original>
